<compile_context>
chip_gen: v7x
topology: tpu7x:2x2x1
jax: 0.10.0
libtpu: 0.0.40
codegen_flags: <defaults>
</compile_context>

<pallas_src>
import functools

import jax
import jax.numpy as jnp
from jax import lax
from jax.experimental import pallas as pl
from jax.experimental.pallas import tpu as pltpu

_LANES = 128
_BN_EPS = 1e-5


def _round_up(x, m):
    return (x + m - 1) // m * m


# ---------------------------------------------------------------------------
# Fused CSPRepBlock kernel: conv1 (folded RepVGG 3x3 + bias + ReLU) ->
# conv2 (3x3 + bias + SiLU) (+ CSP residual), per grid step one image,
# everything resident in VMEM between the two convs.
# ---------------------------------------------------------------------------
def _csp_rep_fused_kernel(x_ref, w1_ref, b1_ref, w2_ref, b2_ref, o_ref,
                          cat1_ref, y1pad_ref, cat2_ref, *, add_identity):
    # x_ref     : [1, H+2, W+2, C1p] bf16  spatially zero-padded, channel-padded
    # w1_ref    : [3, 3*C1p, Chp]    bf16  conv1 weight, contraction = (kw, ci)
    # b1_ref    : [1, Chp]           f32   folded conv1 bias
    # w2_ref    : [3, 3*Chp, C2p]    bf16  conv2 weight
    # b2_ref    : [1, C2p]           f32   folded conv2 bias
    # o_ref     : [1, H, W, C2p]     f32
    # cat1_ref  : [H+2, W, 3*C1p]    bf16  kw-shift-concatenated conv1 operand slab
    # y1pad_ref : [H+2, W+16, Chp]   bf16  zero-padded conv1 output (data at col 8)
    # cat2_ref  : [H+2, W, 3*Chp]    bf16  kw-shift-concatenated conv2 operand slab
    f32 = jnp.float32
    _, H, W, C2p = o_ref.shape
    C1p = x_ref.shape[-1]
    Chp = b1_ref.shape[-1]

    # ---- conv1 operand slab: kw shifts hoisted (3 shifted slices, not 9) ----
    cat1_ref[...] = jnp.concatenate(
        [x_ref[0, :, kw:kw + W, :] for kw in range(3)], axis=-1)

    # ---- conv1: 3 MXU matmuls with K = 3*C1p, value accumulation -----------
    acc1 = jnp.zeros((H * W, Chp), f32)
    for kh in range(3):
        opnd = cat1_ref[kh:kh + H].reshape(H * W, 3 * C1p)
        acc1 = acc1 + jnp.dot(opnd, w1_ref[kh], preferred_element_type=f32)
    y1 = jnp.maximum(acc1 + b1_ref[...], 0.0)              # bias + ReLU (f32)

    # ---- zero-pad y1 in VMEM (intermediate never touches HBM) --------------
    # Data region starts at sublane column 8, so both the zero-fill and the
    # interior store are (8,128)-tile aligned; border columns 7 and W+8 and
    # border rows 0 / H+1 stay zero and provide the "same" padding for conv2.
    y1pad_ref[...] = jnp.zeros_like(y1pad_ref)
    y1pad_ref[1:H + 1, 8:W + 8, :] = (
        y1.astype(jnp.bfloat16).reshape(H, W, Chp))

    # ---- conv2 operand slab -------------------------------------------------
    cat2_ref[...] = jnp.concatenate(
        [y1pad_ref[:, kw + 7:kw + 7 + W, :] for kw in range(3)], axis=-1)

    # ---- conv2: 3 MXU matmuls with K = 3*Chp, value accumulation -----------
    acc2 = jnp.zeros((H * W, C2p), f32)
    for kh in range(3):
        opnd = cat2_ref[kh:kh + H].reshape(H * W, 3 * Chp)
        acc2 = acc2 + jnp.dot(opnd, w2_ref[kh], preferred_element_type=f32)
    y2 = acc2 + b2_ref[...]
    y2 = y2 * jax.nn.sigmoid(y2)                           # SiLU (f32)

    if add_identity:
        # CSP residual: reuse the bf16 x block already resident in VMEM
        # (interior of the padded input) -- no extra HBM traffic.
        xi = x_ref[0, 1:H + 1, 1:W + 1, :]
        y2 = y2 + xi.reshape(H * W, C1p).astype(f32)

    o_ref[...] = y2.reshape(1, H, W, C2p).astype(o_ref.dtype)


def _pack_conv3x3_weight(w_oihw, cin_p, cout_p):
    """OIHW conv weight -> [kh, kw*Cin_p + ci, Cout_p] bf16 MXU operand."""
    cout, cin, k, _ = w_oihw.shape
    w = jnp.transpose(w_oihw, (2, 3, 1, 0))                 # [kh, kw, Cin, Cout]
    w = jnp.pad(w, ((0, 0), (0, 0), (0, cin_p - cin), (0, cout_p - cout)))
    return w.reshape(k, k * cin_p, cout_p).astype(jnp.bfloat16)


# ---------------------------------------------------------------------------
# Parameter folding (eval-mode BatchNorm) -- plain JAX glue, negligible cost.
# ---------------------------------------------------------------------------
def _fuse_conv_bn(w, gamma, beta, mean, var, eps=_BN_EPS):
    t = gamma / jnp.sqrt(var + eps)
    return w * t[:, None, None, None], beta - mean * t


def _repvgg_equivalent(p, eps=_BN_EPS):
    """Fold RepVGG's 3x3+BN, 1x1+BN and identity-BN branches into one 3x3 + bias."""
    k3, b3 = _fuse_conv_bn(p["w3"], p["g3"], p["b3"], p["m3"], p["v3"], eps)
    k1, b1 = _fuse_conv_bn(p["w1"], p["g1"], p["b1"], p["m1"], p["v1"], eps)
    kernel = k3 + jnp.pad(k1, ((0, 0), (0, 0), (1, 1), (1, 1)))
    bias = b3 + b1
    if "gid" in p:  # identity BN branch (out_channels == in_channels, s == 1)
        cin = p["w3"].shape[1]
        tid = p["gid"] / jnp.sqrt(p["vid"] + eps)
        id_k = jnp.zeros((cin, cin, 3, 3), kernel.dtype)
        id_k = id_k.at[jnp.arange(cin), jnp.arange(cin), 1, 1].set(1.0)
        kernel = kernel + id_k * tid[:, None, None, None]
        bias = bias + p["bid"] - p["mid"] * tid
    return kernel, bias


def csp_rep_block_forward(x_nchw, params, *, add_identity=True, eps=_BN_EPS):
    """CSPRepBlock.forward (use_depthwise=False, use_se=False), eval-mode BN."""
    N, Cin, H, W = x_nchw.shape
    assert W % 8 == 0, "kernel assumes W is a multiple of 8 (sublanes)"
    w1, b1 = _repvgg_equivalent(params["conv1"], eps)
    w2, b2 = _fuse_conv_bn(params["conv2"]["w"], params["conv2"]["g"],
                           params["conv2"]["b"], params["conv2"]["m"],
                           params["conv2"]["v"], eps)
    Chid, Cout = w1.shape[0], w2.shape[0]
    add_identity = add_identity and (Cin == Cout)

    C1p = _round_up(Cin, _LANES)
    Chp = _round_up(Chid, _LANES)
    C2p = _round_up(Cout, _LANES)

    # Single layout pass: NCHW -> NHWC, spatial (1,1) + channel pad, bf16 cast.
    # The spatial pad is fused into the channel pad we need anyway, so it adds
    # no HBM traffic on top of the unavoidable layout conversion.
    x_nhwc = jnp.transpose(x_nchw, (0, 2, 3, 1))
    x_pad = jnp.pad(x_nhwc, ((0, 0), (1, 1), (1, 1), (0, C1p - Cin))
                    ).astype(jnp.bfloat16)

    w1p = _pack_conv3x3_weight(w1, C1p, Chp)
    w2p = _pack_conv3x3_weight(w2, Chp, C2p)
    b1p = jnp.pad(b1, (0, Chp - Chid)).reshape(1, Chp).astype(jnp.float32)
    b2p = jnp.pad(b2, (0, C2p - Cout)).reshape(1, C2p).astype(jnp.float32)

    kernel = functools.partial(_csp_rep_fused_kernel, add_identity=add_identity)
    y = pl.pallas_call(
        kernel,
        grid=(N,),                       # software-pipelined over batch
        in_specs=[
            pl.BlockSpec((1, H + 2, W + 2, C1p), lambda n: (n, 0, 0, 0)),
            # weight / bias blocks are grid-constant (fetched once, kept resident)
            pl.BlockSpec((3, 3 * C1p, Chp), lambda n: (0, 0, 0)),
            pl.BlockSpec((1, Chp), lambda n: (0, 0)),
            pl.BlockSpec((3, 3 * Chp, C2p), lambda n: (0, 0, 0)),
            pl.BlockSpec((1, C2p), lambda n: (0, 0)),
        ],
        out_specs=pl.BlockSpec((1, H, W, C2p), lambda n: (n, 0, 0, 0)),
        out_shape=jax.ShapeDtypeStruct((N, H, W, C2p), jnp.float32),
        scratch_shapes=[
            pltpu.VMEM((H + 2, W, 3 * C1p), jnp.bfloat16),    # conv1 operand slab
            pltpu.VMEM((H + 2, W + 16, Chp), jnp.bfloat16),   # padded conv1 output
            pltpu.VMEM((H + 2, W, 3 * Chp), jnp.bfloat16),    # conv2 operand slab
        ],
        compiler_params=pltpu.CompilerParams(
            dimension_semantics=("parallel",),
            vmem_limit_bytes=32 * 1024 * 1024),
    )(x_pad, w1p, b1p, w2p, b2p)

    # Channel-padded NHWC -> NCHW with padded lanes dropped (PyTorch layout).
    return jnp.transpose(y[..., :Cout], (0, 3, 1, 2))


# ---------------------------------------------------------------------------
# Pure-JAX references.
# ---------------------------------------------------------------------------
def _bn_eval(y, g, b, m, v, eps=_BN_EPS):
    inv = g / jnp.sqrt(v + eps)
    return y * inv[None, :, None, None] + (b - m * inv)[None, :, None, None]


def _conv_nchw(x, w, pad):
    return lax.conv_general_dilated(
        x, w, (1, 1), [(pad, pad), (pad, pad)],
        dimension_numbers=("NCHW", "OIHW", "NCHW"))


def _ref_f32(x, params, add_identity=True, eps=_BN_EPS):
    """Branch-wise f32 reference of CSPRepBlock (eval-mode BN) -- sanity check."""
    p1 = params["conv1"]
    y = _bn_eval(_conv_nchw(x, p1["w3"], 1), p1["g3"], p1["b3"], p1["m3"], p1["v3"], eps)
    y = y + _bn_eval(_conv_nchw(x, p1["w1"], 0), p1["g1"], p1["b1"], p1["m1"], p1["v1"], eps)
    if "gid" in p1:
        y = y + _bn_eval(x, p1["gid"], p1["bid"], p1["mid"], p1["vid"], eps)
    y = jnp.maximum(y, 0.0)
    p2 = params["conv2"]
    y = _bn_eval(_conv_nchw(y, p2["w"], 1), p2["g"], p2["b"], p2["m"], p2["v"], eps)
    y = y * jax.nn.sigmoid(y)
    if add_identity and x.shape[1] == y.shape[1]:
        y = y + x
    return y


def _ref_bf16(x, params, add_identity=True, eps=_BN_EPS):
    """Reference mimicking the kernel's dtypes (bf16 MXU operands / residual,
    f32 accumulation and epilogue)."""
    w1, b1 = _repvgg_equivalent(params["conv1"], eps)
    w2, b2 = _fuse_conv_bn(params["conv2"]["w"], params["conv2"]["g"],
                           params["conv2"]["b"], params["conv2"]["m"],
                           params["conv2"]["v"], eps)

    def conv(a, w):
        return lax.conv_general_dilated(
            a.astype(jnp.bfloat16), w.astype(jnp.bfloat16), (1, 1),
            [(1, 1), (1, 1)], dimension_numbers=("NCHW", "OIHW", "NCHW"),
            preferred_element_type=jnp.float32)

    y = jnp.maximum(conv(x, w1) + b1[None, :, None, None], 0.0).astype(jnp.bfloat16)
    y = conv(y, w2) + b2[None, :, None, None]
    y = y * jax.nn.sigmoid(y)
    if add_identity and x.shape[1] == y.shape[1]:
        # kernel aliases the bf16 input block as the residual
        y = y + x.astype(jnp.bfloat16).astype(jnp.float32)
    return y


# ---------------------------------------------------------------------------
# Deterministic parameter construction & self-test.
# ---------------------------------------------------------------------------
def _make_params(key, cin, cout, expansion=0.5):
    chid = int(cout * expansion)
    ks = iter(jax.random.split(key, 24))

    def bn(c):
        return dict(
            g=1.0 + 0.1 * jax.random.normal(next(ks), (c,), jnp.float32),
            b=0.1 * jax.random.normal(next(ks), (c,), jnp.float32),
            m=0.1 * jax.random.normal(next(ks), (c,), jnp.float32),
            v=jnp.abs(jax.random.normal(next(ks), (c,), jnp.float32)) + 0.5)

    bn3, bn1 = bn(chid), bn(chid)
    conv1 = {
        "w3": 0.1 * jax.random.normal(next(ks), (chid, cin, 3, 3), jnp.float32),
        "w1": 0.1 * jax.random.normal(next(ks), (chid, cin, 1, 1), jnp.float32),
        "g3": bn3["g"], "b3": bn3["b"], "m3": bn3["m"], "v3": bn3["v"],
        "g1": bn1["g"], "b1": bn1["b"], "m1": bn1["m"], "v1": bn1["v"],
    }
    if chid == cin:  # rbr_identity (BatchNorm2d) branch exists
        bni = bn(cin)
        conv1.update(gid=bni["g"], bid=bni["b"], mid=bni["m"], vid=bni["v"])
    bn2 = bn(cout)
    conv2 = {"w": 0.1 * jax.random.normal(next(ks), (cout, chid, 3, 3), jnp.float32),
             "g": bn2["g"], "b": bn2["b"], "m": bn2["m"], "v": bn2["v"]}
    return {"conv1": conv1, "conv2": conv2}


if __name__ == "__main__":
    root = jax.random.PRNGKey(0)
    kp_a, kx_a, kp_b, kx_b = jax.random.split(root, 4)
    N, H, W = 2, 16, 16

    # Config A: in_channels == out_channels -> CSP residual add active
    # (hidden = out*0.5 != in, so the RepVGG identity-BN branch is absent).
    cin, cout = 8, 8
    params_a = _make_params(kp_a, cin, cout)
    x_a = jax.random.normal(kx_a, (N, cin, H, W), jnp.float32)
    out_a = jax.block_until_ready(csp_rep_block_forward(x_a, params_a))
    assert out_a.shape == (N, cout, H, W)
    # Strict check vs a reference using the same dtypes as the kernel.
    assert jnp.allclose(out_a, _ref_bf16(x_a, params_a), atol=5e-3, rtol=5e-3), \
        "config A: mismatch vs dtype-mimicking reference"
    # Loose semantic sanity check vs the branch-wise f32 reference (bf16 MXU
    # operands limit achievable agreement with full-f32 math).
    assert jnp.allclose(out_a, _ref_f32(x_a, params_a), atol=1e-1, rtol=1e-1), \
        "config A: mismatch vs f32 branch-wise reference"

    # Config B: in != out -> RepVGG identity-BN branch active, no residual add.
    cin, cout = 4, 8
    params_b = _make_params(kp_b, cin, cout)
    x_b = jax.random.normal(kx_b, (N, cin, H, W), jnp.float32)
    out_b = jax.block_until_ready(csp_rep_block_forward(x_b, params_b))
    assert out_b.shape == (N, cout, H, W)
    assert jnp.allclose(out_b, _ref_bf16(x_b, params_b), atol=5e-3, rtol=5e-3), \
        "config B: mismatch vs dtype-mimicking reference"
    assert jnp.allclose(out_b, _ref_f32(x_b, params_b), atol=1e-1, rtol=1e-1), \
        "config B: mismatch vs f32 branch-wise reference"

    print("KERNEL_OK")
</pallas_src>

<mosaic_0001>
module attributes {stable_mosaic.version = 11 : i64} {
  func.func @_csp_rep_fused_kernel(%arg0: i32, %arg1: memref<1x18x18x128xbf16, #tpu.memory_space<vmem>>, %arg2: memref<3x384x128xbf16, #tpu.memory_space<vmem>>, %arg3: memref<1x128xf32, #tpu.memory_space<vmem>>, %arg4: memref<3x384x128xbf16, #tpu.memory_space<vmem>>, %arg5: memref<1x128xf32, #tpu.memory_space<vmem>>, %arg6: memref<1x16x16x128xf32, #tpu.memory_space<vmem>>, %arg7: memref<18x16x384xbf16, #tpu.memory_space<vmem>>, %arg8: memref<18x32x128xbf16, #tpu.memory_space<vmem>>, %arg9: memref<18x16x384xbf16, #tpu.memory_space<vmem>>) attributes {dimension_semantics = [#tpu.dimension_semantics<parallel>], iteration_bounds = array<i64: 2>, scalar_prefetch = 0 : i64, scratch_operands = 3 : i64, tpu.core_type = #tpu.core_type<tc>, window_params = [{transform_indices = @transform_0, window_bounds = array<i64: 1, 18, 18, 128>}, {pipeline_mode = #tpu.pipeline_mode<synchronous>, transform_indices = @transform_1, window_bounds = array<i64: 3, 384, 128>}, {pipeline_mode = #tpu.pipeline_mode<synchronous>, transform_indices = @transform_2, window_bounds = array<i64: 1, 128>}, {pipeline_mode = #tpu.pipeline_mode<synchronous>, transform_indices = @transform_3, window_bounds = array<i64: 3, 384, 128>}, {pipeline_mode = #tpu.pipeline_mode<synchronous>, transform_indices = @transform_4, window_bounds = array<i64: 1, 128>}, {transform_indices = @transform_5, window_bounds = array<i64: 1, 16, 16, 128>}]} {
    %c0 = arith.constant 0 : index
    %c0_0 = arith.constant 0 : index
    %c0_1 = arith.constant 0 : index
    %c0_2 = arith.constant 0 : index
    %0 = vector.load %arg1[%c0, %c0_0, %c0_1, %c0_2] : memref<1x18x18x128xbf16, #tpu.memory_space<vmem>>, vector<1x18x16x128xbf16>
    %1 = vector.shape_cast %0 : vector<1x18x16x128xbf16> to vector<18x16x128xbf16>
    %c0_3 = arith.constant 0 : index
    %c0_4 = arith.constant 0 : index
    %c1 = arith.constant 1 : index
    %c0_5 = arith.constant 0 : index
    %2 = vector.load %arg1[%c0_3, %c0_4, %c1, %c0_5] : memref<1x18x18x128xbf16, #tpu.memory_space<vmem>>, vector<1x18x16x128xbf16>
    %3 = vector.shape_cast %2 : vector<1x18x16x128xbf16> to vector<18x16x128xbf16>
    %c0_6 = arith.constant 0 : index
    %c0_7 = arith.constant 0 : index
    %c2 = arith.constant 2 : index
    %c0_8 = arith.constant 0 : index
    %4 = vector.load %arg1[%c0_6, %c0_7, %c2, %c0_8] : memref<1x18x18x128xbf16, #tpu.memory_space<vmem>>, vector<1x18x16x128xbf16>
    %5 = vector.shape_cast %4 : vector<1x18x16x128xbf16> to vector<18x16x128xbf16>
    %6 = tpu.concatenate %1, %3, %5 in 2 : vector<18x16x128xbf16>, vector<18x16x128xbf16>, vector<18x16x128xbf16> -> vector<18x16x384xbf16>
    %c0_9 = arith.constant 0 : index
    %c0_10 = arith.constant 0 : index
    %c0_11 = arith.constant 0 : index
    %7 = vector.load %arg7[%c0_9, %c0_10, %c0_11] : memref<18x16x384xbf16, #tpu.memory_space<vmem>>, vector<18x16x384xbf16>
    tpu.vector_store %arg7[%c0_9, %c0_10, %c0_11], %6 {strides = array<i32>} : memref<18x16x384xbf16, #tpu.memory_space<vmem>>, vector<18x16x384xbf16>,
    %cst = arith.constant 0.000000e+00 : f32
    %8 = vector.broadcast %cst : f32 to vector<256x128xf32>
    %c0_12 = arith.constant 0 : index
    %c0_13 = arith.constant 0 : index
    %c0_14 = arith.constant 0 : index
    %9 = vector.load %arg7[%c0_12, %c0_13, %c0_14] : memref<18x16x384xbf16, #tpu.memory_space<vmem>>, vector<16x16x384xbf16>
    %10 = vector.shape_cast %9 : vector<16x16x384xbf16> to vector<256x384xbf16>
    %c0_15 = arith.constant 0 : index
    %c0_16 = arith.constant 0 : index
    %c0_17 = arith.constant 0 : index
    %11 = vector.load %arg2[%c0_15, %c0_16, %c0_17] : memref<3x384x128xbf16, #tpu.memory_space<vmem>>, vector<1x384x128xbf16>
    %12 = vector.shape_cast %11 : vector<1x384x128xbf16> to vector<384x128xbf16>
    %cst_18 = arith.constant dense<0.000000e+00> : vector<256x128xf32>
    %13 = tpu.matmul %10, %12, %cst_18 {dimension_numbers = #tpu.dot_dimension_numbers<[1], [0], [0], [1], [0, 0, 1, 1], [], []>} : vector<256x384xbf16>, vector<384x128xbf16>, vector<256x128xf32> -> vector<256x128xf32>
    %14 = arith.addf %8, %13 : vector<256x128xf32>
    %c1_19 = arith.constant 1 : index
    %c0_20 = arith.constant 0 : index
    %c0_21 = arith.constant 0 : index
    %15 = vector.load %arg7[%c1_19, %c0_20, %c0_21] : memref<18x16x384xbf16, #tpu.memory_space<vmem>>, vector<16x16x384xbf16>
    %16 = vector.shape_cast %15 : vector<16x16x384xbf16> to vector<256x384xbf16>
    %c1_22 = arith.constant 1 : index
    %c0_23 = arith.constant 0 : index
    %c0_24 = arith.constant 0 : index
    %17 = vector.load %arg2[%c1_22, %c0_23, %c0_24] : memref<3x384x128xbf16, #tpu.memory_space<vmem>>, vector<1x384x128xbf16>
    %18 = vector.shape_cast %17 : vector<1x384x128xbf16> to vector<384x128xbf16>
    %cst_25 = arith.constant dense<0.000000e+00> : vector<256x128xf32>
    %19 = tpu.matmul %16, %18, %cst_25 {dimension_numbers = #tpu.dot_dimension_numbers<[1], [0], [0], [1], [0, 0, 1, 1], [], []>} : vector<256x384xbf16>, vector<384x128xbf16>, vector<256x128xf32> -> vector<256x128xf32>
    %20 = arith.addf %14, %19 : vector<256x128xf32>
    %c2_26 = arith.constant 2 : index
    %c0_27 = arith.constant 0 : index
    %c0_28 = arith.constant 0 : index
    %21 = vector.load %arg7[%c2_26, %c0_27, %c0_28] : memref<18x16x384xbf16, #tpu.memory_space<vmem>>, vector<16x16x384xbf16>
    %22 = vector.shape_cast %21 : vector<16x16x384xbf16> to vector<256x384xbf16>
    %c2_29 = arith.constant 2 : index
    %c0_30 = arith.constant 0 : index
    %c0_31 = arith.constant 0 : index
    %23 = vector.load %arg2[%c2_29, %c0_30, %c0_31] : memref<3x384x128xbf16, #tpu.memory_space<vmem>>, vector<1x384x128xbf16>
    %24 = vector.shape_cast %23 : vector<1x384x128xbf16> to vector<384x128xbf16>
    %cst_32 = arith.constant dense<0.000000e+00> : vector<256x128xf32>
    %25 = tpu.matmul %22, %24, %cst_32 {dimension_numbers = #tpu.dot_dimension_numbers<[1], [0], [0], [1], [0, 0, 1, 1], [], []>} : vector<256x384xbf16>, vector<384x128xbf16>, vector<256x128xf32> -> vector<256x128xf32>
    %26 = arith.addf %20, %25 : vector<256x128xf32>
    %c0_33 = arith.constant 0 : index
    %c0_34 = arith.constant 0 : index
    %27 = vector.load %arg3[%c0_33, %c0_34] : memref<1x128xf32, #tpu.memory_space<vmem>>, vector<1x128xf32>
    %28 = vector.broadcast %27 : vector<1x128xf32> to vector<256x128xf32>
    %29 = arith.addf %26, %28 : vector<256x128xf32>
    %cst_35 = arith.constant 0.000000e+00 : f32
    %30 = vector.broadcast %cst_35 : f32 to vector<256x128xf32>
    %31 = arith.maximumf %29, %30 : vector<256x128xf32>
    %cst_36 = arith.constant 0.000000e+00 : bf16
    %32 = vector.broadcast %cst_36 : bf16 to vector<18x32x128xbf16>
    %c0_37 = arith.constant 0 : index
    %c0_38 = arith.constant 0 : index
    %c0_39 = arith.constant 0 : index
    %33 = vector.load %arg8[%c0_37, %c0_38, %c0_39] : memref<18x32x128xbf16, #tpu.memory_space<vmem>>, vector<18x32x128xbf16>
    tpu.vector_store %arg8[%c0_37, %c0_38, %c0_39], %32 {strides = array<i32>} : memref<18x32x128xbf16, #tpu.memory_space<vmem>>, vector<18x32x128xbf16>,
    %34 = arith.truncf %31 : vector<256x128xf32> to vector<256x128xbf16>
    %35 = vector.shape_cast %34 : vector<256x128xbf16> to vector<16x16x128xbf16>
    %c1_40 = arith.constant 1 : index
    %c8 = arith.constant 8 : index
    %c0_41 = arith.constant 0 : index
    %36 = vector.load %arg8[%c1_40, %c8, %c0_41] : memref<18x32x128xbf16, #tpu.memory_space<vmem>>, vector<16x16x128xbf16>
    tpu.vector_store %arg8[%c1_40, %c8, %c0_41], %35 {strides = array<i32>} : memref<18x32x128xbf16, #tpu.memory_space<vmem>>, vector<16x16x128xbf16>,
    %c0_42 = arith.constant 0 : index
    %c7 = arith.constant 7 : index
    %c0_43 = arith.constant 0 : index
    %37 = vector.load %arg8[%c0_42, %c7, %c0_43] : memref<18x32x128xbf16, #tpu.memory_space<vmem>>, vector<18x16x128xbf16>
    %c0_44 = arith.constant 0 : index
    %c8_45 = arith.constant 8 : index
    %c0_46 = arith.constant 0 : index
    %38 = vector.load %arg8[%c0_44, %c8_45, %c0_46] : memref<18x32x128xbf16, #tpu.memory_space<vmem>>, vector<18x16x128xbf16>
    %c0_47 = arith.constant 0 : index
    %c9 = arith.constant 9 : index
    %c0_48 = arith.constant 0 : index
    %39 = vector.load %arg8[%c0_47, %c9, %c0_48] : memref<18x32x128xbf16, #tpu.memory_space<vmem>>, vector<18x16x128xbf16>
    %40 = tpu.concatenate %37, %38, %39 in 2 : vector<18x16x128xbf16>, vector<18x16x128xbf16>, vector<18x16x128xbf16> -> vector<18x16x384xbf16>
    %c0_49 = arith.constant 0 : index
    %c0_50 = arith.constant 0 : index
    %c0_51 = arith.constant 0 : index
    %41 = vector.load %arg9[%c0_49, %c0_50, %c0_51] : memref<18x16x384xbf16, #tpu.memory_space<vmem>>, vector<18x16x384xbf16>
    tpu.vector_store %arg9[%c0_49, %c0_50, %c0_51], %40 {strides = array<i32>} : memref<18x16x384xbf16, #tpu.memory_space<vmem>>, vector<18x16x384xbf16>,
    %cst_52 = arith.constant 0.000000e+00 : f32
    %42 = vector.broadcast %cst_52 : f32 to vector<256x128xf32>
    %c0_53 = arith.constant 0 : index
    %c0_54 = arith.constant 0 : index
    %c0_55 = arith.constant 0 : index
    %43 = vector.load %arg9[%c0_53, %c0_54, %c0_55] : memref<18x16x384xbf16, #tpu.memory_space<vmem>>, vector<16x16x384xbf16>
    %44 = vector.shape_cast %43 : vector<16x16x384xbf16> to vector<256x384xbf16>
    %c0_56 = arith.constant 0 : index
    %c0_57 = arith.constant 0 : index
    %c0_58 = arith.constant 0 : index
    %45 = vector.load %arg4[%c0_56, %c0_57, %c0_58] : memref<3x384x128xbf16, #tpu.memory_space<vmem>>, vector<1x384x128xbf16>
    %46 = vector.shape_cast %45 : vector<1x384x128xbf16> to vector<384x128xbf16>
    %cst_59 = arith.constant dense<0.000000e+00> : vector<256x128xf32>
    %47 = tpu.matmul %44, %46, %cst_59 {dimension_numbers = #tpu.dot_dimension_numbers<[1], [0], [0], [1], [0, 0, 1, 1], [], []>} : vector<256x384xbf16>, vector<384x128xbf16>, vector<256x128xf32> -> vector<256x128xf32>
    %48 = arith.addf %42, %47 : vector<256x128xf32>
    %c1_60 = arith.constant 1 : index
    %c0_61 = arith.constant 0 : index
    %c0_62 = arith.constant 0 : index
    %49 = vector.load %arg9[%c1_60, %c0_61, %c0_62] : memref<18x16x384xbf16, #tpu.memory_space<vmem>>, vector<16x16x384xbf16>
    %50 = vector.shape_cast %49 : vector<16x16x384xbf16> to vector<256x384xbf16>
    %c1_63 = arith.constant 1 : index
    %c0_64 = arith.constant 0 : index
    %c0_65 = arith.constant 0 : index
    %51 = vector.load %arg4[%c1_63, %c0_64, %c0_65] : memref<3x384x128xbf16, #tpu.memory_space<vmem>>, vector<1x384x128xbf16>
    %52 = vector.shape_cast %51 : vector<1x384x128xbf16> to vector<384x128xbf16>
    %cst_66 = arith.constant dense<0.000000e+00> : vector<256x128xf32>
    %53 = tpu.matmul %50, %52, %cst_66 {dimension_numbers = #tpu.dot_dimension_numbers<[1], [0], [0], [1], [0, 0, 1, 1], [], []>} : vector<256x384xbf16>, vector<384x128xbf16>, vector<256x128xf32> -> vector<256x128xf32>
    %54 = arith.addf %48, %53 : vector<256x128xf32>
    %c2_67 = arith.constant 2 : index
    %c0_68 = arith.constant 0 : index
    %c0_69 = arith.constant 0 : index
    %55 = vector.load %arg9[%c2_67, %c0_68, %c0_69] : memref<18x16x384xbf16, #tpu.memory_space<vmem>>, vector<16x16x384xbf16>
    %56 = vector.shape_cast %55 : vector<16x16x384xbf16> to vector<256x384xbf16>
    %c2_70 = arith.constant 2 : index
    %c0_71 = arith.constant 0 : index
    %c0_72 = arith.constant 0 : index
    %57 = vector.load %arg4[%c2_70, %c0_71, %c0_72] : memref<3x384x128xbf16, #tpu.memory_space<vmem>>, vector<1x384x128xbf16>
    %58 = vector.shape_cast %57 : vector<1x384x128xbf16> to vector<384x128xbf16>
    %cst_73 = arith.constant dense<0.000000e+00> : vector<256x128xf32>
    %59 = tpu.matmul %56, %58, %cst_73 {dimension_numbers = #tpu.dot_dimension_numbers<[1], [0], [0], [1], [0, 0, 1, 1], [], []>} : vector<256x384xbf16>, vector<384x128xbf16>, vector<256x128xf32> -> vector<256x128xf32>
    %60 = arith.addf %54, %59 : vector<256x128xf32>
    %c0_74 = arith.constant 0 : index
    %c0_75 = arith.constant 0 : index
    %61 = vector.load %arg5[%c0_74, %c0_75] : memref<1x128xf32, #tpu.memory_space<vmem>>, vector<1x128xf32>
    %62 = vector.broadcast %61 : vector<1x128xf32> to vector<256x128xf32>
    %63 = arith.addf %60, %62 : vector<256x128xf32>
    %64 = arith.negf %63 : vector<256x128xf32>
    %65 = math.exp %64 : vector<256x128xf32>
    %cst_76 = arith.constant 1.000000e+00 : f32
    %66 = vector.broadcast %cst_76 : f32 to vector<256x128xf32>
    %67 = arith.addf %66, %65 : vector<256x128xf32>
    %68 = arith.divf %66, %67 : vector<256x128xf32>
    %69 = arith.mulf %63, %68 : vector<256x128xf32>
    %c0_77 = arith.constant 0 : index
    %c1_78 = arith.constant 1 : index
    %c1_79 = arith.constant 1 : index
    %c0_80 = arith.constant 0 : index
    %70 = vector.load %arg1[%c0_77, %c1_78, %c1_79, %c0_80] : memref<1x18x18x128xbf16, #tpu.memory_space<vmem>>, vector<1x16x16x128xbf16>
    %71 = vector.shape_cast %70 : vector<1x16x16x128xbf16> to vector<16x16x128xbf16>
    %72 = vector.shape_cast %71 : vector<16x16x128xbf16> to vector<256x128xbf16>
    %73 = arith.extf %72 : vector<256x128xbf16> to vector<256x128xf32>
    %74 = arith.addf %69, %73 : vector<256x128xf32>
    %75 = vector.shape_cast %74 : vector<256x128xf32> to vector<1x16x16x128xf32>
    %c0_81 = arith.constant 0 : index
    %c0_82 = arith.constant 0 : index
    %c0_83 = arith.constant 0 : index
    %c0_84 = arith.constant 0 : index
    %76 = vector.load %arg6[%c0_81, %c0_82, %c0_83, %c0_84] : memref<1x16x16x128xf32, #tpu.memory_space<vmem>>, vector<1x16x16x128xf32>
    tpu.vector_store %arg6[%c0_81, %c0_82, %c0_83, %c0_84], %75 {strides = array<i32>} : memref<1x16x16x128xf32, #tpu.memory_space<vmem>>, vector<1x16x16x128xf32>,
    return
  }
  func.func @transform_0(%arg0: i32) -> (i32, i32, i32, i32) {
    %c0_i32 = arith.constant 0 : i32
    %c0_i32_0 = arith.constant 0 : i32
    %c0_i32_1 = arith.constant 0 : i32
    %c0_i32_2 = arith.constant 0 : i32
    return %arg0, %c0_i32, %c0_i32_0, %c0_i32_1 : i32, i32, i32, i32
  }
  func.func @transform_1(%arg0: i32) -> (i32, i32, i32) {
    %c0_i32 = arith.constant 0 : i32
    %c0_i32_0 = arith.constant 0 : i32
    %c0_i32_1 = arith.constant 0 : i32
    %c0_i32_2 = arith.constant 0 : i32
    return %c0_i32, %c0_i32_0, %c0_i32_1 : i32, i32, i32
  }
  func.func @transform_2(%arg0: i32) -> (i32, i32) {
    %c0_i32 = arith.constant 0 : i32
    %c0_i32_0 = arith.constant 0 : i32
    %c0_i32_1 = arith.constant 0 : i32
    return %c0_i32, %c0_i32_0 : i32, i32
  }
  func.func @transform_3(%arg0: i32) -> (i32, i32, i32) {
    %c0_i32 = arith.constant 0 : i32
    %c0_i32_0 = arith.constant 0 : i32
    %c0_i32_1 = arith.constant 0 : i32
    %c0_i32_2 = arith.constant 0 : i32
    return %c0_i32, %c0_i32_0, %c0_i32_1 : i32, i32, i32
  }
  func.func @transform_4(%arg0: i32) -> (i32, i32) {
    %c0_i32 = arith.constant 0 : i32
    %c0_i32_0 = arith.constant 0 : i32
    %c0_i32_1 = arith.constant 0 : i32
    return %c0_i32, %c0_i32_0 : i32, i32
  }
  func.func @transform_5(%arg0: i32) -> (i32, i32, i32, i32) {
    %c0_i32 = arith.constant 0 : i32
    %c0_i32_0 = arith.constant 0 : i32
    %c0_i32_1 = arith.constant 0 : i32
    %c0_i32_2 = arith.constant 0 : i32
    return %arg0, %c0_i32, %c0_i32_0, %c0_i32_1 : i32, i32, i32, i32
  }
}

</mosaic_0001>

<llo_original>
// kernel: tpu_custom_call.1
$region0: #{tpu_custom_call.1}
  #allocation0 [shape = 'u32[]', space=smem, size = 0x4, offset = 0x4, fixed_abs, tag = 'smem constant byte address 0x4 - core index']
  #allocation1 [shape = 'u32[144,128]{1,0:T(1,128)}', space=vmem, size = 0x12000, scoped, tag = 'internal scratch']
  #allocation2 [shape = 'bf16[18,16,384]{2,1,0:T(16,128)(2,1)}', space=vmem, size = 0x36000, scoped, tag = 'scratch operand']
  #allocation3 [shape = 'bf16[18,32,128]{2,1,0:T(16,128)(2,1)}', space=vmem, size = 0x24000, scoped, tag = 'scratch operand']
  #allocation4 [shape = 'bf16[18,16,384]{2,1,0:T(16,128)(2,1)}', space=vmem, size = 0x36000, scoped, tag = 'scratch operand']
  %s0 = inlined_call_operand.vmem [shape: bf16[2,18,18,128], index: 0, kind: input, shape index: {}]
  %s1 = inlined_call_operand.vmem [shape: bf16[3,384,128], index: 1, kind: input, shape index: {}]
  %s2 = inlined_call_operand.vmem [shape: f32[1,128], index: 2, kind: input, shape index: {}]
  %s3 = inlined_call_operand.hbm [shape: bf16[3,384,128], index: 3, kind: input, shape index: {}]
  %s4 = inlined_call_operand.vmem [shape: f32[1,128], index: 4, kind: input, shape index: {}]
  %s5 = inlined_call_operand.hbm [shape: f32[2,16,16,128], index: 5, kind: output, shape index: {}]
  %s6 = sld [smem:[#allocation0]]
  $region57: #{tpu_custom_call.1} parent=0
    _
  %s8 = ssub.s32 1, %s6
  %s9 = scalar_select 0, %s8, %s6
  $region1: #{tpu_custom_call.1} parent=0
    #allocation5 [shape = 'u8[294912]{0}', space=vmem, size = 0x48000, scoped, tag = 'input window, operand 3, single buffered']
    #allocation6 [shape = 's32[2]{0}', space=sflag, size = 0x8, scoped, tag = 'scoped memory for tpu_custom_call.1']
    #allocation7 [shape = 's32[2]{0}', space=sflag, size = 0x8, scoped, tag = 'scoped memory for tpu_custom_call.1']
    #allocation8 [shape = 'u8[262144]{0}', space=vmem, size = 0x40000, scoped, tag = 'output window, operand 0']
    %10 = vsyncpa [#allocation6], 0
    %11 = vsyncpa [#allocation7], 0
    %s12 = scalar_lea.sflag [#allocation7], 1
    %13 = vsyncpa %s12, 0
    loop: start=0, step=1, limit=4
    $region2: #{tpu_custom_call.1} parent=1 // loop_pre_header
      _
    $region3: #{tpu_custom_call.1} parent=1 // loop_header
      %s15 = sphi 0, %s19
      %p16 = scmp.ge.s32.totalorder %s15, 4
      %s25 = sphi 0, %s27
      %s28 = sphi 0, %s25
      %s29 = sphi 0, %s28
      %s45 = sphi 0, %s29
      %s49 = sphi 0, %s49
      %s51 = sphi 0, %s49
      %s52 = sphi 0, %s51
      %s66 = sphi 0, %s52
      %s70 = sphi 0, %s70
      %s72 = sphi 0, %s70
      %s73 = sphi 0, %s72
      %s87 = sphi 0, %s73
      %s91 = sphi 0, %s91
      %s93 = sphi 0, %s91
      %s94 = sphi 0, %s93
      %s108 = sphi 0, %s94
      %s112 = sphi 0, %s112
      %s114 = sphi 0, %s112
      %s115 = sphi 0, %s114
      %s129 = sphi 0, %s115
      %s135 = sphi 0, %s137
      %s138 = sphi 0, %s135
      %s139 = sphi 0, %s138
      %s155 = sphi 0, %s139
    $region4: #{tpu_custom_call.1} parent=1 // loop_header_branch
      %18 = sbr.rel (%p16) target = $region8
    $region5: #{tpu_custom_call.1} parent=1 // loop_body
      %s20 = ssub.s32 %s15, 1
      %s21 = ssub.s32 %s15, 2
      %s22 = sadd.s32 %s15, 1
      %s23 = ssub.s32 %s15, %s22
      %p24 = scmp.eq.s32.totalorder %s23, 0
      %s26 = sadd.s32 %s25, 1
      %s27 = scalar_select %p24, %s25, %s26
      %p30 = pneg %p24
      %p31 = scmp.eq.s32.totalorder %s15, 1
      %p32 = por %p30, %p31
      %p33 = scmp.ne.s32.totalorder %s25, %s28
      %p34 = scmp.eq.s32.totalorder %s15, 0
      %p35 = por %p33, %p34
      %p36 = scmp.ne.s32.totalorder %s25, %s28
      %p37 = scmp.eq.s32.totalorder %s20, 1
      %p38 = por %p36, %p37
      %p39 = scmp.ne.s32.totalorder %s28, %s29
      %p40 = scmp.eq.s32.totalorder %s20, 0
      %p41 = por %p39, %p40
      %p42 = scmp.ne.s32.totalorder %s28, %s29
      %p43 = scmp.eq.s32.totalorder %s21, 1
      %p44 = por %p42, %p43
      %p46 = scmp.ne.s32.totalorder %s29, %s45
      %p47 = scmp.eq.s32.totalorder %s21, 0
      %p48 = por %p46, %p47
      %s50 = sadd.s32 %s49, 1
      %p53 = scmp.eq.s32.totalorder %s15, 1
      %p54 = scmp.ne.s32.totalorder %s49, %s51
      %p55 = scmp.eq.s32.totalorder %s15, 0
      %p56 = por %p54, %p55
      %p57 = scmp.ne.s32.totalorder %s49, %s51
      %p58 = scmp.eq.s32.totalorder %s20, 1
      %p59 = por %p57, %p58
      %p60 = scmp.ne.s32.totalorder %s51, %s52
      %p61 = scmp.eq.s32.totalorder %s20, 0
      %p62 = por %p60, %p61
      %p63 = scmp.ne.s32.totalorder %s51, %s52
      %p64 = scmp.eq.s32.totalorder %s21, 1
      %p65 = por %p63, %p64
      %p67 = scmp.ne.s32.totalorder %s52, %s66
      %p68 = scmp.eq.s32.totalorder %s21, 0
      %p69 = por %p67, %p68
      %s71 = sadd.s32 %s70, 1
      %p74 = scmp.eq.s32.totalorder %s15, 1
      %p75 = scmp.ne.s32.totalorder %s70, %s72
      %p76 = scmp.eq.s32.totalorder %s15, 0
      %p77 = por %p75, %p76
      %p78 = scmp.ne.s32.totalorder %s70, %s72
      %p79 = scmp.eq.s32.totalorder %s20, 1
      %p80 = por %p78, %p79
      %p81 = scmp.ne.s32.totalorder %s72, %s73
      %p82 = scmp.eq.s32.totalorder %s20, 0
      %p83 = por %p81, %p82
      %p84 = scmp.ne.s32.totalorder %s72, %s73
      %p85 = scmp.eq.s32.totalorder %s21, 1
      %p86 = por %p84, %p85
      %p88 = scmp.ne.s32.totalorder %s73, %s87
      %p89 = scmp.eq.s32.totalorder %s21, 0
      %p90 = por %p88, %p89
      %s92 = sadd.s32 %s91, 1
      %p95 = scmp.eq.s32.totalorder %s15, 1
      %p96 = scmp.ne.s32.totalorder %s91, %s93
      %p97 = scmp.eq.s32.totalorder %s15, 0
      %p98 = por %p96, %p97
      %p99 = scmp.ne.s32.totalorder %s91, %s93
      %p100 = scmp.eq.s32.totalorder %s20, 1
      %p101 = por %p99, %p100
      %p102 = scmp.ne.s32.totalorder %s93, %s94
      %p103 = scmp.eq.s32.totalorder %s20, 0
      %p104 = por %p102, %p103
      %p105 = scmp.ne.s32.totalorder %s93, %s94
      %p106 = scmp.eq.s32.totalorder %s21, 1
      %p107 = por %p105, %p106
      %p109 = scmp.ne.s32.totalorder %s94, %s108
      %p110 = scmp.eq.s32.totalorder %s21, 0
      %p111 = por %p109, %p110
      %s113 = sadd.s32 %s112, 1
      %p116 = scmp.eq.s32.totalorder %s15, 1
      %p117 = scmp.ne.s32.totalorder %s112, %s114
      %p118 = scmp.eq.s32.totalorder %s15, 0
      %p119 = por %p117, %p118
      %p120 = scmp.ne.s32.totalorder %s112, %s114
      %p121 = scmp.eq.s32.totalorder %s20, 1
      %p122 = por %p120, %p121
      %p123 = scmp.ne.s32.totalorder %s114, %s115
      %p124 = scmp.eq.s32.totalorder %s20, 0
      %p125 = por %p123, %p124
      %p126 = scmp.ne.s32.totalorder %s114, %s115
      %p127 = scmp.eq.s32.totalorder %s21, 1
      %p128 = por %p126, %p127
      %p130 = scmp.ne.s32.totalorder %s115, %s129
      %p131 = scmp.eq.s32.totalorder %s21, 0
      %p132 = por %p130, %p131
      %s133 = ssub.s32 %s15, %s22
      %p134 = scmp.eq.s32.totalorder %s133, 0
      %s136 = sadd.s32 %s135, 1
      %s137 = scalar_select %p134, %s135, %s136
      %p140 = pneg %p134
      %p141 = scmp.eq.s32.totalorder %s15, 1
      %p142 = por %p140, %p141
      %p143 = scmp.ne.s32.totalorder %s135, %s138
      %p144 = scmp.eq.s32.totalorder %s15, 0
      %p145 = por %p143, %p144
      %p146 = scmp.ne.s32.totalorder %s135, %s138
      %p147 = scmp.eq.s32.totalorder %s20, 1
      %p148 = por %p146, %p147
      %p149 = scmp.ne.s32.totalorder %s138, %s139
      %p150 = scmp.eq.s32.totalorder %s20, 0
      %p151 = por %p149, %p150
      %p152 = scmp.ne.s32.totalorder %s138, %s139
      %p153 = scmp.eq.s32.totalorder %s21, 1
      %p154 = por %p152, %p153
      %p156 = scmp.ne.s32.totalorder %s139, %s155
      %p157 = scmp.eq.s32.totalorder %s21, 0
      %p158 = por %p156, %p157
      %p159 = scmp.le.s32.totalorder 1, %s15
      %p160 = scmp.lt.s32.totalorder %s15, 3
      %p161 = pnand %p159, %p160
      %p162 = pneg %p161
      // Predicated region
      $region9: #{tpu_custom_call.1} parent=5 // pred_check
        _
      $region10: #{tpu_custom_call.1} parent=5 // pred_check_branch
        %164 = sbr.rel (%p161) target = $region12
      $region11: #{tpu_custom_call.1} parent=5 // pred_region
        %s165 = ssub.s32 %s15, 1
        // Predicated region
        $region13: #{tpu_custom_call.1} parent=11 // pred_check
          %p166 = pneg %p62
        $region14: #{tpu_custom_call.1} parent=11 // pred_check_branch
          %168 = sbr.rel (%p166) target = $region16
        $region15: #{tpu_custom_call.1} parent=11 // pred_region
          _
        $region16: #{tpu_custom_call.1} parent=11 // pred_fallthru
          _
        // Predicated region
        $region17: #{tpu_custom_call.1} parent=11 // pred_check
          %p169 = pneg %p83
        $region18: #{tpu_custom_call.1} parent=11 // pred_check_branch
          %171 = sbr.rel (%p169) target = $region20
        $region19: #{tpu_custom_call.1} parent=11 // pred_region
          _
        $region20: #{tpu_custom_call.1} parent=11 // pred_fallthru
          _
        // Predicated region
        $region21: #{tpu_custom_call.1} parent=11 // pred_check
          %p172 = pneg %p104
        $region22: #{tpu_custom_call.1} parent=11 // pred_check_branch
          %174 = sbr.rel (%p172) target = $region24
        $region23: #{tpu_custom_call.1} parent=11 // pred_region
          %s176 = ssub.s32 9216, 9216
          %177 = vsyncadd [#allocation6], %s176
          %s178 = sshll.u32 [#allocation5], 4
          %s179 = int_to_ptr.vmem [resolvable:$true] %s178
          %184 = dma.hbm_to_vmem [thread:$0]  %s3, 9216, %s179, [#allocation6], 64, 64, 4
        $region24: #{tpu_custom_call.1} parent=11 // pred_fallthru
          _
        // Predicated region
        $region25: #{tpu_custom_call.1} parent=11 // pred_check
          %p185 = pneg %p125
        $region26: #{tpu_custom_call.1} parent=11 // pred_check_branch
          %187 = sbr.rel (%p185) target = $region28
        $region27: #{tpu_custom_call.1} parent=11 // pred_region
          _
        $region28: #{tpu_custom_call.1} parent=11 // pred_fallthru
          _
      $region12: #{tpu_custom_call.1} parent=5 // pred_fallthru
        _
      %p188 = scmp.lt.s32.totalorder %s15, 2
      // Predicated region
      $region29: #{tpu_custom_call.1} parent=5 // pred_check
        %p189 = pneg %p188
      $region30: #{tpu_custom_call.1} parent=5 // pred_check_branch
        %191 = sbr.rel (%p189) target = $region32
      $region31: #{tpu_custom_call.1} parent=5 // pred_region
        // Predicated region
        $region33: #{tpu_custom_call.1} parent=31 // pred_check
          %p192 = pneg %p35
        $region34: #{tpu_custom_call.1} parent=31 // pred_check_branch
          %194 = sbr.rel (%p192) target = $region36
        $region35: #{tpu_custom_call.1} parent=31 // pred_region
          %p195 = scmp.lt.s32.totalorder %s15, 1
          %s196 = scalar_select %p195, %s15, 1
          %s197 = smul.addr %s196, 54
          %s198 = smul.addr %s197, 4
          %s199 = scalar_lea.vmem %s0, %s198
        $region36: #{tpu_custom_call.1} parent=31 // pred_fallthru
          _
      $region32: #{tpu_custom_call.1} parent=5 // pred_fallthru
        _
      %p200 = scmp.le.s32.totalorder 1, %s15
      %p201 = scmp.lt.s32.totalorder %s15, 3
      %p202 = pnand %p200, %p201
      %p203 = pneg %p202
      // Predicated region
      $region37: #{tpu_custom_call.1} parent=5 // pred_check
        _
      $region38: #{tpu_custom_call.1} parent=5 // pred_check_branch
        %205 = sbr.rel (%p202) target = $region40
      $region39: #{tpu_custom_call.1} parent=5 // pred_region
        %s206 = ssub.s32 %s15, 1
        // Predicated region
        $region41: #{tpu_custom_call.1} parent=39 // pred_check
          %p207 = pneg %p104
        $region42: #{tpu_custom_call.1} parent=39 // pred_check_branch
          %209 = sbr.rel (%p207) target = $region44
        $region43: #{tpu_custom_call.1} parent=39 // pred_region
          %210 = dma.done [#allocation6], 9216
        $region44: #{tpu_custom_call.1} parent=39 // pred_fallthru
          _
        %p211 = scmp.lt.s32.totalorder %s20, 1
        %s212 = scalar_select %p211, %s20, 1
        %s213 = smul.addr %s212, 54
        %s214 = smul.addr %s213, 4
        %s215 = scalar_lea.vmem %s0, %s214
        %p216 = pneg %p41
        %p217 = pneg %p38
        %p218 = pneg %p62
        %p219 = pneg %p59
        %p220 = pneg %p83
        %p221 = pneg %p80
        %p222 = pneg %p104
        %p223 = pneg %p101
        %p224 = pneg %p125
        %p225 = pneg %p122
        %p226 = pneg %p151
        %p227 = pneg %p148
        %s228 = sand.u32 %s138, 1
        %s229 = scalar_lea.sflag [#allocation7], %s228
        %s230 = sand.u32 %s138, 1
        %s231 = smul.addr %s230, 256
        %s232 = scalar_lea.vmem [#allocation8], %s231
        %p233 = scmp.lt.s32.totalorder %s20, 1
        %s234 = scalar_select %p233, %s20, 1
        %s235 = smul.addr %s234, 54
        %s236 = smul.addr %s235, 4
        %s237 = scalar_lea.vmem %s0, %s236
        %v239 = vld [vmem:[%s237] sm:$0xf]
        %v240 = vld [vmem:[%s237 + $0x4] sm:$0xf]
        %v241 = vld [vmem:[%s237 + $0xc] sm:$0xf]
        %v242 = vld [vmem:[%s237 + $0x10] sm:$0xf]
        %v243 = vld [vmem:[%s237 + $0x18] sm:$0xf]
        %v244 = vld [vmem:[%s237 + $0x1c] sm:$0xf]
        %v245 = vld [vmem:[%s237 + $0x24] sm:$0xf]
        %v246 = vld [vmem:[%s237 + $0x28] sm:$0xf]
        %v247 = vld [vmem:[%s237 + $0x30] sm:$0xf]
        %v248 = vld [vmem:[%s237 + $0x34] sm:$0xf]
        %v249 = vld [vmem:[%s237 + $0x3c] sm:$0xf]
        %v250 = vld [vmem:[%s237 + $0x40] sm:$0xf]
        %v251 = vld [vmem:[%s237 + $0x48] sm:$0xf]
        %v252 = vld [vmem:[%s237 + $0x4c] sm:$0xf]
        %v253 = vld [vmem:[%s237 + $0x54] sm:$0xf]
        %v254 = vld [vmem:[%s237 + $0x58] sm:$0xf]
        %v255 = vld [vmem:[%s237 + $0x60] sm:$0xf]
        %v256 = vld [vmem:[%s237 + $0x64] sm:$0xf]
        %v257 = vld [vmem:[%s237 + $0x6c] sm:$0xf]
        %v258 = vld [vmem:[%s237 + $0x70] sm:$0xf]
        %v259 = vld [vmem:[%s237 + $0x78] sm:$0xf]
        %v260 = vld [vmem:[%s237 + $0x7c] sm:$0xf]
        %v261 = vld [vmem:[%s237 + $0x84] sm:$0xf]
        %v262 = vld [vmem:[%s237 + $0x88] sm:$0xf]
        %v263 = vld [vmem:[%s237 + $0x90] sm:$0xf]
        %v264 = vld [vmem:[%s237 + $0x94] sm:$0xf]
        %v265 = vld [vmem:[%s237 + $0x9c] sm:$0xf]
        %v266 = vld [vmem:[%s237 + $0xa0] sm:$0xf]
        %v267 = vld [vmem:[%s237 + $0xa8] sm:$0xf]
        %v268 = vld [vmem:[%s237 + $0xac] sm:$0xf]
        %v269 = vld [vmem:[%s237 + $0xb4] sm:$0xf]
        %v270 = vld [vmem:[%s237 + $0xb8] sm:$0xf]
        %v271 = vld [vmem:[%s237 + $0xc0] sm:$0xf]
        %v272 = vld [vmem:[%s237 + $0xc4] sm:$0xf]
        %v273 = vld [vmem:[%s237 + $0xcc] sm:$0xf]
        %v274 = vld [vmem:[%s237 + $0xd0] sm:$0xf]
        %v275 = vld [vmem:[%s237 + $0x8] sm:$0x1]
        %v276 = vld [vmem:[%s237 + $0x14] sm:$0x1]
        %v277 = vld [vmem:[%s237 + $0x20] sm:$0x1]
        %v278 = vld [vmem:[%s237 + $0x2c] sm:$0x1]
        %v279 = vld [vmem:[%s237 + $0x38] sm:$0x1]
        %v280 = vld [vmem:[%s237 + $0x44] sm:$0x1]
        %v281 = vld [vmem:[%s237 + $0x50] sm:$0x1]
        %v282 = vld [vmem:[%s237 + $0x5c] sm:$0x1]
        %v283 = vld [vmem:[%s237 + $0x68] sm:$0x1]
        %v284 = vld [vmem:[%s237 + $0x74] sm:$0x1]
        %v285 = vld [vmem:[%s237 + $0x80] sm:$0x1]
        %v286 = vld [vmem:[%s237 + $0x8c] sm:$0x1]
        %v287 = vld [vmem:[%s237 + $0x98] sm:$0x1]
        %v288 = vld [vmem:[%s237 + $0xa4] sm:$0x1]
        %v289 = vld [vmem:[%s237 + $0xb0] sm:$0x1]
        %v290 = vld [vmem:[%s237 + $0xbc] sm:$0x1]
        %v291 = vld [vmem:[%s237 + $0xc8] sm:$0x1]
        %v292 = vld [vmem:[%s237 + $0xd4] sm:$0x1]
        %v293 = vld [vmem:[%s237] sm:$0xe]
        %v294 = vld [vmem:[%s237 + $0xc] sm:$0xe]
        %v295 = vld [vmem:[%s237 + $0x18] sm:$0xe]
        %v296 = vld [vmem:[%s237 + $0x24] sm:$0xe]
        %v297 = vld [vmem:[%s237 + $0x30] sm:$0xe]
        %v298 = vld [vmem:[%s237 + $0x3c] sm:$0xe]
        %v299 = vld [vmem:[%s237 + $0x48] sm:$0xe]
        %v300 = vld [vmem:[%s237 + $0x54] sm:$0xe]
        %v301 = vld [vmem:[%s237 + $0x60] sm:$0xe]
        %v302 = vld [vmem:[%s237 + $0x6c] sm:$0xe]
        %v303 = vld [vmem:[%s237 + $0x78] sm:$0xe]
        %v304 = vld [vmem:[%s237 + $0x84] sm:$0xe]
        %v305 = vld [vmem:[%s237 + $0x90] sm:$0xe]
        %v306 = vld [vmem:[%s237 + $0x9c] sm:$0xe]
        %v307 = vld [vmem:[%s237 + $0xa8] sm:$0xe]
        %v308 = vld [vmem:[%s237 + $0xb4] sm:$0xe]
        %v309 = vld [vmem:[%s237 + $0xc0] sm:$0xe]
        %v310 = vld [vmem:[%s237 + $0xcc] sm:$0xe]
        %v347 = vunpack.c.l.b16 %v239
        %v348 = vunpack.c.l.b16 %v240
        %v349 = vunpack.c.l.b16 %v241
        %v350 = vunpack.c.l.b16 %v242
        %v351 = vunpack.c.l.b16 %v243
        %v352 = vunpack.c.l.b16 %v244
        %v353 = vunpack.c.l.b16 %v245
        %v354 = vunpack.c.l.b16 %v246
        %v355 = vunpack.c.l.b16 %v247
        %v356 = vunpack.c.l.b16 %v248
        %v357 = vunpack.c.l.b16 %v249
        %v358 = vunpack.c.l.b16 %v250
        %v359 = vunpack.c.l.b16 %v251
        %v360 = vunpack.c.l.b16 %v252
        %v361 = vunpack.c.l.b16 %v253
        %v362 = vunpack.c.l.b16 %v254
        %v363 = vunpack.c.l.b16 %v255
        %v364 = vunpack.c.l.b16 %v256
        %v365 = vunpack.c.l.b16 %v257
        %v366 = vunpack.c.l.b16 %v258
        %v367 = vunpack.c.l.b16 %v259
        %v368 = vunpack.c.l.b16 %v260
        %v369 = vunpack.c.l.b16 %v261
        %v370 = vunpack.c.l.b16 %v262
        %v371 = vunpack.c.l.b16 %v263
        %v372 = vunpack.c.l.b16 %v264
        %v373 = vunpack.c.l.b16 %v265
        %v374 = vunpack.c.l.b16 %v266
        %v375 = vunpack.c.l.b16 %v267
        %v376 = vunpack.c.l.b16 %v268
        %v377 = vunpack.c.l.b16 %v269
        %v378 = vunpack.c.l.b16 %v270
        %v379 = vunpack.c.l.b16 %v271
        %v380 = vunpack.c.l.b16 %v272
        %v381 = vunpack.c.l.b16 %v273
        %v382 = vunpack.c.l.b16 %v274
        %v383 = vpack.c.b16 %v348, %v347
        %v384 = vpack.c.b16 %v350, %v349
        %v385 = vpack.c.b16 %v352, %v351
        %v386 = vpack.c.b16 %v354, %v353
        %v387 = vpack.c.b16 %v356, %v355
        %v388 = vpack.c.b16 %v358, %v357
        %v389 = vpack.c.b16 %v360, %v359
        %v390 = vpack.c.b16 %v362, %v361
        %v391 = vpack.c.b16 %v364, %v363
        %v392 = vpack.c.b16 %v366, %v365
        %v393 = vpack.c.b16 %v368, %v367
        %v394 = vpack.c.b16 %v370, %v369
        %v395 = vpack.c.b16 %v372, %v371
        %v396 = vpack.c.b16 %v374, %v373
        %v397 = vpack.c.b16 %v376, %v375
        %v398 = vpack.c.b16 %v378, %v377
        %v399 = vpack.c.b16 %v380, %v379
        %v400 = vpack.c.b16 %v382, %v381
        %v437 = vunpack.c.l.b16 %v275
        %v438 = vunpack.c.l.b16 %v276
        %v439 = vunpack.c.l.b16 %v277
        %v440 = vunpack.c.l.b16 %v278
        %v441 = vunpack.c.l.b16 %v279
        %v442 = vunpack.c.l.b16 %v280
        %v443 = vunpack.c.l.b16 %v281
        %v444 = vunpack.c.l.b16 %v282
        %v445 = vunpack.c.l.b16 %v283
        %v446 = vunpack.c.l.b16 %v284
        %v447 = vunpack.c.l.b16 %v285
        %v448 = vunpack.c.l.b16 %v286
        %v449 = vunpack.c.l.b16 %v287
        %v450 = vunpack.c.l.b16 %v288
        %v451 = vunpack.c.l.b16 %v289
        %v452 = vunpack.c.l.b16 %v290
        %v453 = vunpack.c.l.b16 %v291
        %v454 = vunpack.c.l.b16 %v292
        %v455 = vpack.c.b16 %v437, %v437
        %v456 = vpack.c.b16 %v438, %v438
        %v457 = vpack.c.b16 %v439, %v439
        %v458 = vpack.c.b16 %v440, %v440
        %v459 = vpack.c.b16 %v441, %v441
        %v460 = vpack.c.b16 %v442, %v442
        %v461 = vpack.c.b16 %v443, %v443
        %v462 = vpack.c.b16 %v444, %v444
        %v463 = vpack.c.b16 %v445, %v445
        %v464 = vpack.c.b16 %v446, %v446
        %v465 = vpack.c.b16 %v447, %v447
        %v466 = vpack.c.b16 %v448, %v448
        %v467 = vpack.c.b16 %v449, %v449
        %v468 = vpack.c.b16 %v450, %v450
        %v469 = vpack.c.b16 %v451, %v451
        %v470 = vpack.c.b16 %v452, %v452
        %v471 = vpack.c.b16 %v453, %v453
        %v472 = vpack.c.b16 %v454, %v454
        %vm473 = vsmask.f32 7424
        %v475 = vshrl.u32 %v383, 16
        %v477 = vshll.u32 %v383, 16
        %v479 = vrot.slane %v477, 1
        %v480 = vor.u32 %v475, %v479
        %v482 = vshll.u32 %v455, 16
        %v484 = vrot.slane %v482, 1
        %v485 = vsel %vm473, %v480, %v484
        %v487 = vshrl.u32 %v384, 16
        %v489 = vshll.u32 %v384, 16
        %v491 = vrot.slane %v489, 1
        %v492 = vor.u32 %v487, %v491
        %v494 = vshll.u32 %v456, 16
        %v496 = vrot.slane %v494, 1
        %v497 = vsel %vm473, %v492, %v496
        %v499 = vshrl.u32 %v385, 16
        %v501 = vshll.u32 %v385, 16
        %v503 = vrot.slane %v501, 1
        %v504 = vor.u32 %v499, %v503
        %v506 = vshll.u32 %v457, 16
        %v508 = vrot.slane %v506, 1
        %v509 = vsel %vm473, %v504, %v508
        %v511 = vshrl.u32 %v386, 16
        %v513 = vshll.u32 %v386, 16
        %v515 = vrot.slane %v513, 1
        %v516 = vor.u32 %v511, %v515
        %v518 = vshll.u32 %v458, 16
        %v520 = vrot.slane %v518, 1
        %v521 = vsel %vm473, %v516, %v520
        %v523 = vshrl.u32 %v387, 16
        %v525 = vshll.u32 %v387, 16
        %v527 = vrot.slane %v525, 1
        %v528 = vor.u32 %v523, %v527
        %v530 = vshll.u32 %v459, 16
        %v532 = vrot.slane %v530, 1
        %v533 = vsel %vm473, %v528, %v532
        %v535 = vshrl.u32 %v388, 16
        %v537 = vshll.u32 %v388, 16
        %v539 = vrot.slane %v537, 1
        %v540 = vor.u32 %v535, %v539
        %v542 = vshll.u32 %v460, 16
        %v544 = vrot.slane %v542, 1
        %v545 = vsel %vm473, %v540, %v544
        %v547 = vshrl.u32 %v389, 16
        %v549 = vshll.u32 %v389, 16
        %v551 = vrot.slane %v549, 1
        %v552 = vor.u32 %v547, %v551
        %v554 = vshll.u32 %v461, 16
        %v556 = vrot.slane %v554, 1
        %v557 = vsel %vm473, %v552, %v556
        %v559 = vshrl.u32 %v390, 16
        %v561 = vshll.u32 %v390, 16
        %v563 = vrot.slane %v561, 1
        %v564 = vor.u32 %v559, %v563
        %v566 = vshll.u32 %v462, 16
        %v568 = vrot.slane %v566, 1
        %v569 = vsel %vm473, %v564, %v568
        %v571 = vshrl.u32 %v391, 16
        %v573 = vshll.u32 %v391, 16
        %v575 = vrot.slane %v573, 1
        %v576 = vor.u32 %v571, %v575
        %v578 = vshll.u32 %v463, 16
        %v580 = vrot.slane %v578, 1
        %v581 = vsel %vm473, %v576, %v580
        %v583 = vshrl.u32 %v392, 16
        %v585 = vshll.u32 %v392, 16
        %v587 = vrot.slane %v585, 1
        %v588 = vor.u32 %v583, %v587
        %v590 = vshll.u32 %v464, 16
        %v592 = vrot.slane %v590, 1
        %v593 = vsel %vm473, %v588, %v592
        %v595 = vshrl.u32 %v393, 16
        %v597 = vshll.u32 %v393, 16
        %v599 = vrot.slane %v597, 1
        %v600 = vor.u32 %v595, %v599
        %v602 = vshll.u32 %v465, 16
        %v604 = vrot.slane %v602, 1
        %v605 = vsel %vm473, %v600, %v604
        %v607 = vshrl.u32 %v394, 16
        %v609 = vshll.u32 %v394, 16
        %v611 = vrot.slane %v609, 1
        %v612 = vor.u32 %v607, %v611
        %v614 = vshll.u32 %v466, 16
        %v616 = vrot.slane %v614, 1
        %v617 = vsel %vm473, %v612, %v616
        %v619 = vshrl.u32 %v395, 16
        %v621 = vshll.u32 %v395, 16
        %v623 = vrot.slane %v621, 1
        %v624 = vor.u32 %v619, %v623
        %v626 = vshll.u32 %v467, 16
        %v628 = vrot.slane %v626, 1
        %v629 = vsel %vm473, %v624, %v628
        %v631 = vshrl.u32 %v396, 16
        %v633 = vshll.u32 %v396, 16
        %v635 = vrot.slane %v633, 1
        %v636 = vor.u32 %v631, %v635
        %v638 = vshll.u32 %v468, 16
        %v640 = vrot.slane %v638, 1
        %v641 = vsel %vm473, %v636, %v640
        %v643 = vshrl.u32 %v397, 16
        %v645 = vshll.u32 %v397, 16
        %v647 = vrot.slane %v645, 1
        %v648 = vor.u32 %v643, %v647
        %v650 = vshll.u32 %v469, 16
        %v652 = vrot.slane %v650, 1
        %v653 = vsel %vm473, %v648, %v652
        %v655 = vshrl.u32 %v398, 16
        %v657 = vshll.u32 %v398, 16
        %v659 = vrot.slane %v657, 1
        %v660 = vor.u32 %v655, %v659
        %v662 = vshll.u32 %v470, 16
        %v664 = vrot.slane %v662, 1
        %v665 = vsel %vm473, %v660, %v664
        %v667 = vshrl.u32 %v399, 16
        %v669 = vshll.u32 %v399, 16
        %v671 = vrot.slane %v669, 1
        %v672 = vor.u32 %v667, %v671
        %v674 = vshll.u32 %v471, 16
        %v676 = vrot.slane %v674, 1
        %v677 = vsel %vm473, %v672, %v676
        %v679 = vshrl.u32 %v400, 16
        %v681 = vshll.u32 %v400, 16
        %v683 = vrot.slane %v681, 1
        %v684 = vor.u32 %v679, %v683
        %v686 = vshll.u32 %v472, 16
        %v688 = vrot.slane %v686, 1
        %v689 = vsel %vm473, %v684, %v688
        %v726 = vunpack.c.l.b16 %v293
        %v727 = vunpack.c.l.b16 %v294
        %v728 = vunpack.c.l.b16 %v295
        %v729 = vunpack.c.l.b16 %v296
        %v730 = vunpack.c.l.b16 %v297
        %v731 = vunpack.c.l.b16 %v298
        %v732 = vunpack.c.l.b16 %v299
        %v733 = vunpack.c.l.b16 %v300
        %v734 = vunpack.c.l.b16 %v301
        %v735 = vunpack.c.l.b16 %v302
        %v736 = vunpack.c.l.b16 %v303
        %v737 = vunpack.c.l.b16 %v304
        %v738 = vunpack.c.l.b16 %v305
        %v739 = vunpack.c.l.b16 %v306
        %v740 = vunpack.c.l.b16 %v307
        %v741 = vunpack.c.l.b16 %v308
        %v742 = vunpack.c.l.b16 %v309
        %v743 = vunpack.c.l.b16 %v310
        %v744 = vpack.c.b16 %v348, %v726
        %v745 = vpack.c.b16 %v350, %v727
        %v746 = vpack.c.b16 %v352, %v728
        %v747 = vpack.c.b16 %v354, %v729
        %v748 = vpack.c.b16 %v356, %v730
        %v749 = vpack.c.b16 %v358, %v731
        %v750 = vpack.c.b16 %v360, %v732
        %v751 = vpack.c.b16 %v362, %v733
        %v752 = vpack.c.b16 %v364, %v734
        %v753 = vpack.c.b16 %v366, %v735
        %v754 = vpack.c.b16 %v368, %v736
        %v755 = vpack.c.b16 %v370, %v737
        %v756 = vpack.c.b16 %v372, %v738
        %v757 = vpack.c.b16 %v374, %v739
        %v758 = vpack.c.b16 %v376, %v740
        %v759 = vpack.c.b16 %v378, %v741
        %v760 = vpack.c.b16 %v380, %v742
        %v761 = vpack.c.b16 %v382, %v743
        %vm762 = vcmask 1046528
        %v763 = vrot.slane %v744, 1
        %v764 = vrot.slane %v455, 1
        %v765 = vsel %vm762, %v763, %v764
        %v766 = vrot.slane %v745, 1
        %v767 = vrot.slane %v456, 1
        %v768 = vsel %vm762, %v766, %v767
        %v769 = vrot.slane %v746, 1
        %v770 = vrot.slane %v457, 1
        %v771 = vsel %vm762, %v769, %v770
        %v772 = vrot.slane %v747, 1
        %v773 = vrot.slane %v458, 1
        %v774 = vsel %vm762, %v772, %v773
        %v775 = vrot.slane %v748, 1
        %v776 = vrot.slane %v459, 1
        %v777 = vsel %vm762, %v775, %v776
        %v778 = vrot.slane %v749, 1
        %v779 = vrot.slane %v460, 1
        %v780 = vsel %vm762, %v778, %v779
        %v781 = vrot.slane %v750, 1
        %v782 = vrot.slane %v461, 1
        %v783 = vsel %vm762, %v781, %v782
        %v784 = vrot.slane %v751, 1
        %v785 = vrot.slane %v462, 1
        %v786 = vsel %vm762, %v784, %v785
        %v787 = vrot.slane %v752, 1
        %v788 = vrot.slane %v463, 1
        %v789 = vsel %vm762, %v787, %v788
        %v790 = vrot.slane %v753, 1
        %v791 = vrot.slane %v464, 1
        %v792 = vsel %vm762, %v790, %v791
        %v793 = vrot.slane %v754, 1
        %v794 = vrot.slane %v465, 1
        %v795 = vsel %vm762, %v793, %v794
        %v796 = vrot.slane %v755, 1
        %v797 = vrot.slane %v466, 1
        %v798 = vsel %vm762, %v796, %v797
        %v799 = vrot.slane %v756, 1
        %v800 = vrot.slane %v467, 1
        %v801 = vsel %vm762, %v799, %v800
        %v802 = vrot.slane %v757, 1
        %v803 = vrot.slane %v468, 1
        %v804 = vsel %vm762, %v802, %v803
        %v805 = vrot.slane %v758, 1
        %v806 = vrot.slane %v469, 1
        %v807 = vsel %vm762, %v805, %v806
        %v808 = vrot.slane %v759, 1
        %v809 = vrot.slane %v470, 1
        %v810 = vsel %vm762, %v808, %v809
        %v811 = vrot.slane %v760, 1
        %v812 = vrot.slane %v471, 1
        %v813 = vsel %vm762, %v811, %v812
        %v814 = vrot.slane %v761, 1
        %v815 = vrot.slane %v472, 1
        %v816 = vsel %vm762, %v814, %v815
        %835 = vst [vmem:[#allocation2] sm:$0xff] %v383
        %836 = vst [vmem:[#allocation2 + $0x8] sm:$0xff] %v485
        %837 = vst [vmem:[#allocation2 + $0x10] sm:$0xff] %v765
        %838 = vst [vmem:[#allocation2 + $0x18] sm:$0xff] %v384
        %839 = vst [vmem:[#allocation2 + $0x20] sm:$0xff] %v497
        %840 = vst [vmem:[#allocation2 + $0x28] sm:$0xff] %v768
        %841 = vst [vmem:[#allocation2 + $0x30] sm:$0xff] %v385
        %842 = vst [vmem:[#allocation2 + $0x38] sm:$0xff] %v509
        %843 = vst [vmem:[#allocation2 + $0x40] sm:$0xff] %v771
        %844 = vst [vmem:[#allocation2 + $0x48] sm:$0xff] %v386
        %845 = vst [vmem:[#allocation2 + $0x50] sm:$0xff] %v521
        %846 = vst [vmem:[#allocation2 + $0x58] sm:$0xff] %v774
        %847 = vst [vmem:[#allocation2 + $0x60] sm:$0xff] %v387
        %848 = vst [vmem:[#allocation2 + $0x68] sm:$0xff] %v533
        %849 = vst [vmem:[#allocation2 + $0x70] sm:$0xff] %v777
        %850 = vst [vmem:[#allocation2 + $0x78] sm:$0xff] %v388
        %851 = vst [vmem:[#allocation2 + $0x80] sm:$0xff] %v545
        %852 = vst [vmem:[#allocation2 + $0x88] sm:$0xff] %v780
        %853 = vst [vmem:[#allocation2 + $0x90] sm:$0xff] %v389
        %854 = vst [vmem:[#allocation2 + $0x98] sm:$0xff] %v557
        %855 = vst [vmem:[#allocation2 + $0xa0] sm:$0xff] %v783
        %856 = vst [vmem:[#allocation2 + $0xa8] sm:$0xff] %v390
        %857 = vst [vmem:[#allocation2 + $0xb0] sm:$0xff] %v569
        %858 = vst [vmem:[#allocation2 + $0xb8] sm:$0xff] %v786
        %859 = vst [vmem:[#allocation2 + $0xc0] sm:$0xff] %v391
        %860 = vst [vmem:[#allocation2 + $0xc8] sm:$0xff] %v581
        %861 = vst [vmem:[#allocation2 + $0xd0] sm:$0xff] %v789
        %862 = vst [vmem:[#allocation2 + $0xd8] sm:$0xff] %v392
        %863 = vst [vmem:[#allocation2 + $0xe0] sm:$0xff] %v593
        %864 = vst [vmem:[#allocation2 + $0xe8] sm:$0xff] %v792
        %865 = vst [vmem:[#allocation2 + $0xf0] sm:$0xff] %v393
        %866 = vst [vmem:[#allocation2 + $0xf8] sm:$0xff] %v605
        %867 = vst [vmem:[#allocation2 + $0x100] sm:$0xff] %v795
        %868 = vst [vmem:[#allocation2 + $0x108] sm:$0xff] %v394
        %869 = vst [vmem:[#allocation2 + $0x110] sm:$0xff] %v617
        %870 = vst [vmem:[#allocation2 + $0x118] sm:$0xff] %v798
        %871 = vst [vmem:[#allocation2 + $0x120] sm:$0xff] %v395
        %872 = vst [vmem:[#allocation2 + $0x128] sm:$0xff] %v629
        %873 = vst [vmem:[#allocation2 + $0x130] sm:$0xff] %v801
        %874 = vst [vmem:[#allocation2 + $0x138] sm:$0xff] %v396
        %875 = vst [vmem:[#allocation2 + $0x140] sm:$0xff] %v641
        %876 = vst [vmem:[#allocation2 + $0x148] sm:$0xff] %v804
        %877 = vst [vmem:[#allocation2 + $0x150] sm:$0xff] %v397
        %878 = vst [vmem:[#allocation2 + $0x158] sm:$0xff] %v653
        %879 = vst [vmem:[#allocation2 + $0x160] sm:$0xff] %v807
        %880 = vst [vmem:[#allocation2 + $0x168] sm:$0xff] %v398
        %881 = vst [vmem:[#allocation2 + $0x170] sm:$0xff] %v665
        %882 = vst [vmem:[#allocation2 + $0x178] sm:$0xff] %v810
        %883 = vst [vmem:[#allocation2 + $0x180] sm:$0xff] %v399
        %884 = vst [vmem:[#allocation2 + $0x188] sm:$0xff] %v677
        %885 = vst [vmem:[#allocation2 + $0x190] sm:$0xff] %v813
        %886 = vst [vmem:[#allocation2 + $0x198] sm:$0xff] %v400
        %887 = vst [vmem:[#allocation2 + $0x1a0] sm:$0xff] %v689
        %888 = vst [vmem:[#allocation2 + $0x1a8] sm:$0xff] %v816
        %v889 = vld [vmem:[#allocation2] sm:$0xff]
        %v890 = vld [vmem:[#allocation2 + $0x8] sm:$0xff]
        %v891 = vld [vmem:[#allocation2 + $0x10] sm:$0xff]
        %v892 = vld [vmem:[#allocation2 + $0x18] sm:$0xff]
        %v893 = vld [vmem:[#allocation2 + $0x20] sm:$0xff]
        %v894 = vld [vmem:[#allocation2 + $0x28] sm:$0xff]
        %v895 = vld [vmem:[#allocation2 + $0x30] sm:$0xff]
        %v896 = vld [vmem:[#allocation2 + $0x38] sm:$0xff]
        %v897 = vld [vmem:[#allocation2 + $0x40] sm:$0xff]
        %v898 = vld [vmem:[#allocation2 + $0x48] sm:$0xff]
        %v899 = vld [vmem:[#allocation2 + $0x50] sm:$0xff]
        %v900 = vld [vmem:[#allocation2 + $0x58] sm:$0xff]
        %v901 = vld [vmem:[#allocation2 + $0x60] sm:$0xff]
        %v902 = vld [vmem:[#allocation2 + $0x68] sm:$0xff]
        %v903 = vld [vmem:[#allocation2 + $0x70] sm:$0xff]
        %v904 = vld [vmem:[#allocation2 + $0x78] sm:$0xff]
        %v905 = vld [vmem:[#allocation2 + $0x80] sm:$0xff]
        %v906 = vld [vmem:[#allocation2 + $0x88] sm:$0xff]
        %v907 = vld [vmem:[#allocation2 + $0x90] sm:$0xff]
        %v908 = vld [vmem:[#allocation2 + $0x98] sm:$0xff]
        %v909 = vld [vmem:[#allocation2 + $0xa0] sm:$0xff]
        %v910 = vld [vmem:[#allocation2 + $0xa8] sm:$0xff]
        %v911 = vld [vmem:[#allocation2 + $0xb0] sm:$0xff]
        %v912 = vld [vmem:[#allocation2 + $0xb8] sm:$0xff]
        %v913 = vld [vmem:[#allocation2 + $0xc0] sm:$0xff]
        %v914 = vld [vmem:[#allocation2 + $0xc8] sm:$0xff]
        %v915 = vld [vmem:[#allocation2 + $0xd0] sm:$0xff]
        %v916 = vld [vmem:[#allocation2 + $0xd8] sm:$0xff]
        %v917 = vld [vmem:[#allocation2 + $0xe0] sm:$0xff]
        %v918 = vld [vmem:[#allocation2 + $0xe8] sm:$0xff]
        %v919 = vld [vmem:[#allocation2 + $0xf0] sm:$0xff]
        %v920 = vld [vmem:[#allocation2 + $0xf8] sm:$0xff]
        %v921 = vld [vmem:[#allocation2 + $0x100] sm:$0xff]
        %v922 = vld [vmem:[#allocation2 + $0x108] sm:$0xff]
        %v923 = vld [vmem:[#allocation2 + $0x110] sm:$0xff]
        %v924 = vld [vmem:[#allocation2 + $0x118] sm:$0xff]
        %v925 = vld [vmem:[#allocation2 + $0x120] sm:$0xff]
        %v926 = vld [vmem:[#allocation2 + $0x128] sm:$0xff]
        %v927 = vld [vmem:[#allocation2 + $0x130] sm:$0xff]
        %v928 = vld [vmem:[#allocation2 + $0x138] sm:$0xff]
        %v929 = vld [vmem:[#allocation2 + $0x140] sm:$0xff]
        %v930 = vld [vmem:[#allocation2 + $0x148] sm:$0xff]
        %v931 = vld [vmem:[#allocation2 + $0x150] sm:$0xff]
        %v932 = vld [vmem:[#allocation2 + $0x158] sm:$0xff]
        %v933 = vld [vmem:[#allocation2 + $0x160] sm:$0xff]
        %v934 = vld [vmem:[#allocation2 + $0x168] sm:$0xff]
        %v935 = vld [vmem:[#allocation2 + $0x170] sm:$0xff]
        %v936 = vld [vmem:[#allocation2 + $0x178] sm:$0xff]
        %v937 = vld [vmem:[%s1] sm:$0xf]
        %v938 = vld [vmem:[%s1 + $0x4] sm:$0xf]
        %v939 = vld [vmem:[%s1 + $0x8] sm:$0xf]
        %v940 = vld [vmem:[%s1 + $0xc] sm:$0xf]
        %v941 = vld [vmem:[%s1 + $0x10] sm:$0xf]
        %v942 = vld [vmem:[%s1 + $0x14] sm:$0xf]
        %v943 = vld [vmem:[%s1 + $0x18] sm:$0xf]
        %v944 = vld [vmem:[%s1 + $0x1c] sm:$0xf]
        %v945 = vld [vmem:[%s1 + $0x20] sm:$0xf]
        %v946 = vld [vmem:[%s1 + $0x24] sm:$0xf]
        %v947 = vld [vmem:[%s1 + $0x28] sm:$0xf]
        %v948 = vld [vmem:[%s1 + $0x2c] sm:$0xf]
        %v949 = vld [vmem:[%s1 + $0x30] sm:$0xf]
        %v950 = vld [vmem:[%s1 + $0x34] sm:$0xf]
        %v951 = vld [vmem:[%s1 + $0x38] sm:$0xf]
        %v952 = vld [vmem:[%s1 + $0x3c] sm:$0xf]
        %v953 = vld [vmem:[%s1 + $0x40] sm:$0xf]
        %v954 = vld [vmem:[%s1 + $0x44] sm:$0xf]
        %v955 = vld [vmem:[%s1 + $0x48] sm:$0xf]
        %v956 = vld [vmem:[%s1 + $0x4c] sm:$0xf]
        %v957 = vld [vmem:[%s1 + $0x50] sm:$0xf]
        %v958 = vld [vmem:[%s1 + $0x54] sm:$0xf]
        %v959 = vld [vmem:[%s1 + $0x58] sm:$0xf]
        %v960 = vld [vmem:[%s1 + $0x5c] sm:$0xf]
        %v961 = vld [vmem:[%s1 + $0x60] sm:$0xf]
        %v962 = vld [vmem:[%s1 + $0x64] sm:$0xf]
        %v963 = vld [vmem:[%s1 + $0x68] sm:$0xf]
        %v964 = vld [vmem:[%s1 + $0x6c] sm:$0xf]
        %v965 = vld [vmem:[%s1 + $0x70] sm:$0xf]
        %v966 = vld [vmem:[%s1 + $0x74] sm:$0xf]
        %v967 = vld [vmem:[%s1 + $0x78] sm:$0xf]
        %v968 = vld [vmem:[%s1 + $0x7c] sm:$0xf]
        %v969 = vld [vmem:[%s1 + $0x80] sm:$0xf]
        %v970 = vld [vmem:[%s1 + $0x84] sm:$0xf]
        %v971 = vld [vmem:[%s1 + $0x88] sm:$0xf]
        %v972 = vld [vmem:[%s1 + $0x8c] sm:$0xf]
        %v973 = vld [vmem:[%s1 + $0x90] sm:$0xf]
        %v974 = vld [vmem:[%s1 + $0x94] sm:$0xf]
        %v975 = vld [vmem:[%s1 + $0x98] sm:$0xf]
        %v976 = vld [vmem:[%s1 + $0x9c] sm:$0xf]
        %v977 = vld [vmem:[%s1 + $0xa0] sm:$0xf]
        %v978 = vld [vmem:[%s1 + $0xa4] sm:$0xf]
        %v979 = vld [vmem:[%s1 + $0xa8] sm:$0xf]
        %v980 = vld [vmem:[%s1 + $0xac] sm:$0xf]
        %v981 = vld [vmem:[%s1 + $0xb0] sm:$0xf]
        %v982 = vld [vmem:[%s1 + $0xb4] sm:$0xf]
        %v983 = vld [vmem:[%s1 + $0xb8] sm:$0xf]
        %v984 = vld [vmem:[%s1 + $0xbc] sm:$0xf]
        %s985 = scalar_lea.vmem [#allocation2], 24
        %v986 = vld [vmem:[%s985] sm:$0xff]
        %v987 = vld [vmem:[%s985 + $0x8] sm:$0xff]
        %v988 = vld [vmem:[%s985 + $0x10] sm:$0xff]
        %v989 = vld [vmem:[%s985 + $0x18] sm:$0xff]
        %v990 = vld [vmem:[%s985 + $0x20] sm:$0xff]
        %v991 = vld [vmem:[%s985 + $0x28] sm:$0xff]
        %v992 = vld [vmem:[%s985 + $0x30] sm:$0xff]
        %v993 = vld [vmem:[%s985 + $0x38] sm:$0xff]
        %v994 = vld [vmem:[%s985 + $0x40] sm:$0xff]
        %v995 = vld [vmem:[%s985 + $0x48] sm:$0xff]
        %v996 = vld [vmem:[%s985 + $0x50] sm:$0xff]
        %v997 = vld [vmem:[%s985 + $0x58] sm:$0xff]
        %v998 = vld [vmem:[%s985 + $0x60] sm:$0xff]
        %v999 = vld [vmem:[%s985 + $0x68] sm:$0xff]
        %v1000 = vld [vmem:[%s985 + $0x70] sm:$0xff]
        %v1001 = vld [vmem:[%s985 + $0x78] sm:$0xff]
        %v1002 = vld [vmem:[%s985 + $0x80] sm:$0xff]
        %v1003 = vld [vmem:[%s985 + $0x88] sm:$0xff]
        %v1004 = vld [vmem:[%s985 + $0x90] sm:$0xff]
        %v1005 = vld [vmem:[%s985 + $0x98] sm:$0xff]
        %v1006 = vld [vmem:[%s985 + $0xa0] sm:$0xff]
        %v1007 = vld [vmem:[%s985 + $0xa8] sm:$0xff]
        %v1008 = vld [vmem:[%s985 + $0xb0] sm:$0xff]
        %v1009 = vld [vmem:[%s985 + $0xb8] sm:$0xff]
        %v1010 = vld [vmem:[%s985 + $0xc0] sm:$0xff]
        %v1011 = vld [vmem:[%s985 + $0xc8] sm:$0xff]
        %v1012 = vld [vmem:[%s985 + $0xd0] sm:$0xff]
        %v1013 = vld [vmem:[%s985 + $0xd8] sm:$0xff]
        %v1014 = vld [vmem:[%s985 + $0xe0] sm:$0xff]
        %v1015 = vld [vmem:[%s985 + $0xe8] sm:$0xff]
        %v1016 = vld [vmem:[%s985 + $0xf0] sm:$0xff]
        %v1017 = vld [vmem:[%s985 + $0xf8] sm:$0xff]
        %v1018 = vld [vmem:[%s985 + $0x100] sm:$0xff]
        %v1019 = vld [vmem:[%s985 + $0x108] sm:$0xff]
        %v1020 = vld [vmem:[%s985 + $0x110] sm:$0xff]
        %v1021 = vld [vmem:[%s985 + $0x118] sm:$0xff]
        %v1022 = vld [vmem:[%s985 + $0x120] sm:$0xff]
        %v1023 = vld [vmem:[%s985 + $0x128] sm:$0xff]
        %v1024 = vld [vmem:[%s985 + $0x130] sm:$0xff]
        %v1025 = vld [vmem:[%s985 + $0x138] sm:$0xff]
        %v1026 = vld [vmem:[%s985 + $0x140] sm:$0xff]
        %v1027 = vld [vmem:[%s985 + $0x148] sm:$0xff]
        %v1028 = vld [vmem:[%s985 + $0x150] sm:$0xff]
        %v1029 = vld [vmem:[%s985 + $0x158] sm:$0xff]
        %v1030 = vld [vmem:[%s985 + $0x160] sm:$0xff]
        %v1031 = vld [vmem:[%s985 + $0x168] sm:$0xff]
        %v1032 = vld [vmem:[%s985 + $0x170] sm:$0xff]
        %v1033 = vld [vmem:[%s985 + $0x178] sm:$0xff]
        %s1034 = scalar_lea.vmem %s1, 192
        %v1035 = vld [vmem:[%s1034] sm:$0xf]
        %v1036 = vld [vmem:[%s1034 + $0x4] sm:$0xf]
        %v1037 = vld [vmem:[%s1034 + $0x8] sm:$0xf]
        %v1038 = vld [vmem:[%s1034 + $0xc] sm:$0xf]
        %v1039 = vld [vmem:[%s1034 + $0x10] sm:$0xf]
        %v1040 = vld [vmem:[%s1034 + $0x14] sm:$0xf]
        %v1041 = vld [vmem:[%s1034 + $0x18] sm:$0xf]
        %v1042 = vld [vmem:[%s1034 + $0x1c] sm:$0xf]
        %v1043 = vld [vmem:[%s1034 + $0x20] sm:$0xf]
        %v1044 = vld [vmem:[%s1034 + $0x24] sm:$0xf]
        %v1045 = vld [vmem:[%s1034 + $0x28] sm:$0xf]
        %v1046 = vld [vmem:[%s1034 + $0x2c] sm:$0xf]
        %v1047 = vld [vmem:[%s1034 + $0x30] sm:$0xf]
        %v1048 = vld [vmem:[%s1034 + $0x34] sm:$0xf]
        %v1049 = vld [vmem:[%s1034 + $0x38] sm:$0xf]
        %v1050 = vld [vmem:[%s1034 + $0x3c] sm:$0xf]
        %v1051 = vld [vmem:[%s1034 + $0x40] sm:$0xf]
        %v1052 = vld [vmem:[%s1034 + $0x44] sm:$0xf]
        %v1053 = vld [vmem:[%s1034 + $0x48] sm:$0xf]
        %v1054 = vld [vmem:[%s1034 + $0x4c] sm:$0xf]
        %v1055 = vld [vmem:[%s1034 + $0x50] sm:$0xf]
        %v1056 = vld [vmem:[%s1034 + $0x54] sm:$0xf]
        %v1057 = vld [vmem:[%s1034 + $0x58] sm:$0xf]
        %v1058 = vld [vmem:[%s1034 + $0x5c] sm:$0xf]
        %v1059 = vld [vmem:[%s1034 + $0x60] sm:$0xf]
        %v1060 = vld [vmem:[%s1034 + $0x64] sm:$0xf]
        %v1061 = vld [vmem:[%s1034 + $0x68] sm:$0xf]
        %v1062 = vld [vmem:[%s1034 + $0x6c] sm:$0xf]
        %v1063 = vld [vmem:[%s1034 + $0x70] sm:$0xf]
        %v1064 = vld [vmem:[%s1034 + $0x74] sm:$0xf]
        %v1065 = vld [vmem:[%s1034 + $0x78] sm:$0xf]
        %v1066 = vld [vmem:[%s1034 + $0x7c] sm:$0xf]
        %v1067 = vld [vmem:[%s1034 + $0x80] sm:$0xf]
        %v1068 = vld [vmem:[%s1034 + $0x84] sm:$0xf]
        %v1069 = vld [vmem:[%s1034 + $0x88] sm:$0xf]
        %v1070 = vld [vmem:[%s1034 + $0x8c] sm:$0xf]
        %v1071 = vld [vmem:[%s1034 + $0x90] sm:$0xf]
        %v1072 = vld [vmem:[%s1034 + $0x94] sm:$0xf]
        %v1073 = vld [vmem:[%s1034 + $0x98] sm:$0xf]
        %v1074 = vld [vmem:[%s1034 + $0x9c] sm:$0xf]
        %v1075 = vld [vmem:[%s1034 + $0xa0] sm:$0xf]
        %v1076 = vld [vmem:[%s1034 + $0xa4] sm:$0xf]
        %v1077 = vld [vmem:[%s1034 + $0xa8] sm:$0xf]
        %v1078 = vld [vmem:[%s1034 + $0xac] sm:$0xf]
        %v1079 = vld [vmem:[%s1034 + $0xb0] sm:$0xf]
        %v1080 = vld [vmem:[%s1034 + $0xb4] sm:$0xf]
        %v1081 = vld [vmem:[%s1034 + $0xb8] sm:$0xf]
        %v1082 = vld [vmem:[%s1034 + $0xbc] sm:$0xf]
        %v1131 = vunpack.c.l.b16 %v1035
        %v1132 = vunpack.c.l.b16 %v1036
        %v1133 = vunpack.c.l.b16 %v1037
        %v1134 = vunpack.c.l.b16 %v1038
        %v1135 = vunpack.c.l.b16 %v1039
        %v1136 = vunpack.c.l.b16 %v1040
        %v1137 = vunpack.c.l.b16 %v1041
        %v1138 = vunpack.c.l.b16 %v1042
        %v1139 = vunpack.c.l.b16 %v1043
        %v1140 = vunpack.c.l.b16 %v1044
        %v1141 = vunpack.c.l.b16 %v1045
        %v1142 = vunpack.c.l.b16 %v1046
        %v1143 = vunpack.c.l.b16 %v1047
        %v1144 = vunpack.c.l.b16 %v1048
        %v1145 = vunpack.c.l.b16 %v1049
        %v1146 = vunpack.c.l.b16 %v1050
        %v1147 = vunpack.c.l.b16 %v1051
        %v1148 = vunpack.c.l.b16 %v1052
        %v1149 = vunpack.c.l.b16 %v1053
        %v1150 = vunpack.c.l.b16 %v1054
        %v1151 = vunpack.c.l.b16 %v1055
        %v1152 = vunpack.c.l.b16 %v1056
        %v1153 = vunpack.c.l.b16 %v1057
        %v1154 = vunpack.c.l.b16 %v1058
        %v1155 = vunpack.c.l.b16 %v1059
        %v1156 = vunpack.c.l.b16 %v1060
        %v1157 = vunpack.c.l.b16 %v1061
        %v1158 = vunpack.c.l.b16 %v1062
        %v1159 = vunpack.c.l.b16 %v1063
        %v1160 = vunpack.c.l.b16 %v1064
        %v1161 = vunpack.c.l.b16 %v1065
        %v1162 = vunpack.c.l.b16 %v1066
        %v1163 = vunpack.c.l.b16 %v1067
        %v1164 = vunpack.c.l.b16 %v1068
        %v1165 = vunpack.c.l.b16 %v1069
        %v1166 = vunpack.c.l.b16 %v1070
        %v1167 = vunpack.c.l.b16 %v1071
        %v1168 = vunpack.c.l.b16 %v1072
        %v1169 = vunpack.c.l.b16 %v1073
        %v1170 = vunpack.c.l.b16 %v1074
        %v1171 = vunpack.c.l.b16 %v1075
        %v1172 = vunpack.c.l.b16 %v1076
        %v1173 = vunpack.c.l.b16 %v1077
        %v1174 = vunpack.c.l.b16 %v1078
        %v1175 = vunpack.c.l.b16 %v1079
        %v1176 = vunpack.c.l.b16 %v1080
        %v1177 = vunpack.c.l.b16 %v1081
        %v1178 = vunpack.c.l.b16 %v1082
        %v1179 = vpack.c.b16 %v1132, %v1131
        %v1180 = vpack.c.b16 %v1134, %v1133
        %v1181 = vpack.c.b16 %v1136, %v1135
        %v1182 = vpack.c.b16 %v1138, %v1137
        %v1183 = vpack.c.b16 %v1140, %v1139
        %v1184 = vpack.c.b16 %v1142, %v1141
        %v1185 = vpack.c.b16 %v1144, %v1143
        %v1186 = vpack.c.b16 %v1146, %v1145
        %v1187 = vpack.c.b16 %v1148, %v1147
        %v1188 = vpack.c.b16 %v1150, %v1149
        %v1189 = vpack.c.b16 %v1152, %v1151
        %v1190 = vpack.c.b16 %v1154, %v1153
        %v1191 = vpack.c.b16 %v1156, %v1155
        %v1192 = vpack.c.b16 %v1158, %v1157
        %v1193 = vpack.c.b16 %v1160, %v1159
        %v1194 = vpack.c.b16 %v1162, %v1161
        %v1195 = vpack.c.b16 %v1164, %v1163
        %v1196 = vpack.c.b16 %v1166, %v1165
        %v1197 = vpack.c.b16 %v1168, %v1167
        %v1198 = vpack.c.b16 %v1170, %v1169
        %v1199 = vpack.c.b16 %v1172, %v1171
        %v1200 = vpack.c.b16 %v1174, %v1173
        %v1201 = vpack.c.b16 %v1176, %v1175
        %v1202 = vpack.c.b16 %v1178, %v1177
        %1227 = vmatprep.subr.bf16.mxu0 0
        %1228 = vmatpush1.bf16.msra.mxu0 %v1179
        %1229 = vmatprep.subr.bf16.mxu0 0
        %1230 = vmatpush1.bf16.msra.mxu0 %v1180
        %1231 = vmatprep.subr.bf16.mxu0 0
        %1232 = vmatpush1.bf16.msra.mxu0 %v1181
        %1233 = vmatprep.subr.bf16.mxu0 0
        %1234 = vmatpush1.bf16.msra.mxu0 %v1182
        %1235 = vmatprep.subr.bf16.mxu0 0
        %1236 = vmatpush1.bf16.msra.mxu0 %v1183
        %1237 = vmatprep.subr.bf16.mxu0 0
        %1238 = vmatpush1.bf16.msra.mxu0 %v1184
        %1239 = vmatprep.subr.bf16.mxu0 0
        %1240 = vmatpush1.bf16.msra.mxu0 %v1185
        %1241 = vmatprep.subr.bf16.mxu0 0
        %1242 = vmatpush1.bf16.msra.mxu0 %v1186
        %1243 = vmatprep.subr.bf16.mxu0 0
        %1244 = vmatpush1.bf16.msra.mxu0 %v1187
        %1245 = vmatprep.subr.bf16.mxu0 0
        %1246 = vmatpush1.bf16.msra.mxu0 %v1188
        %1247 = vmatprep.subr.bf16.mxu0 0
        %1248 = vmatpush1.bf16.msra.mxu0 %v1189
        %1249 = vmatprep.subr.bf16.mxu0 0
        %1250 = vmatpush1.bf16.msra.mxu0 %v1190
        %1251 = vmatprep.subr.bf16.mxu0 0
        %1252 = vmatpush1.bf16.msra.mxu0 %v1191
        %1253 = vmatprep.subr.bf16.mxu0 0
        %1254 = vmatpush1.bf16.msra.mxu0 %v1192
        %1255 = vmatprep.subr.bf16.mxu0 0
        %1256 = vmatpush1.bf16.msra.mxu0 %v1193
        %1257 = vmatprep.subr.bf16.mxu0 0
        %1258 = vmatpush1.bf16.msra.mxu0 %v1194
        %1259 = vmatprep.mubr.bf16.mxu0 %v987
        %1260 = vmatmul.mubr.bf16.gmra.mrb[0].mxu0 %v986
        %v1261 = vpop.f32.mrb[0].mxu0
        %v1262 = vadd.f32 0.0, %v1261
        %v1263 = vpop.f32.mrb[0].mxu0
        %v1264 = vpop.f32.mrb[0].mxu0
        %v1265 = vadd.f32 0.0, %v1264
        %v1266 = vpop.f32.mrb[0].mxu0
        %1267 = vmatprep.mubr.bf16.mxu0 %v990
        %1268 = vmatmul.mubr.bf16.gmra.mrb[0].mxu0 %v989
        %v1269 = vpop.f32.mrb[0].mxu0
        %v1270 = vadd.f32 0.0, %v1269
        %v1271 = vpop.f32.mrb[0].mxu0
        %v1272 = vpop.f32.mrb[0].mxu0
        %v1273 = vadd.f32 0.0, %v1272
        %v1274 = vpop.f32.mrb[0].mxu0
        %1275 = vmatprep.mubr.bf16.mxu0 %v993
        %1276 = vmatmul.mubr.bf16.gmra.mrb[0].mxu0 %v992
        %v1277 = vpop.f32.mrb[0].mxu0
        %v1278 = vadd.f32 0.0, %v1277
        %v1279 = vpop.f32.mrb[0].mxu0
        %v1280 = vpop.f32.mrb[0].mxu0
        %v1281 = vadd.f32 0.0, %v1280
        %v1282 = vpop.f32.mrb[0].mxu0
        %1283 = vmatprep.mubr.bf16.mxu0 %v996
        %1284 = vmatmul.mubr.bf16.gmra.mrb[0].mxu0 %v995
        %v1285 = vpop.f32.mrb[0].mxu0
        %v1286 = vadd.f32 0.0, %v1285
        %v1287 = vpop.f32.mrb[0].mxu0
        %v1288 = vpop.f32.mrb[0].mxu0
        %v1289 = vadd.f32 0.0, %v1288
        %v1290 = vpop.f32.mrb[0].mxu0
        %1291 = vmatprep.mubr.bf16.mxu0 %v999
        %1292 = vmatmul.mubr.bf16.gmra.mrb[0].mxu0 %v998
        %v1293 = vpop.f32.mrb[0].mxu0
        %v1294 = vadd.f32 0.0, %v1293
        %v1295 = vpop.f32.mrb[0].mxu0
        %v1296 = vpop.f32.mrb[0].mxu0
        %v1297 = vadd.f32 0.0, %v1296
        %v1298 = vpop.f32.mrb[0].mxu0
        %1299 = vmatprep.mubr.bf16.mxu0 %v1002
        %1300 = vmatmul.mubr.bf16.gmra.mrb[0].mxu0 %v1001
        %v1301 = vpop.f32.mrb[0].mxu0
        %v1302 = vadd.f32 0.0, %v1301
        %v1303 = vpop.f32.mrb[0].mxu0
        %v1304 = vpop.f32.mrb[0].mxu0
        %v1305 = vadd.f32 0.0, %v1304
        %v1306 = vpop.f32.mrb[0].mxu0
        %1307 = vmatprep.mubr.bf16.mxu0 %v1005
        %1308 = vmatmul.mubr.bf16.gmra.mrb[0].mxu0 %v1004
        %v1309 = vpop.f32.mrb[0].mxu0
        %v1310 = vadd.f32 0.0, %v1309
        %v1311 = vpop.f32.mrb[0].mxu0
        %v1312 = vpop.f32.mrb[0].mxu0
        %v1313 = vadd.f32 0.0, %v1312
        %v1314 = vpop.f32.mrb[0].mxu0
        %1315 = vmatprep.mubr.bf16.mxu0 %v1008
        %1316 = vmatmul.mubr.bf16.gmra.mrb[0].mxu0 %v1007
        %v1317 = vpop.f32.mrb[0].mxu0
        %v1318 = vadd.f32 0.0, %v1317
        %v1319 = vpop.f32.mrb[0].mxu0
        %v1320 = vpop.f32.mrb[0].mxu0
        %v1321 = vadd.f32 0.0, %v1320
        %v1322 = vpop.f32.mrb[0].mxu0
        %1323 = vmatprep.mubr.bf16.mxu0 %v1011
        %1324 = vmatmul.mubr.bf16.gmra.mrb[0].mxu0 %v1010
        %v1325 = vpop.f32.mrb[0].mxu0
        %v1326 = vadd.f32 0.0, %v1325
        %v1327 = vpop.f32.mrb[0].mxu0
        %v1328 = vpop.f32.mrb[0].mxu0
        %v1329 = vadd.f32 0.0, %v1328
        %v1330 = vpop.f32.mrb[0].mxu0
        %1331 = vmatprep.mubr.bf16.mxu0 %v1014
        %1332 = vmatmul.mubr.bf16.gmra.mrb[0].mxu0 %v1013
        %v1333 = vpop.f32.mrb[0].mxu0
        %v1334 = vadd.f32 0.0, %v1333
        %v1335 = vpop.f32.mrb[0].mxu0
        %v1336 = vpop.f32.mrb[0].mxu0
        %v1337 = vadd.f32 0.0, %v1336
        %v1338 = vpop.f32.mrb[0].mxu0
        %1339 = vmatprep.mubr.bf16.mxu0 %v1017
        %1340 = vmatmul.mubr.bf16.gmra.mrb[0].mxu0 %v1016
        %v1341 = vpop.f32.mrb[0].mxu0
        %v1342 = vadd.f32 0.0, %v1341
        %v1343 = vpop.f32.mrb[0].mxu0
        %v1344 = vpop.f32.mrb[0].mxu0
        %v1345 = vadd.f32 0.0, %v1344
        %v1346 = vpop.f32.mrb[0].mxu0
        %1347 = vmatprep.mubr.bf16.mxu0 %v1020
        %1348 = vmatmul.mubr.bf16.gmra.mrb[0].mxu0 %v1019
        %v1349 = vpop.f32.mrb[0].mxu0
        %v1350 = vadd.f32 0.0, %v1349
        %v1351 = vpop.f32.mrb[0].mxu0
        %v1352 = vpop.f32.mrb[0].mxu0
        %v1353 = vadd.f32 0.0, %v1352
        %v1354 = vpop.f32.mrb[0].mxu0
        %1355 = vmatprep.mubr.bf16.mxu0 %v1023
        %1356 = vmatmul.mubr.bf16.gmra.mrb[0].mxu0 %v1022
        %v1357 = vpop.f32.mrb[0].mxu0
        %v1358 = vadd.f32 0.0, %v1357
        %v1359 = vpop.f32.mrb[0].mxu0
        %v1360 = vpop.f32.mrb[0].mxu0
        %v1361 = vadd.f32 0.0, %v1360
        %v1362 = vpop.f32.mrb[0].mxu0
        %1363 = vmatprep.mubr.bf16.mxu0 %v1026
        %1364 = vmatmul.mubr.bf16.gmra.mrb[0].mxu0 %v1025
        %v1365 = vpop.f32.mrb[0].mxu0
        %v1366 = vadd.f32 0.0, %v1365
        %v1367 = vpop.f32.mrb[0].mxu0
        %v1368 = vpop.f32.mrb[0].mxu0
        %v1369 = vadd.f32 0.0, %v1368
        %v1370 = vpop.f32.mrb[0].mxu0
        %1371 = vmatprep.mubr.bf16.mxu0 %v1029
        %1372 = vmatmul.mubr.bf16.gmra.mrb[0].mxu0 %v1028
        %v1373 = vpop.f32.mrb[0].mxu0
        %v1374 = vadd.f32 0.0, %v1373
        %v1375 = vpop.f32.mrb[0].mxu0
        %v1376 = vpop.f32.mrb[0].mxu0
        %v1377 = vadd.f32 0.0, %v1376
        %v1378 = vpop.f32.mrb[0].mxu0
        %1379 = vmatprep.mubr.bf16.mxu0 %v1032
        %1380 = vmatmul.mubr.bf16.gmra.mrb[0].mxu0 %v1031
        %v1381 = vpop.f32.mrb[0].mxu0
        %v1382 = vadd.f32 0.0, %v1381
        %v1383 = vpop.f32.mrb[0].mxu0
        %v1384 = vpop.f32.mrb[0].mxu0
        %v1385 = vadd.f32 0.0, %v1384
        %v1386 = vpop.f32.mrb[0].mxu0
        %1387 = vdwg.mxu0
        %1388 = vmatprep.subr.bf16.mxu0 0
        %1389 = vmatpush1.bf16.msra.mxu0 %v1195
        %1390 = vmatprep.subr.bf16.mxu0 0
        %1391 = vmatpush1.bf16.msra.mxu0 %v1196
        %1392 = vmatprep.subr.bf16.mxu0 0
        %1393 = vmatpush1.bf16.msra.mxu0 %v1197
        %1394 = vmatprep.subr.bf16.mxu0 0
        %1395 = vmatpush1.bf16.msra.mxu0 %v1198
        %1396 = vmatprep.subr.bf16.mxu0 0
        %1397 = vmatpush1.bf16.msra.mxu0 %v1199
        %1398 = vmatprep.subr.bf16.mxu0 0
        %1399 = vmatpush1.bf16.msra.mxu0 %v1200
        %1400 = vmatprep.subr.bf16.mxu0 0
        %1401 = vmatpush1.bf16.msra.mxu0 %v1201
        %1402 = vmatprep.subr.bf16.mxu0 0
        %1403 = vmatpush1.bf16.msra.mxu0 %v1202
        %1404 = vmatprep.subr.bf16.mxu0 0
        %1405 = vmatpush1.bf16.msra.mxu0 0
        %1406 = vmatprep.subr.bf16.mxu0 0
        %1407 = vmatpush1.bf16.msra.mxu0 0
        %1408 = vmatprep.subr.bf16.mxu0 0
        %1409 = vmatpush1.bf16.msra.mxu0 0
        %1410 = vmatprep.subr.bf16.mxu0 0
        %1411 = vmatpush1.bf16.msra.mxu0 0
        %1412 = vmatprep.subr.bf16.mxu0 0
        %1413 = vmatpush1.bf16.msra.mxu0 0
        %1414 = vmatprep.subr.bf16.mxu0 0
        %1415 = vmatpush1.bf16.msra.mxu0 0
        %1416 = vmatprep.subr.bf16.mxu0 0
        %1417 = vmatpush1.bf16.msra.mxu0 0
        %1418 = vmatprep.subr.bf16.mxu0 0
        %1419 = vmatpush1.bf16.msra.mxu0 0
        %1420 = vmatprep.mubr.bf16.mxu0 0
        %1421 = vmatmul.mubr.bf16.gmra.mrb[0].mxu0 %v988
        %v1422 = vpop.f32.mrb[0].mxu0
        %v1423 = vadd.f32 %v1262, %v1422
        %v1424 = vpop.f32.mrb[0].mxu0
        %v1425 = vpop.f32.mrb[0].mxu0
        %v1426 = vadd.f32 %v1265, %v1425
        %v1427 = vpop.f32.mrb[0].mxu0
        %1428 = vmatprep.mubr.bf16.mxu0 0
        %1429 = vmatmul.mubr.bf16.gmra.mrb[0].mxu0 %v991
        %v1430 = vpop.f32.mrb[0].mxu0
        %v1431 = vadd.f32 %v1270, %v1430
        %v1432 = vpop.f32.mrb[0].mxu0
        %v1433 = vpop.f32.mrb[0].mxu0
        %v1434 = vadd.f32 %v1273, %v1433
        %v1435 = vpop.f32.mrb[0].mxu0
        %1436 = vmatprep.mubr.bf16.mxu0 0
        %1437 = vmatmul.mubr.bf16.gmra.mrb[0].mxu0 %v994
        %v1438 = vpop.f32.mrb[0].mxu0
        %v1439 = vadd.f32 %v1278, %v1438
        %v1440 = vpop.f32.mrb[0].mxu0
        %v1441 = vpop.f32.mrb[0].mxu0
        %v1442 = vadd.f32 %v1281, %v1441
        %v1443 = vpop.f32.mrb[0].mxu0
        %1444 = vmatprep.mubr.bf16.mxu0 0
        %1445 = vmatmul.mubr.bf16.gmra.mrb[0].mxu0 %v997
        %v1446 = vpop.f32.mrb[0].mxu0
        %v1447 = vadd.f32 %v1286, %v1446
        %v1448 = vpop.f32.mrb[0].mxu0
        %v1449 = vpop.f32.mrb[0].mxu0
        %v1450 = vadd.f32 %v1289, %v1449
        %v1451 = vpop.f32.mrb[0].mxu0
        %1452 = vmatprep.mubr.bf16.mxu0 0
        %1453 = vmatmul.mubr.bf16.gmra.mrb[0].mxu0 %v1000
        %v1454 = vpop.f32.mrb[0].mxu0
        %v1455 = vadd.f32 %v1294, %v1454
        %v1456 = vpop.f32.mrb[0].mxu0
        %v1457 = vpop.f32.mrb[0].mxu0
        %v1458 = vadd.f32 %v1297, %v1457
        %v1459 = vpop.f32.mrb[0].mxu0
        %1460 = vmatprep.mubr.bf16.mxu0 0
        %1461 = vmatmul.mubr.bf16.gmra.mrb[0].mxu0 %v1003
        %v1462 = vpop.f32.mrb[0].mxu0
        %v1463 = vadd.f32 %v1302, %v1462
        %v1464 = vpop.f32.mrb[0].mxu0
        %v1465 = vpop.f32.mrb[0].mxu0
        %v1466 = vadd.f32 %v1305, %v1465
        %v1467 = vpop.f32.mrb[0].mxu0
        %1468 = vmatprep.mubr.bf16.mxu0 0
        %1469 = vmatmul.mubr.bf16.gmra.mrb[0].mxu0 %v1006
        %v1470 = vpop.f32.mrb[0].mxu0
        %v1471 = vadd.f32 %v1310, %v1470
        %v1472 = vpop.f32.mrb[0].mxu0
        %v1473 = vpop.f32.mrb[0].mxu0
        %v1474 = vadd.f32 %v1313, %v1473
        %v1475 = vpop.f32.mrb[0].mxu0
        %1476 = vmatprep.mubr.bf16.mxu0 0
        %1477 = vmatmul.mubr.bf16.gmra.mrb[0].mxu0 %v1009
        %v1478 = vpop.f32.mrb[0].mxu0
        %v1479 = vadd.f32 %v1318, %v1478
        %v1480 = vpop.f32.mrb[0].mxu0
        %v1481 = vpop.f32.mrb[0].mxu0
        %v1482 = vadd.f32 %v1321, %v1481
        %v1483 = vpop.f32.mrb[0].mxu0
        %1484 = vmatprep.mubr.bf16.mxu0 0
        %1485 = vmatmul.mubr.bf16.gmra.mrb[0].mxu0 %v1012
        %v1486 = vpop.f32.mrb[0].mxu0
        %v1487 = vadd.f32 %v1326, %v1486
        %v1488 = vpop.f32.mrb[0].mxu0
        %v1489 = vpop.f32.mrb[0].mxu0
        %v1490 = vadd.f32 %v1329, %v1489
        %v1491 = vpop.f32.mrb[0].mxu0
        %1492 = vmatprep.mubr.bf16.mxu0 0
        %1493 = vmatmul.mubr.bf16.gmra.mrb[0].mxu0 %v1015
        %v1494 = vpop.f32.mrb[0].mxu0
        %v1495 = vadd.f32 %v1334, %v1494
        %v1496 = vpop.f32.mrb[0].mxu0
        %v1497 = vpop.f32.mrb[0].mxu0
        %v1498 = vadd.f32 %v1337, %v1497
        %v1499 = vpop.f32.mrb[0].mxu0
        %1500 = vmatprep.mubr.bf16.mxu0 0
        %1501 = vmatmul.mubr.bf16.gmra.mrb[0].mxu0 %v1018
        %v1502 = vpop.f32.mrb[0].mxu0
        %v1503 = vadd.f32 %v1342, %v1502
        %v1504 = vpop.f32.mrb[0].mxu0
        %v1505 = vpop.f32.mrb[0].mxu0
        %v1506 = vadd.f32 %v1345, %v1505
        %v1507 = vpop.f32.mrb[0].mxu0
        %1508 = vmatprep.mubr.bf16.mxu0 0
        %1509 = vmatmul.mubr.bf16.gmra.mrb[0].mxu0 %v1021
        %v1510 = vpop.f32.mrb[0].mxu0
        %v1511 = vadd.f32 %v1350, %v1510
        %v1512 = vpop.f32.mrb[0].mxu0
        %v1513 = vpop.f32.mrb[0].mxu0
        %v1514 = vadd.f32 %v1353, %v1513
        %v1515 = vpop.f32.mrb[0].mxu0
        %1516 = vmatprep.mubr.bf16.mxu0 0
        %1517 = vmatmul.mubr.bf16.gmra.mrb[0].mxu0 %v1024
        %v1518 = vpop.f32.mrb[0].mxu0
        %v1519 = vadd.f32 %v1358, %v1518
        %v1520 = vpop.f32.mrb[0].mxu0
        %v1521 = vpop.f32.mrb[0].mxu0
        %v1522 = vadd.f32 %v1361, %v1521
        %v1523 = vpop.f32.mrb[0].mxu0
        %1524 = vmatprep.mubr.bf16.mxu0 0
        %1525 = vmatmul.mubr.bf16.gmra.mrb[0].mxu0 %v1027
        %v1526 = vpop.f32.mrb[0].mxu0
        %v1527 = vadd.f32 %v1366, %v1526
        %v1528 = vpop.f32.mrb[0].mxu0
        %v1529 = vpop.f32.mrb[0].mxu0
        %v1530 = vadd.f32 %v1369, %v1529
        %v1531 = vpop.f32.mrb[0].mxu0
        %1532 = vmatprep.mubr.bf16.mxu0 0
        %1533 = vmatmul.mubr.bf16.gmra.mrb[0].mxu0 %v1030
        %v1534 = vpop.f32.mrb[0].mxu0
        %v1535 = vadd.f32 %v1374, %v1534
        %v1536 = vpop.f32.mrb[0].mxu0
        %v1537 = vpop.f32.mrb[0].mxu0
        %v1538 = vadd.f32 %v1377, %v1537
        %v1539 = vpop.f32.mrb[0].mxu0
        %1540 = vmatprep.mubr.bf16.mxu0 0
        %1541 = vmatmul.mubr.bf16.gmra.mrb[0].mxu0 %v1033
        %v1542 = vpop.f32.mrb[0].mxu0
        %v1543 = vadd.f32 %v1382, %v1542
        %v1544 = vpop.f32.mrb[0].mxu0
        %v1545 = vpop.f32.mrb[0].mxu0
        %v1546 = vadd.f32 %v1385, %v1545
        %v1547 = vpop.f32.mrb[0].mxu0
        %1548 = vdwg.mxu0
        %v1597 = vunpack.c.l.b16 %v937
        %v1598 = vunpack.c.l.b16 %v938
        %v1599 = vunpack.c.l.b16 %v939
        %v1600 = vunpack.c.l.b16 %v940
        %v1601 = vunpack.c.l.b16 %v941
        %v1602 = vunpack.c.l.b16 %v942
        %v1603 = vunpack.c.l.b16 %v943
        %v1604 = vunpack.c.l.b16 %v944
        %v1605 = vunpack.c.l.b16 %v945
        %v1606 = vunpack.c.l.b16 %v946
        %v1607 = vunpack.c.l.b16 %v947
        %v1608 = vunpack.c.l.b16 %v948
        %v1609 = vunpack.c.l.b16 %v949
        %v1610 = vunpack.c.l.b16 %v950
        %v1611 = vunpack.c.l.b16 %v951
        %v1612 = vunpack.c.l.b16 %v952
        %v1613 = vunpack.c.l.b16 %v953
        %v1614 = vunpack.c.l.b16 %v954
        %v1615 = vunpack.c.l.b16 %v955
        %v1616 = vunpack.c.l.b16 %v956
        %v1617 = vunpack.c.l.b16 %v957
        %v1618 = vunpack.c.l.b16 %v958
        %v1619 = vunpack.c.l.b16 %v959
        %v1620 = vunpack.c.l.b16 %v960
        %v1621 = vunpack.c.l.b16 %v961
        %v1622 = vunpack.c.l.b16 %v962
        %v1623 = vunpack.c.l.b16 %v963
        %v1624 = vunpack.c.l.b16 %v964
        %v1625 = vunpack.c.l.b16 %v965
        %v1626 = vunpack.c.l.b16 %v966
        %v1627 = vunpack.c.l.b16 %v967
        %v1628 = vunpack.c.l.b16 %v968
        %v1629 = vunpack.c.l.b16 %v969
        %v1630 = vunpack.c.l.b16 %v970
        %v1631 = vunpack.c.l.b16 %v971
        %v1632 = vunpack.c.l.b16 %v972
        %v1633 = vunpack.c.l.b16 %v973
        %v1634 = vunpack.c.l.b16 %v974
        %v1635 = vunpack.c.l.b16 %v975
        %v1636 = vunpack.c.l.b16 %v976
        %v1637 = vunpack.c.l.b16 %v977
        %v1638 = vunpack.c.l.b16 %v978
        %v1639 = vunpack.c.l.b16 %v979
        %v1640 = vunpack.c.l.b16 %v980
        %v1641 = vunpack.c.l.b16 %v981
        %v1642 = vunpack.c.l.b16 %v982
        %v1643 = vunpack.c.l.b16 %v983
        %v1644 = vunpack.c.l.b16 %v984
        %v1645 = vpack.c.b16 %v1598, %v1597
        %v1646 = vpack.c.b16 %v1600, %v1599
        %v1647 = vpack.c.b16 %v1602, %v1601
        %v1648 = vpack.c.b16 %v1604, %v1603
        %v1649 = vpack.c.b16 %v1606, %v1605
        %v1650 = vpack.c.b16 %v1608, %v1607
        %v1651 = vpack.c.b16 %v1610, %v1609
        %v1652 = vpack.c.b16 %v1612, %v1611
        %v1653 = vpack.c.b16 %v1614, %v1613
        %v1654 = vpack.c.b16 %v1616, %v1615
        %v1655 = vpack.c.b16 %v1618, %v1617
        %v1656 = vpack.c.b16 %v1620, %v1619
        %v1657 = vpack.c.b16 %v1622, %v1621
        %v1658 = vpack.c.b16 %v1624, %v1623
        %v1659 = vpack.c.b16 %v1626, %v1625
        %v1660 = vpack.c.b16 %v1628, %v1627
        %v1661 = vpack.c.b16 %v1630, %v1629
        %v1662 = vpack.c.b16 %v1632, %v1631
        %v1663 = vpack.c.b16 %v1634, %v1633
        %v1664 = vpack.c.b16 %v1636, %v1635
        %v1665 = vpack.c.b16 %v1638, %v1637
        %v1666 = vpack.c.b16 %v1640, %v1639
        %v1667 = vpack.c.b16 %v1642, %v1641
        %v1668 = vpack.c.b16 %v1644, %v1643
        %1693 = vmatprep.subr.bf16.mxu0 0
        %1694 = vmatpush1.bf16.msra.mxu0 %v1645
        %1695 = vmatprep.subr.bf16.mxu0 0
        %1696 = vmatpush1.bf16.msra.mxu0 %v1646
        %1697 = vmatprep.subr.bf16.mxu0 0
        %1698 = vmatpush1.bf16.msra.mxu0 %v1647
        %1699 = vmatprep.subr.bf16.mxu0 0
        %1700 = vmatpush1.bf16.msra.mxu0 %v1648
        %1701 = vmatprep.subr.bf16.mxu0 0
        %1702 = vmatpush1.bf16.msra.mxu0 %v1649
        %1703 = vmatprep.subr.bf16.mxu0 0
        %1704 = vmatpush1.bf16.msra.mxu0 %v1650
        %1705 = vmatprep.subr.bf16.mxu0 0
        %1706 = vmatpush1.bf16.msra.mxu0 %v1651
        %1707 = vmatprep.subr.bf16.mxu0 0
        %1708 = vmatpush1.bf16.msra.mxu0 %v1652
        %1709 = vmatprep.subr.bf16.mxu0 0
        %1710 = vmatpush1.bf16.msra.mxu0 %v1653
        %1711 = vmatprep.subr.bf16.mxu0 0
        %1712 = vmatpush1.bf16.msra.mxu0 %v1654
        %1713 = vmatprep.subr.bf16.mxu0 0
        %1714 = vmatpush1.bf16.msra.mxu0 %v1655
        %1715 = vmatprep.subr.bf16.mxu0 0
        %1716 = vmatpush1.bf16.msra.mxu0 %v1656
        %1717 = vmatprep.subr.bf16.mxu0 0
        %1718 = vmatpush1.bf16.msra.mxu0 %v1657
        %1719 = vmatprep.subr.bf16.mxu0 0
        %1720 = vmatpush1.bf16.msra.mxu0 %v1658
        %1721 = vmatprep.subr.bf16.mxu0 0
        %1722 = vmatpush1.bf16.msra.mxu0 %v1659
        %1723 = vmatprep.subr.bf16.mxu0 0
        %1724 = vmatpush1.bf16.msra.mxu0 %v1660
        %1725 = vmatprep.mubr.bf16.mxu0 %v890
        %1726 = vmatmul.mubr.bf16.gmra.mrb[0].mxu0 %v889
        %v1727 = vpop.f32.mrb[0].mxu0
        %v1728 = vadd.f32 %v1423, %v1727
        %v1729 = vpop.f32.mrb[0].mxu0
        %v1730 = vpop.f32.mrb[0].mxu0
        %v1731 = vadd.f32 %v1426, %v1730
        %v1732 = vpop.f32.mrb[0].mxu0
        %1733 = vmatprep.mubr.bf16.mxu0 %v893
        %1734 = vmatmul.mubr.bf16.gmra.mrb[0].mxu0 %v892
        %v1735 = vpop.f32.mrb[0].mxu0
        %v1736 = vadd.f32 %v1431, %v1735
        %v1737 = vpop.f32.mrb[0].mxu0
        %v1738 = vpop.f32.mrb[0].mxu0
        %v1739 = vadd.f32 %v1434, %v1738
        %v1740 = vpop.f32.mrb[0].mxu0
        %1741 = vmatprep.mubr.bf16.mxu0 %v896
        %1742 = vmatmul.mubr.bf16.gmra.mrb[0].mxu0 %v895
        %v1743 = vpop.f32.mrb[0].mxu0
        %v1744 = vadd.f32 %v1439, %v1743
        %v1745 = vpop.f32.mrb[0].mxu0
        %v1746 = vpop.f32.mrb[0].mxu0
        %v1747 = vadd.f32 %v1442, %v1746
        %v1748 = vpop.f32.mrb[0].mxu0
        %1749 = vmatprep.mubr.bf16.mxu0 %v899
        %1750 = vmatmul.mubr.bf16.gmra.mrb[0].mxu0 %v898
        %v1751 = vpop.f32.mrb[0].mxu0
        %v1752 = vadd.f32 %v1447, %v1751
        %v1753 = vpop.f32.mrb[0].mxu0
        %v1754 = vpop.f32.mrb[0].mxu0
        %v1755 = vadd.f32 %v1450, %v1754
        %v1756 = vpop.f32.mrb[0].mxu0
        %1757 = vmatprep.mubr.bf16.mxu0 %v902
        %1758 = vmatmul.mubr.bf16.gmra.mrb[0].mxu0 %v901
        %v1759 = vpop.f32.mrb[0].mxu0
        %v1760 = vadd.f32 %v1455, %v1759
        %v1761 = vpop.f32.mrb[0].mxu0
        %v1762 = vpop.f32.mrb[0].mxu0
        %v1763 = vadd.f32 %v1458, %v1762
        %v1764 = vpop.f32.mrb[0].mxu0
        %1765 = vmatprep.mubr.bf16.mxu0 %v905
        %1766 = vmatmul.mubr.bf16.gmra.mrb[0].mxu0 %v904
        %v1767 = vpop.f32.mrb[0].mxu0
        %v1768 = vadd.f32 %v1463, %v1767
        %v1769 = vpop.f32.mrb[0].mxu0
        %v1770 = vpop.f32.mrb[0].mxu0
        %v1771 = vadd.f32 %v1466, %v1770
        %v1772 = vpop.f32.mrb[0].mxu0
        %1773 = vmatprep.mubr.bf16.mxu0 %v908
        %1774 = vmatmul.mubr.bf16.gmra.mrb[0].mxu0 %v907
        %v1775 = vpop.f32.mrb[0].mxu0
        %v1776 = vadd.f32 %v1471, %v1775
        %v1777 = vpop.f32.mrb[0].mxu0
        %v1778 = vpop.f32.mrb[0].mxu0
        %v1779 = vadd.f32 %v1474, %v1778
        %v1780 = vpop.f32.mrb[0].mxu0
        %1781 = vmatprep.mubr.bf16.mxu0 %v911
        %1782 = vmatmul.mubr.bf16.gmra.mrb[0].mxu0 %v910
        %v1783 = vpop.f32.mrb[0].mxu0
        %v1784 = vadd.f32 %v1479, %v1783
        %v1785 = vpop.f32.mrb[0].mxu0
        %v1786 = vpop.f32.mrb[0].mxu0
        %v1787 = vadd.f32 %v1482, %v1786
        %v1788 = vpop.f32.mrb[0].mxu0
        %1789 = vmatprep.mubr.bf16.mxu0 %v914
        %1790 = vmatmul.mubr.bf16.gmra.mrb[0].mxu0 %v913
        %v1791 = vpop.f32.mrb[0].mxu0
        %v1792 = vadd.f32 %v1487, %v1791
        %v1793 = vpop.f32.mrb[0].mxu0
        %v1794 = vpop.f32.mrb[0].mxu0
        %v1795 = vadd.f32 %v1490, %v1794
        %v1796 = vpop.f32.mrb[0].mxu0
        %1797 = vmatprep.mubr.bf16.mxu0 %v917
        %1798 = vmatmul.mubr.bf16.gmra.mrb[0].mxu0 %v916
        %v1799 = vpop.f32.mrb[0].mxu0
        %v1800 = vadd.f32 %v1495, %v1799
        %v1801 = vpop.f32.mrb[0].mxu0
        %v1802 = vpop.f32.mrb[0].mxu0
        %v1803 = vadd.f32 %v1498, %v1802
        %v1804 = vpop.f32.mrb[0].mxu0
        %1805 = vmatprep.mubr.bf16.mxu0 %v920
        %1806 = vmatmul.mubr.bf16.gmra.mrb[0].mxu0 %v919
        %v1807 = vpop.f32.mrb[0].mxu0
        %v1808 = vadd.f32 %v1503, %v1807
        %v1809 = vpop.f32.mrb[0].mxu0
        %v1810 = vpop.f32.mrb[0].mxu0
        %v1811 = vadd.f32 %v1506, %v1810
        %v1812 = vpop.f32.mrb[0].mxu0
        %1813 = vmatprep.mubr.bf16.mxu0 %v923
        %1814 = vmatmul.mubr.bf16.gmra.mrb[0].mxu0 %v922
        %v1815 = vpop.f32.mrb[0].mxu0
        %v1816 = vadd.f32 %v1511, %v1815
        %v1817 = vpop.f32.mrb[0].mxu0
        %v1818 = vpop.f32.mrb[0].mxu0
        %v1819 = vadd.f32 %v1514, %v1818
        %v1820 = vpop.f32.mrb[0].mxu0
        %1821 = vmatprep.mubr.bf16.mxu0 %v926
        %1822 = vmatmul.mubr.bf16.gmra.mrb[0].mxu0 %v925
        %v1823 = vpop.f32.mrb[0].mxu0
        %v1824 = vadd.f32 %v1519, %v1823
        %v1825 = vpop.f32.mrb[0].mxu0
        %v1826 = vpop.f32.mrb[0].mxu0
        %v1827 = vadd.f32 %v1522, %v1826
        %v1828 = vpop.f32.mrb[0].mxu0
        %1829 = vmatprep.mubr.bf16.mxu0 %v929
        %1830 = vmatmul.mubr.bf16.gmra.mrb[0].mxu0 %v928
        %v1831 = vpop.f32.mrb[0].mxu0
        %v1832 = vadd.f32 %v1527, %v1831
        %v1833 = vpop.f32.mrb[0].mxu0
        %v1834 = vpop.f32.mrb[0].mxu0
        %v1835 = vadd.f32 %v1530, %v1834
        %v1836 = vpop.f32.mrb[0].mxu0
        %1837 = vmatprep.mubr.bf16.mxu0 %v932
        %1838 = vmatmul.mubr.bf16.gmra.mrb[0].mxu0 %v931
        %v1839 = vpop.f32.mrb[0].mxu0
        %v1840 = vadd.f32 %v1535, %v1839
        %v1841 = vpop.f32.mrb[0].mxu0
        %v1842 = vpop.f32.mrb[0].mxu0
        %v1843 = vadd.f32 %v1538, %v1842
        %v1844 = vpop.f32.mrb[0].mxu0
        %1845 = vmatprep.mubr.bf16.mxu0 %v935
        %1846 = vmatmul.mubr.bf16.gmra.mrb[0].mxu0 %v934
        %v1847 = vpop.f32.mrb[0].mxu0
        %v1848 = vadd.f32 %v1543, %v1847
        %v1849 = vpop.f32.mrb[0].mxu0
        %v1850 = vpop.f32.mrb[0].mxu0
        %v1851 = vadd.f32 %v1546, %v1850
        %v1852 = vpop.f32.mrb[0].mxu0
        %1853 = vdwg.mxu0
        %1854 = vmatprep.subr.bf16.mxu0 0
        %1855 = vmatpush1.bf16.msra.mxu0 %v1661
        %1856 = vmatprep.subr.bf16.mxu0 0
        %1857 = vmatpush1.bf16.msra.mxu0 %v1662
        %1858 = vmatprep.subr.bf16.mxu0 0
        %1859 = vmatpush1.bf16.msra.mxu0 %v1663
        %1860 = vmatprep.subr.bf16.mxu0 0
        %1861 = vmatpush1.bf16.msra.mxu0 %v1664
        %1862 = vmatprep.subr.bf16.mxu0 0
        %1863 = vmatpush1.bf16.msra.mxu0 %v1665
        %1864 = vmatprep.subr.bf16.mxu0 0
        %1865 = vmatpush1.bf16.msra.mxu0 %v1666
        %1866 = vmatprep.subr.bf16.mxu0 0
        %1867 = vmatpush1.bf16.msra.mxu0 %v1667
        %1868 = vmatprep.subr.bf16.mxu0 0
        %1869 = vmatpush1.bf16.msra.mxu0 %v1668
        %1870 = vmatprep.subr.bf16.mxu0 0
        %1871 = vmatpush1.bf16.msra.mxu0 0
        %1872 = vmatprep.subr.bf16.mxu0 0
        %1873 = vmatpush1.bf16.msra.mxu0 0
        %1874 = vmatprep.subr.bf16.mxu0 0
        %1875 = vmatpush1.bf16.msra.mxu0 0
        %1876 = vmatprep.subr.bf16.mxu0 0
        %1877 = vmatpush1.bf16.msra.mxu0 0
        %1878 = vmatprep.subr.bf16.mxu0 0
        %1879 = vmatpush1.bf16.msra.mxu0 0
        %1880 = vmatprep.subr.bf16.mxu0 0
        %1881 = vmatpush1.bf16.msra.mxu0 0
        %1882 = vmatprep.subr.bf16.mxu0 0
        %1883 = vmatpush1.bf16.msra.mxu0 0
        %1884 = vmatprep.subr.bf16.mxu0 0
        %1885 = vmatpush1.bf16.msra.mxu0 0
        %1886 = vmatprep.mubr.bf16.mxu0 0
        %1887 = vmatmul.mubr.bf16.gmra.mrb[0].mxu0 %v891
        %v1888 = vpop.f32.mrb[0].mxu0
        %v1889 = vadd.f32 %v1728, %v1888
        %v1890 = vpop.f32.mrb[0].mxu0
        %v1891 = vpop.f32.mrb[0].mxu0
        %v1892 = vadd.f32 %v1731, %v1891
        %v1893 = vpop.f32.mrb[0].mxu0
        %1894 = vmatprep.mubr.bf16.mxu0 0
        %1895 = vmatmul.mubr.bf16.gmra.mrb[0].mxu0 %v894
        %v1896 = vpop.f32.mrb[0].mxu0
        %v1897 = vadd.f32 %v1736, %v1896
        %v1898 = vpop.f32.mrb[0].mxu0
        %v1899 = vpop.f32.mrb[0].mxu0
        %v1900 = vadd.f32 %v1739, %v1899
        %v1901 = vpop.f32.mrb[0].mxu0
        %1902 = vmatprep.mubr.bf16.mxu0 0
        %1903 = vmatmul.mubr.bf16.gmra.mrb[0].mxu0 %v897
        %v1904 = vpop.f32.mrb[0].mxu0
        %v1905 = vadd.f32 %v1744, %v1904
        %v1906 = vpop.f32.mrb[0].mxu0
        %v1907 = vpop.f32.mrb[0].mxu0
        %v1908 = vadd.f32 %v1747, %v1907
        %v1909 = vpop.f32.mrb[0].mxu0
        %1910 = vmatprep.mubr.bf16.mxu0 0
        %1911 = vmatmul.mubr.bf16.gmra.mrb[0].mxu0 %v900
        %v1912 = vpop.f32.mrb[0].mxu0
        %v1913 = vadd.f32 %v1752, %v1912
        %v1914 = vpop.f32.mrb[0].mxu0
        %v1915 = vpop.f32.mrb[0].mxu0
        %v1916 = vadd.f32 %v1755, %v1915
        %v1917 = vpop.f32.mrb[0].mxu0
        %1918 = vmatprep.mubr.bf16.mxu0 0
        %1919 = vmatmul.mubr.bf16.gmra.mrb[0].mxu0 %v903
        %v1920 = vpop.f32.mrb[0].mxu0
        %v1921 = vadd.f32 %v1760, %v1920
        %v1922 = vpop.f32.mrb[0].mxu0
        %v1923 = vpop.f32.mrb[0].mxu0
        %v1924 = vadd.f32 %v1763, %v1923
        %v1925 = vpop.f32.mrb[0].mxu0
        %1926 = vmatprep.mubr.bf16.mxu0 0
        %1927 = vmatmul.mubr.bf16.gmra.mrb[0].mxu0 %v906
        %v1928 = vpop.f32.mrb[0].mxu0
        %v1929 = vadd.f32 %v1768, %v1928
        %v1930 = vpop.f32.mrb[0].mxu0
        %v1931 = vpop.f32.mrb[0].mxu0
        %v1932 = vadd.f32 %v1771, %v1931
        %v1933 = vpop.f32.mrb[0].mxu0
        %1934 = vmatprep.mubr.bf16.mxu0 0
        %1935 = vmatmul.mubr.bf16.gmra.mrb[0].mxu0 %v909
        %v1936 = vpop.f32.mrb[0].mxu0
        %v1937 = vadd.f32 %v1776, %v1936
        %v1938 = vpop.f32.mrb[0].mxu0
        %v1939 = vpop.f32.mrb[0].mxu0
        %v1940 = vadd.f32 %v1779, %v1939
        %v1941 = vpop.f32.mrb[0].mxu0
        %1942 = vmatprep.mubr.bf16.mxu0 0
        %1943 = vmatmul.mubr.bf16.gmra.mrb[0].mxu0 %v912
        %v1944 = vpop.f32.mrb[0].mxu0
        %v1945 = vadd.f32 %v1784, %v1944
        %v1946 = vpop.f32.mrb[0].mxu0
        %v1947 = vpop.f32.mrb[0].mxu0
        %v1948 = vadd.f32 %v1787, %v1947
        %v1949 = vpop.f32.mrb[0].mxu0
        %1950 = vmatprep.mubr.bf16.mxu0 0
        %1951 = vmatmul.mubr.bf16.gmra.mrb[0].mxu0 %v915
        %v1952 = vpop.f32.mrb[0].mxu0
        %v1953 = vadd.f32 %v1792, %v1952
        %v1954 = vpop.f32.mrb[0].mxu0
        %v1955 = vpop.f32.mrb[0].mxu0
        %v1956 = vadd.f32 %v1795, %v1955
        %v1957 = vpop.f32.mrb[0].mxu0
        %1958 = vmatprep.mubr.bf16.mxu0 0
        %1959 = vmatmul.mubr.bf16.gmra.mrb[0].mxu0 %v918
        %v1960 = vpop.f32.mrb[0].mxu0
        %v1961 = vadd.f32 %v1800, %v1960
        %v1962 = vpop.f32.mrb[0].mxu0
        %v1963 = vpop.f32.mrb[0].mxu0
        %v1964 = vadd.f32 %v1803, %v1963
        %v1965 = vpop.f32.mrb[0].mxu0
        %1966 = vmatprep.mubr.bf16.mxu0 0
        %1967 = vmatmul.mubr.bf16.gmra.mrb[0].mxu0 %v921
        %v1968 = vpop.f32.mrb[0].mxu0
        %v1969 = vadd.f32 %v1808, %v1968
        %v1970 = vpop.f32.mrb[0].mxu0
        %v1971 = vpop.f32.mrb[0].mxu0
        %v1972 = vadd.f32 %v1811, %v1971
        %v1973 = vpop.f32.mrb[0].mxu0
        %1974 = vmatprep.mubr.bf16.mxu0 0
        %1975 = vmatmul.mubr.bf16.gmra.mrb[0].mxu0 %v924
        %v1976 = vpop.f32.mrb[0].mxu0
        %v1977 = vadd.f32 %v1816, %v1976
        %v1978 = vpop.f32.mrb[0].mxu0
        %v1979 = vpop.f32.mrb[0].mxu0
        %v1980 = vadd.f32 %v1819, %v1979
        %v1981 = vpop.f32.mrb[0].mxu0
        %1982 = vmatprep.mubr.bf16.mxu0 0
        %1983 = vmatmul.mubr.bf16.gmra.mrb[0].mxu0 %v927
        %v1984 = vpop.f32.mrb[0].mxu0
        %v1985 = vadd.f32 %v1824, %v1984
        %v1986 = vpop.f32.mrb[0].mxu0
        %v1987 = vpop.f32.mrb[0].mxu0
        %v1988 = vadd.f32 %v1827, %v1987
        %v1989 = vpop.f32.mrb[0].mxu0
        %1990 = vmatprep.mubr.bf16.mxu0 0
        %1991 = vmatmul.mubr.bf16.gmra.mrb[0].mxu0 %v930
        %v1992 = vpop.f32.mrb[0].mxu0
        %v1993 = vadd.f32 %v1832, %v1992
        %v1994 = vpop.f32.mrb[0].mxu0
        %v1995 = vpop.f32.mrb[0].mxu0
        %v1996 = vadd.f32 %v1835, %v1995
        %v1997 = vpop.f32.mrb[0].mxu0
        %1998 = vmatprep.mubr.bf16.mxu0 0
        %1999 = vmatmul.mubr.bf16.gmra.mrb[0].mxu0 %v933
        %v2000 = vpop.f32.mrb[0].mxu0
        %v2001 = vadd.f32 %v1840, %v2000
        %v2002 = vpop.f32.mrb[0].mxu0
        %v2003 = vpop.f32.mrb[0].mxu0
        %v2004 = vadd.f32 %v1843, %v2003
        %v2005 = vpop.f32.mrb[0].mxu0
        %2006 = vmatprep.mubr.bf16.mxu0 0
        %2007 = vmatmul.mubr.bf16.gmra.mrb[0].mxu0 %v936
        %v2008 = vpop.f32.mrb[0].mxu0
        %v2009 = vadd.f32 %v1848, %v2008
        %v2010 = vpop.f32.mrb[0].mxu0
        %v2011 = vpop.f32.mrb[0].mxu0
        %v2012 = vadd.f32 %v1851, %v2011
        %v2013 = vpop.f32.mrb[0].mxu0
        %2014 = vdwg.mxu0
        %s2015 = scalar_lea.vmem [#allocation2], 48
        %v2016 = vld [vmem:[%s2015] sm:$0xff]
        %v2017 = vld [vmem:[%s2015 + $0x8] sm:$0xff]
        %v2018 = vld [vmem:[%s2015 + $0x10] sm:$0xff]
        %v2019 = vld [vmem:[%s2015 + $0x18] sm:$0xff]
        %v2020 = vld [vmem:[%s2015 + $0x20] sm:$0xff]
        %v2021 = vld [vmem:[%s2015 + $0x28] sm:$0xff]
        %v2022 = vld [vmem:[%s2015 + $0x30] sm:$0xff]
        %v2023 = vld [vmem:[%s2015 + $0x38] sm:$0xff]
        %v2024 = vld [vmem:[%s2015 + $0x40] sm:$0xff]
        %v2025 = vld [vmem:[%s2015 + $0x48] sm:$0xff]
        %v2026 = vld [vmem:[%s2015 + $0x50] sm:$0xff]
        %v2027 = vld [vmem:[%s2015 + $0x58] sm:$0xff]
        %v2028 = vld [vmem:[%s2015 + $0x60] sm:$0xff]
        %v2029 = vld [vmem:[%s2015 + $0x68] sm:$0xff]
        %v2030 = vld [vmem:[%s2015 + $0x70] sm:$0xff]
        %v2031 = vld [vmem:[%s2015 + $0x78] sm:$0xff]
        %v2032 = vld [vmem:[%s2015 + $0x80] sm:$0xff]
        %v2033 = vld [vmem:[%s2015 + $0x88] sm:$0xff]
        %v2034 = vld [vmem:[%s2015 + $0x90] sm:$0xff]
        %v2035 = vld [vmem:[%s2015 + $0x98] sm:$0xff]
        %v2036 = vld [vmem:[%s2015 + $0xa0] sm:$0xff]
        %v2037 = vld [vmem:[%s2015 + $0xa8] sm:$0xff]
        %v2038 = vld [vmem:[%s2015 + $0xb0] sm:$0xff]
        %v2039 = vld [vmem:[%s2015 + $0xb8] sm:$0xff]
        %v2040 = vld [vmem:[%s2015 + $0xc0] sm:$0xff]
        %v2041 = vld [vmem:[%s2015 + $0xc8] sm:$0xff]
        %v2042 = vld [vmem:[%s2015 + $0xd0] sm:$0xff]
        %v2043 = vld [vmem:[%s2015 + $0xd8] sm:$0xff]
        %v2044 = vld [vmem:[%s2015 + $0xe0] sm:$0xff]
        %v2045 = vld [vmem:[%s2015 + $0xe8] sm:$0xff]
        %v2046 = vld [vmem:[%s2015 + $0xf0] sm:$0xff]
        %v2047 = vld [vmem:[%s2015 + $0xf8] sm:$0xff]
        %v2048 = vld [vmem:[%s2015 + $0x100] sm:$0xff]
        %v2049 = vld [vmem:[%s2015 + $0x108] sm:$0xff]
        %v2050 = vld [vmem:[%s2015 + $0x110] sm:$0xff]
        %v2051 = vld [vmem:[%s2015 + $0x118] sm:$0xff]
        %v2052 = vld [vmem:[%s2015 + $0x120] sm:$0xff]
        %v2053 = vld [vmem:[%s2015 + $0x128] sm:$0xff]
        %v2054 = vld [vmem:[%s2015 + $0x130] sm:$0xff]
        %v2055 = vld [vmem:[%s2015 + $0x138] sm:$0xff]
        %v2056 = vld [vmem:[%s2015 + $0x140] sm:$0xff]
        %v2057 = vld [vmem:[%s2015 + $0x148] sm:$0xff]
        %v2058 = vld [vmem:[%s2015 + $0x150] sm:$0xff]
        %v2059 = vld [vmem:[%s2015 + $0x158] sm:$0xff]
        %v2060 = vld [vmem:[%s2015 + $0x160] sm:$0xff]
        %v2061 = vld [vmem:[%s2015 + $0x168] sm:$0xff]
        %v2062 = vld [vmem:[%s2015 + $0x170] sm:$0xff]
        %v2063 = vld [vmem:[%s2015 + $0x178] sm:$0xff]
        %s2064 = scalar_lea.vmem %s1, 384
        %v2065 = vld [vmem:[%s2064] sm:$0xf]
        %v2066 = vld [vmem:[%s2064 + $0x4] sm:$0xf]
        %v2067 = vld [vmem:[%s2064 + $0x8] sm:$0xf]
        %v2068 = vld [vmem:[%s2064 + $0xc] sm:$0xf]
        %v2069 = vld [vmem:[%s2064 + $0x10] sm:$0xf]
        %v2070 = vld [vmem:[%s2064 + $0x14] sm:$0xf]
        %v2071 = vld [vmem:[%s2064 + $0x18] sm:$0xf]
        %v2072 = vld [vmem:[%s2064 + $0x1c] sm:$0xf]
        %v2073 = vld [vmem:[%s2064 + $0x20] sm:$0xf]
        %v2074 = vld [vmem:[%s2064 + $0x24] sm:$0xf]
        %v2075 = vld [vmem:[%s2064 + $0x28] sm:$0xf]
        %v2076 = vld [vmem:[%s2064 + $0x2c] sm:$0xf]
        %v2077 = vld [vmem:[%s2064 + $0x30] sm:$0xf]
        %v2078 = vld [vmem:[%s2064 + $0x34] sm:$0xf]
        %v2079 = vld [vmem:[%s2064 + $0x38] sm:$0xf]
        %v2080 = vld [vmem:[%s2064 + $0x3c] sm:$0xf]
        %v2081 = vld [vmem:[%s2064 + $0x40] sm:$0xf]
        %v2082 = vld [vmem:[%s2064 + $0x44] sm:$0xf]
        %v2083 = vld [vmem:[%s2064 + $0x48] sm:$0xf]
        %v2084 = vld [vmem:[%s2064 + $0x4c] sm:$0xf]
        %v2085 = vld [vmem:[%s2064 + $0x50] sm:$0xf]
        %v2086 = vld [vmem:[%s2064 + $0x54] sm:$0xf]
        %v2087 = vld [vmem:[%s2064 + $0x58] sm:$0xf]
        %v2088 = vld [vmem:[%s2064 + $0x5c] sm:$0xf]
        %v2089 = vld [vmem:[%s2064 + $0x60] sm:$0xf]
        %v2090 = vld [vmem:[%s2064 + $0x64] sm:$0xf]
        %v2091 = vld [vmem:[%s2064 + $0x68] sm:$0xf]
        %v2092 = vld [vmem:[%s2064 + $0x6c] sm:$0xf]
        %v2093 = vld [vmem:[%s2064 + $0x70] sm:$0xf]
        %v2094 = vld [vmem:[%s2064 + $0x74] sm:$0xf]
        %v2095 = vld [vmem:[%s2064 + $0x78] sm:$0xf]
        %v2096 = vld [vmem:[%s2064 + $0x7c] sm:$0xf]
        %v2097 = vld [vmem:[%s2064 + $0x80] sm:$0xf]
        %v2098 = vld [vmem:[%s2064 + $0x84] sm:$0xf]
        %v2099 = vld [vmem:[%s2064 + $0x88] sm:$0xf]
        %v2100 = vld [vmem:[%s2064 + $0x8c] sm:$0xf]
        %v2101 = vld [vmem:[%s2064 + $0x90] sm:$0xf]
        %v2102 = vld [vmem:[%s2064 + $0x94] sm:$0xf]
        %v2103 = vld [vmem:[%s2064 + $0x98] sm:$0xf]
        %v2104 = vld [vmem:[%s2064 + $0x9c] sm:$0xf]
        %v2105 = vld [vmem:[%s2064 + $0xa0] sm:$0xf]
        %v2106 = vld [vmem:[%s2064 + $0xa4] sm:$0xf]
        %v2107 = vld [vmem:[%s2064 + $0xa8] sm:$0xf]
        %v2108 = vld [vmem:[%s2064 + $0xac] sm:$0xf]
        %v2109 = vld [vmem:[%s2064 + $0xb0] sm:$0xf]
        %v2110 = vld [vmem:[%s2064 + $0xb4] sm:$0xf]
        %v2111 = vld [vmem:[%s2064 + $0xb8] sm:$0xf]
        %v2112 = vld [vmem:[%s2064 + $0xbc] sm:$0xf]
        %v2161 = vunpack.c.l.b16 %v2065
        %v2162 = vunpack.c.l.b16 %v2066
        %v2163 = vunpack.c.l.b16 %v2067
        %v2164 = vunpack.c.l.b16 %v2068
        %v2165 = vunpack.c.l.b16 %v2069
        %v2166 = vunpack.c.l.b16 %v2070
        %v2167 = vunpack.c.l.b16 %v2071
        %v2168 = vunpack.c.l.b16 %v2072
        %v2169 = vunpack.c.l.b16 %v2073
        %v2170 = vunpack.c.l.b16 %v2074
        %v2171 = vunpack.c.l.b16 %v2075
        %v2172 = vunpack.c.l.b16 %v2076
        %v2173 = vunpack.c.l.b16 %v2077
        %v2174 = vunpack.c.l.b16 %v2078
        %v2175 = vunpack.c.l.b16 %v2079
        %v2176 = vunpack.c.l.b16 %v2080
        %v2177 = vunpack.c.l.b16 %v2081
        %v2178 = vunpack.c.l.b16 %v2082
        %v2179 = vunpack.c.l.b16 %v2083
        %v2180 = vunpack.c.l.b16 %v2084
        %v2181 = vunpack.c.l.b16 %v2085
        %v2182 = vunpack.c.l.b16 %v2086
        %v2183 = vunpack.c.l.b16 %v2087
        %v2184 = vunpack.c.l.b16 %v2088
        %v2185 = vunpack.c.l.b16 %v2089
        %v2186 = vunpack.c.l.b16 %v2090
        %v2187 = vunpack.c.l.b16 %v2091
        %v2188 = vunpack.c.l.b16 %v2092
        %v2189 = vunpack.c.l.b16 %v2093
        %v2190 = vunpack.c.l.b16 %v2094
        %v2191 = vunpack.c.l.b16 %v2095
        %v2192 = vunpack.c.l.b16 %v2096
        %v2193 = vunpack.c.l.b16 %v2097
        %v2194 = vunpack.c.l.b16 %v2098
        %v2195 = vunpack.c.l.b16 %v2099
        %v2196 = vunpack.c.l.b16 %v2100
        %v2197 = vunpack.c.l.b16 %v2101
        %v2198 = vunpack.c.l.b16 %v2102
        %v2199 = vunpack.c.l.b16 %v2103
        %v2200 = vunpack.c.l.b16 %v2104
        %v2201 = vunpack.c.l.b16 %v2105
        %v2202 = vunpack.c.l.b16 %v2106
        %v2203 = vunpack.c.l.b16 %v2107
        %v2204 = vunpack.c.l.b16 %v2108
        %v2205 = vunpack.c.l.b16 %v2109
        %v2206 = vunpack.c.l.b16 %v2110
        %v2207 = vunpack.c.l.b16 %v2111
        %v2208 = vunpack.c.l.b16 %v2112
        %v2209 = vpack.c.b16 %v2162, %v2161
        %v2210 = vpack.c.b16 %v2164, %v2163
        %v2211 = vpack.c.b16 %v2166, %v2165
        %v2212 = vpack.c.b16 %v2168, %v2167
        %v2213 = vpack.c.b16 %v2170, %v2169
        %v2214 = vpack.c.b16 %v2172, %v2171
        %v2215 = vpack.c.b16 %v2174, %v2173
        %v2216 = vpack.c.b16 %v2176, %v2175
        %v2217 = vpack.c.b16 %v2178, %v2177
        %v2218 = vpack.c.b16 %v2180, %v2179
        %v2219 = vpack.c.b16 %v2182, %v2181
        %v2220 = vpack.c.b16 %v2184, %v2183
        %v2221 = vpack.c.b16 %v2186, %v2185
        %v2222 = vpack.c.b16 %v2188, %v2187
        %v2223 = vpack.c.b16 %v2190, %v2189
        %v2224 = vpack.c.b16 %v2192, %v2191
        %v2225 = vpack.c.b16 %v2194, %v2193
        %v2226 = vpack.c.b16 %v2196, %v2195
        %v2227 = vpack.c.b16 %v2198, %v2197
        %v2228 = vpack.c.b16 %v2200, %v2199
        %v2229 = vpack.c.b16 %v2202, %v2201
        %v2230 = vpack.c.b16 %v2204, %v2203
        %v2231 = vpack.c.b16 %v2206, %v2205
        %v2232 = vpack.c.b16 %v2208, %v2207
        %2257 = vmatprep.subr.bf16.mxu0 0
        %2258 = vmatpush1.bf16.msra.mxu0 %v2209
        %2259 = vmatprep.subr.bf16.mxu0 0
        %2260 = vmatpush1.bf16.msra.mxu0 %v2210
        %2261 = vmatprep.subr.bf16.mxu0 0
        %2262 = vmatpush1.bf16.msra.mxu0 %v2211
        %2263 = vmatprep.subr.bf16.mxu0 0
        %2264 = vmatpush1.bf16.msra.mxu0 %v2212
        %2265 = vmatprep.subr.bf16.mxu0 0
        %2266 = vmatpush1.bf16.msra.mxu0 %v2213
        %2267 = vmatprep.subr.bf16.mxu0 0
        %2268 = vmatpush1.bf16.msra.mxu0 %v2214
        %2269 = vmatprep.subr.bf16.mxu0 0
        %2270 = vmatpush1.bf16.msra.mxu0 %v2215
        %2271 = vmatprep.subr.bf16.mxu0 0
        %2272 = vmatpush1.bf16.msra.mxu0 %v2216
        %2273 = vmatprep.subr.bf16.mxu0 0
        %2274 = vmatpush1.bf16.msra.mxu0 %v2217
        %2275 = vmatprep.subr.bf16.mxu0 0
        %2276 = vmatpush1.bf16.msra.mxu0 %v2218
        %2277 = vmatprep.subr.bf16.mxu0 0
        %2278 = vmatpush1.bf16.msra.mxu0 %v2219
        %2279 = vmatprep.subr.bf16.mxu0 0
        %2280 = vmatpush1.bf16.msra.mxu0 %v2220
        %2281 = vmatprep.subr.bf16.mxu0 0
        %2282 = vmatpush1.bf16.msra.mxu0 %v2221
        %2283 = vmatprep.subr.bf16.mxu0 0
        %2284 = vmatpush1.bf16.msra.mxu0 %v2222
        %2285 = vmatprep.subr.bf16.mxu0 0
        %2286 = vmatpush1.bf16.msra.mxu0 %v2223
        %2287 = vmatprep.subr.bf16.mxu0 0
        %2288 = vmatpush1.bf16.msra.mxu0 %v2224
        %2289 = vmatprep.mubr.bf16.mxu0 %v2017
        %2290 = vmatmul.mubr.bf16.gmra.mrb[0].mxu0 %v2016
        %v2291 = vpop.f32.mrb[0].mxu0
        %v2292 = vadd.f32 0.0, %v2291
        %v2293 = vpop.f32.mrb[0].mxu0
        %v2294 = vpop.f32.mrb[0].mxu0
        %v2295 = vadd.f32 0.0, %v2294
        %v2296 = vpop.f32.mrb[0].mxu0
        %2297 = vmatprep.mubr.bf16.mxu0 %v2020
        %2298 = vmatmul.mubr.bf16.gmra.mrb[0].mxu0 %v2019
        %v2299 = vpop.f32.mrb[0].mxu0
        %v2300 = vadd.f32 0.0, %v2299
        %v2301 = vpop.f32.mrb[0].mxu0
        %v2302 = vpop.f32.mrb[0].mxu0
        %v2303 = vadd.f32 0.0, %v2302
        %v2304 = vpop.f32.mrb[0].mxu0
        %2305 = vmatprep.mubr.bf16.mxu0 %v2023
        %2306 = vmatmul.mubr.bf16.gmra.mrb[0].mxu0 %v2022
        %v2307 = vpop.f32.mrb[0].mxu0
        %v2308 = vadd.f32 0.0, %v2307
        %v2309 = vpop.f32.mrb[0].mxu0
        %v2310 = vpop.f32.mrb[0].mxu0
        %v2311 = vadd.f32 0.0, %v2310
        %v2312 = vpop.f32.mrb[0].mxu0
        %2313 = vmatprep.mubr.bf16.mxu0 %v2026
        %2314 = vmatmul.mubr.bf16.gmra.mrb[0].mxu0 %v2025
        %v2315 = vpop.f32.mrb[0].mxu0
        %v2316 = vadd.f32 0.0, %v2315
        %v2317 = vpop.f32.mrb[0].mxu0
        %v2318 = vpop.f32.mrb[0].mxu0
        %v2319 = vadd.f32 0.0, %v2318
        %v2320 = vpop.f32.mrb[0].mxu0
        %2321 = vmatprep.mubr.bf16.mxu0 %v2029
        %2322 = vmatmul.mubr.bf16.gmra.mrb[0].mxu0 %v2028
        %v2323 = vpop.f32.mrb[0].mxu0
        %v2324 = vadd.f32 0.0, %v2323
        %v2325 = vpop.f32.mrb[0].mxu0
        %v2326 = vpop.f32.mrb[0].mxu0
        %v2327 = vadd.f32 0.0, %v2326
        %v2328 = vpop.f32.mrb[0].mxu0
        %2329 = vmatprep.mubr.bf16.mxu0 %v2032
        %2330 = vmatmul.mubr.bf16.gmra.mrb[0].mxu0 %v2031
        %v2331 = vpop.f32.mrb[0].mxu0
        %v2332 = vadd.f32 0.0, %v2331
        %v2333 = vpop.f32.mrb[0].mxu0
        %v2334 = vpop.f32.mrb[0].mxu0
        %v2335 = vadd.f32 0.0, %v2334
        %v2336 = vpop.f32.mrb[0].mxu0
        %2337 = vmatprep.mubr.bf16.mxu0 %v2035
        %2338 = vmatmul.mubr.bf16.gmra.mrb[0].mxu0 %v2034
        %v2339 = vpop.f32.mrb[0].mxu0
        %v2340 = vadd.f32 0.0, %v2339
        %v2341 = vpop.f32.mrb[0].mxu0
        %v2342 = vpop.f32.mrb[0].mxu0
        %v2343 = vadd.f32 0.0, %v2342
        %v2344 = vpop.f32.mrb[0].mxu0
        %2345 = vmatprep.mubr.bf16.mxu0 %v2038
        %2346 = vmatmul.mubr.bf16.gmra.mrb[0].mxu0 %v2037
        %v2347 = vpop.f32.mrb[0].mxu0
        %v2348 = vadd.f32 0.0, %v2347
        %v2349 = vpop.f32.mrb[0].mxu0
        %v2350 = vpop.f32.mrb[0].mxu0
        %v2351 = vadd.f32 0.0, %v2350
        %v2352 = vpop.f32.mrb[0].mxu0
        %2353 = vmatprep.mubr.bf16.mxu0 %v2041
        %2354 = vmatmul.mubr.bf16.gmra.mrb[0].mxu0 %v2040
        %v2355 = vpop.f32.mrb[0].mxu0
        %v2356 = vadd.f32 0.0, %v2355
        %v2357 = vpop.f32.mrb[0].mxu0
        %v2358 = vpop.f32.mrb[0].mxu0
        %v2359 = vadd.f32 0.0, %v2358
        %v2360 = vpop.f32.mrb[0].mxu0
        %2361 = vmatprep.mubr.bf16.mxu0 %v2044
        %2362 = vmatmul.mubr.bf16.gmra.mrb[0].mxu0 %v2043
        %v2363 = vpop.f32.mrb[0].mxu0
        %v2364 = vadd.f32 0.0, %v2363
        %v2365 = vpop.f32.mrb[0].mxu0
        %v2366 = vpop.f32.mrb[0].mxu0
        %v2367 = vadd.f32 0.0, %v2366
        %v2368 = vpop.f32.mrb[0].mxu0
        %2369 = vmatprep.mubr.bf16.mxu0 %v2047
        %2370 = vmatmul.mubr.bf16.gmra.mrb[0].mxu0 %v2046
        %v2371 = vpop.f32.mrb[0].mxu0
        %v2372 = vadd.f32 0.0, %v2371
        %v2373 = vpop.f32.mrb[0].mxu0
        %v2374 = vpop.f32.mrb[0].mxu0
        %v2375 = vadd.f32 0.0, %v2374
        %v2376 = vpop.f32.mrb[0].mxu0
        %2377 = vmatprep.mubr.bf16.mxu0 %v2050
        %2378 = vmatmul.mubr.bf16.gmra.mrb[0].mxu0 %v2049
        %v2379 = vpop.f32.mrb[0].mxu0
        %v2380 = vadd.f32 0.0, %v2379
        %v2381 = vpop.f32.mrb[0].mxu0
        %v2382 = vpop.f32.mrb[0].mxu0
        %v2383 = vadd.f32 0.0, %v2382
        %v2384 = vpop.f32.mrb[0].mxu0
        %2385 = vmatprep.mubr.bf16.mxu0 %v2053
        %2386 = vmatmul.mubr.bf16.gmra.mrb[0].mxu0 %v2052
        %v2387 = vpop.f32.mrb[0].mxu0
        %v2388 = vadd.f32 0.0, %v2387
        %v2389 = vpop.f32.mrb[0].mxu0
        %v2390 = vpop.f32.mrb[0].mxu0
        %v2391 = vadd.f32 0.0, %v2390
        %v2392 = vpop.f32.mrb[0].mxu0
        %2393 = vmatprep.mubr.bf16.mxu0 %v2056
        %2394 = vmatmul.mubr.bf16.gmra.mrb[0].mxu0 %v2055
        %v2395 = vpop.f32.mrb[0].mxu0
        %v2396 = vadd.f32 0.0, %v2395
        %v2397 = vpop.f32.mrb[0].mxu0
        %v2398 = vpop.f32.mrb[0].mxu0
        %v2399 = vadd.f32 0.0, %v2398
        %v2400 = vpop.f32.mrb[0].mxu0
        %2401 = vmatprep.mubr.bf16.mxu0 %v2059
        %2402 = vmatmul.mubr.bf16.gmra.mrb[0].mxu0 %v2058
        %v2403 = vpop.f32.mrb[0].mxu0
        %v2404 = vadd.f32 0.0, %v2403
        %v2405 = vpop.f32.mrb[0].mxu0
        %v2406 = vpop.f32.mrb[0].mxu0
        %v2407 = vadd.f32 0.0, %v2406
        %v2408 = vpop.f32.mrb[0].mxu0
        %2409 = vmatprep.mubr.bf16.mxu0 %v2062
        %2410 = vmatmul.mubr.bf16.gmra.mrb[0].mxu0 %v2061
        %v2411 = vpop.f32.mrb[0].mxu0
        %v2412 = vadd.f32 0.0, %v2411
        %v2413 = vpop.f32.mrb[0].mxu0
        %v2414 = vpop.f32.mrb[0].mxu0
        %v2415 = vadd.f32 0.0, %v2414
        %v2416 = vpop.f32.mrb[0].mxu0
        %2417 = vdwg.mxu0
        %2418 = vmatprep.subr.bf16.mxu0 0
        %2419 = vmatpush1.bf16.msra.mxu0 %v2225
        %2420 = vmatprep.subr.bf16.mxu0 0
        %2421 = vmatpush1.bf16.msra.mxu0 %v2226
        %2422 = vmatprep.subr.bf16.mxu0 0
        %2423 = vmatpush1.bf16.msra.mxu0 %v2227
        %2424 = vmatprep.subr.bf16.mxu0 0
        %2425 = vmatpush1.bf16.msra.mxu0 %v2228
        %2426 = vmatprep.subr.bf16.mxu0 0
        %2427 = vmatpush1.bf16.msra.mxu0 %v2229
        %2428 = vmatprep.subr.bf16.mxu0 0
        %2429 = vmatpush1.bf16.msra.mxu0 %v2230
        %2430 = vmatprep.subr.bf16.mxu0 0
        %2431 = vmatpush1.bf16.msra.mxu0 %v2231
        %2432 = vmatprep.subr.bf16.mxu0 0
        %2433 = vmatpush1.bf16.msra.mxu0 %v2232
        %2434 = vmatprep.subr.bf16.mxu0 0
        %2435 = vmatpush1.bf16.msra.mxu0 0
        %2436 = vmatprep.subr.bf16.mxu0 0
        %2437 = vmatpush1.bf16.msra.mxu0 0
        %2438 = vmatprep.subr.bf16.mxu0 0
        %2439 = vmatpush1.bf16.msra.mxu0 0
        %2440 = vmatprep.subr.bf16.mxu0 0
        %2441 = vmatpush1.bf16.msra.mxu0 0
        %2442 = vmatprep.subr.bf16.mxu0 0
        %2443 = vmatpush1.bf16.msra.mxu0 0
        %2444 = vmatprep.subr.bf16.mxu0 0
        %2445 = vmatpush1.bf16.msra.mxu0 0
        %2446 = vmatprep.subr.bf16.mxu0 0
        %2447 = vmatpush1.bf16.msra.mxu0 0
        %2448 = vmatprep.subr.bf16.mxu0 0
        %2449 = vmatpush1.bf16.msra.mxu0 0
        %2450 = vmatprep.mubr.bf16.mxu0 0
        %2451 = vmatmul.mubr.bf16.gmra.mrb[0].mxu0 %v2018
        %v2452 = vpop.f32.mrb[0].mxu0
        %v2453 = vadd.f32 %v2292, %v2452
        %v2454 = vpop.f32.mrb[0].mxu0
        %v2455 = vpop.f32.mrb[0].mxu0
        %v2456 = vadd.f32 %v2295, %v2455
        %v2457 = vpop.f32.mrb[0].mxu0
        %2458 = vmatprep.mubr.bf16.mxu0 0
        %2459 = vmatmul.mubr.bf16.gmra.mrb[0].mxu0 %v2021
        %v2460 = vpop.f32.mrb[0].mxu0
        %v2461 = vadd.f32 %v2300, %v2460
        %v2462 = vpop.f32.mrb[0].mxu0
        %v2463 = vpop.f32.mrb[0].mxu0
        %v2464 = vadd.f32 %v2303, %v2463
        %v2465 = vpop.f32.mrb[0].mxu0
        %2466 = vmatprep.mubr.bf16.mxu0 0
        %2467 = vmatmul.mubr.bf16.gmra.mrb[0].mxu0 %v2024
        %v2468 = vpop.f32.mrb[0].mxu0
        %v2469 = vadd.f32 %v2308, %v2468
        %v2470 = vpop.f32.mrb[0].mxu0
        %v2471 = vpop.f32.mrb[0].mxu0
        %v2472 = vadd.f32 %v2311, %v2471
        %v2473 = vpop.f32.mrb[0].mxu0
        %2474 = vmatprep.mubr.bf16.mxu0 0
        %2475 = vmatmul.mubr.bf16.gmra.mrb[0].mxu0 %v2027
        %v2476 = vpop.f32.mrb[0].mxu0
        %v2477 = vadd.f32 %v2316, %v2476
        %v2478 = vpop.f32.mrb[0].mxu0
        %v2479 = vpop.f32.mrb[0].mxu0
        %v2480 = vadd.f32 %v2319, %v2479
        %v2481 = vpop.f32.mrb[0].mxu0
        %2482 = vmatprep.mubr.bf16.mxu0 0
        %2483 = vmatmul.mubr.bf16.gmra.mrb[0].mxu0 %v2030
        %v2484 = vpop.f32.mrb[0].mxu0
        %v2485 = vadd.f32 %v2324, %v2484
        %v2486 = vpop.f32.mrb[0].mxu0
        %v2487 = vpop.f32.mrb[0].mxu0
        %v2488 = vadd.f32 %v2327, %v2487
        %v2489 = vpop.f32.mrb[0].mxu0
        %2490 = vmatprep.mubr.bf16.mxu0 0
        %2491 = vmatmul.mubr.bf16.gmra.mrb[0].mxu0 %v2033
        %v2492 = vpop.f32.mrb[0].mxu0
        %v2493 = vadd.f32 %v2332, %v2492
        %v2494 = vpop.f32.mrb[0].mxu0
        %v2495 = vpop.f32.mrb[0].mxu0
        %v2496 = vadd.f32 %v2335, %v2495
        %v2497 = vpop.f32.mrb[0].mxu0
        %2498 = vmatprep.mubr.bf16.mxu0 0
        %2499 = vmatmul.mubr.bf16.gmra.mrb[0].mxu0 %v2036
        %v2500 = vpop.f32.mrb[0].mxu0
        %v2501 = vadd.f32 %v2340, %v2500
        %v2502 = vpop.f32.mrb[0].mxu0
        %v2503 = vpop.f32.mrb[0].mxu0
        %v2504 = vadd.f32 %v2343, %v2503
        %v2505 = vpop.f32.mrb[0].mxu0
        %2506 = vmatprep.mubr.bf16.mxu0 0
        %2507 = vmatmul.mubr.bf16.gmra.mrb[0].mxu0 %v2039
        %v2508 = vpop.f32.mrb[0].mxu0
        %v2509 = vadd.f32 %v2348, %v2508
        %v2510 = vpop.f32.mrb[0].mxu0
        %v2511 = vpop.f32.mrb[0].mxu0
        %v2512 = vadd.f32 %v2351, %v2511
        %v2513 = vpop.f32.mrb[0].mxu0
        %2514 = vmatprep.mubr.bf16.mxu0 0
        %2515 = vmatmul.mubr.bf16.gmra.mrb[0].mxu0 %v2042
        %v2516 = vpop.f32.mrb[0].mxu0
        %v2517 = vadd.f32 %v2356, %v2516
        %v2518 = vpop.f32.mrb[0].mxu0
        %v2519 = vpop.f32.mrb[0].mxu0
        %v2520 = vadd.f32 %v2359, %v2519
        %v2521 = vpop.f32.mrb[0].mxu0
        %2522 = vmatprep.mubr.bf16.mxu0 0
        %2523 = vmatmul.mubr.bf16.gmra.mrb[0].mxu0 %v2045
        %v2524 = vpop.f32.mrb[0].mxu0
        %v2525 = vadd.f32 %v2364, %v2524
        %v2526 = vpop.f32.mrb[0].mxu0
        %v2527 = vpop.f32.mrb[0].mxu0
        %v2528 = vadd.f32 %v2367, %v2527
        %v2529 = vpop.f32.mrb[0].mxu0
        %2530 = vmatprep.mubr.bf16.mxu0 0
        %2531 = vmatmul.mubr.bf16.gmra.mrb[0].mxu0 %v2048
        %v2532 = vpop.f32.mrb[0].mxu0
        %v2533 = vadd.f32 %v2372, %v2532
        %v2534 = vpop.f32.mrb[0].mxu0
        %v2535 = vpop.f32.mrb[0].mxu0
        %v2536 = vadd.f32 %v2375, %v2535
        %v2537 = vpop.f32.mrb[0].mxu0
        %2538 = vmatprep.mubr.bf16.mxu0 0
        %2539 = vmatmul.mubr.bf16.gmra.mrb[0].mxu0 %v2051
        %v2540 = vpop.f32.mrb[0].mxu0
        %v2541 = vadd.f32 %v2380, %v2540
        %v2542 = vpop.f32.mrb[0].mxu0
        %v2543 = vpop.f32.mrb[0].mxu0
        %v2544 = vadd.f32 %v2383, %v2543
        %v2545 = vpop.f32.mrb[0].mxu0
        %2546 = vmatprep.mubr.bf16.mxu0 0
        %2547 = vmatmul.mubr.bf16.gmra.mrb[0].mxu0 %v2054
        %v2548 = vpop.f32.mrb[0].mxu0
        %v2549 = vadd.f32 %v2388, %v2548
        %v2550 = vpop.f32.mrb[0].mxu0
        %v2551 = vpop.f32.mrb[0].mxu0
        %v2552 = vadd.f32 %v2391, %v2551
        %v2553 = vpop.f32.mrb[0].mxu0
        %2554 = vmatprep.mubr.bf16.mxu0 0
        %2555 = vmatmul.mubr.bf16.gmra.mrb[0].mxu0 %v2057
        %v2556 = vpop.f32.mrb[0].mxu0
        %v2557 = vadd.f32 %v2396, %v2556
        %v2558 = vpop.f32.mrb[0].mxu0
        %v2559 = vpop.f32.mrb[0].mxu0
        %v2560 = vadd.f32 %v2399, %v2559
        %v2561 = vpop.f32.mrb[0].mxu0
        %2562 = vmatprep.mubr.bf16.mxu0 0
        %2563 = vmatmul.mubr.bf16.gmra.mrb[0].mxu0 %v2060
        %v2564 = vpop.f32.mrb[0].mxu0
        %v2565 = vadd.f32 %v2404, %v2564
        %v2566 = vpop.f32.mrb[0].mxu0
        %v2567 = vpop.f32.mrb[0].mxu0
        %v2568 = vadd.f32 %v2407, %v2567
        %v2569 = vpop.f32.mrb[0].mxu0
        %2570 = vmatprep.mubr.bf16.mxu0 0
        %2571 = vmatmul.mubr.bf16.gmra.mrb[0].mxu0 %v2063
        %v2572 = vpop.f32.mrb[0].mxu0
        %v2573 = vadd.f32 %v2412, %v2572
        %v2574 = vpop.f32.mrb[0].mxu0
        %v2575 = vpop.f32.mrb[0].mxu0
        %v2576 = vadd.f32 %v2415, %v2575
        %v2577 = vpop.f32.mrb[0].mxu0
        %2578 = vdwg.mxu0
        %v2579 = vadd.f32 %v1889, %v2453
        %v2580 = vadd.f32 %v1892, %v2456
        %v2581 = vadd.f32 %v1897, %v2461
        %v2582 = vadd.f32 %v1900, %v2464
        %v2583 = vadd.f32 %v1905, %v2469
        %v2584 = vadd.f32 %v1908, %v2472
        %v2585 = vadd.f32 %v1913, %v2477
        %v2586 = vadd.f32 %v1916, %v2480
        %v2587 = vadd.f32 %v1921, %v2485
        %v2588 = vadd.f32 %v1924, %v2488
        %v2589 = vadd.f32 %v1929, %v2493
        %v2590 = vadd.f32 %v1932, %v2496
        %v2591 = vadd.f32 %v1937, %v2501
        %v2592 = vadd.f32 %v1940, %v2504
        %v2593 = vadd.f32 %v1945, %v2509
        %v2594 = vadd.f32 %v1948, %v2512
        %v2595 = vadd.f32 %v1953, %v2517
        %v2596 = vadd.f32 %v1956, %v2520
        %v2597 = vadd.f32 %v1961, %v2525
        %v2598 = vadd.f32 %v1964, %v2528
        %v2599 = vadd.f32 %v1969, %v2533
        %v2600 = vadd.f32 %v1972, %v2536
        %v2601 = vadd.f32 %v1977, %v2541
        %v2602 = vadd.f32 %v1980, %v2544
        %v2603 = vadd.f32 %v1985, %v2549
        %v2604 = vadd.f32 %v1988, %v2552
        %v2605 = vadd.f32 %v1993, %v2557
        %v2606 = vadd.f32 %v1996, %v2560
        %v2607 = vadd.f32 %v2001, %v2565
        %v2608 = vadd.f32 %v2004, %v2568
        %v2609 = vadd.f32 %v2009, %v2573
        %v2610 = vadd.f32 %v2012, %v2576
        %v2611 = vld [vmem:[%s2] sm:$0x1]
        %v2613 = vlaneseq
        %v2614 = vshrl.u32 %v2613, 7
        %v2615 = vsub.s32 0, %v2614
        %v2616 = vrot.slane %v2611, %v2615
        %v2618 = vadd.f32 %v2579, %v2616
        %v2619 = vadd.f32 %v2580, %v2616
        %v2620 = vadd.f32 %v2581, %v2616
        %v2621 = vadd.f32 %v2582, %v2616
        %v2622 = vadd.f32 %v2583, %v2616
        %v2623 = vadd.f32 %v2584, %v2616
        %v2624 = vadd.f32 %v2585, %v2616
        %v2625 = vadd.f32 %v2586, %v2616
        %v2626 = vadd.f32 %v2587, %v2616
        %v2627 = vadd.f32 %v2588, %v2616
        %v2628 = vadd.f32 %v2589, %v2616
        %v2629 = vadd.f32 %v2590, %v2616
        %v2630 = vadd.f32 %v2591, %v2616
        %v2631 = vadd.f32 %v2592, %v2616
        %v2632 = vadd.f32 %v2593, %v2616
        %v2633 = vadd.f32 %v2594, %v2616
        %v2634 = vadd.f32 %v2595, %v2616
        %v2635 = vadd.f32 %v2596, %v2616
        %v2636 = vadd.f32 %v2597, %v2616
        %v2637 = vadd.f32 %v2598, %v2616
        %v2638 = vadd.f32 %v2599, %v2616
        %v2639 = vadd.f32 %v2600, %v2616
        %v2640 = vadd.f32 %v2601, %v2616
        %v2641 = vadd.f32 %v2602, %v2616
        %v2642 = vadd.f32 %v2603, %v2616
        %v2643 = vadd.f32 %v2604, %v2616
        %v2644 = vadd.f32 %v2605, %v2616
        %v2645 = vadd.f32 %v2606, %v2616
        %v2646 = vadd.f32 %v2607, %v2616
        %v2647 = vadd.f32 %v2608, %v2616
        %v2648 = vadd.f32 %v2609, %v2616
        %v2649 = vadd.f32 %v2610, %v2616
        %v2650 = vmax.f32 %v2618, 0.0
        %v2651 = vmax.f32 %v2619, 0.0
        %v2652 = vmax.f32 %v2620, 0.0
        %v2653 = vmax.f32 %v2621, 0.0
        %v2654 = vmax.f32 %v2622, 0.0
        %v2655 = vmax.f32 %v2623, 0.0
        %v2656 = vmax.f32 %v2624, 0.0
        %v2657 = vmax.f32 %v2625, 0.0
        %v2658 = vmax.f32 %v2626, 0.0
        %v2659 = vmax.f32 %v2627, 0.0
        %v2660 = vmax.f32 %v2628, 0.0
        %v2661 = vmax.f32 %v2629, 0.0
        %v2662 = vmax.f32 %v2630, 0.0
        %v2663 = vmax.f32 %v2631, 0.0
        %v2664 = vmax.f32 %v2632, 0.0
        %v2665 = vmax.f32 %v2633, 0.0
        %v2666 = vmax.f32 %v2634, 0.0
        %v2667 = vmax.f32 %v2635, 0.0
        %v2668 = vmax.f32 %v2636, 0.0
        %v2669 = vmax.f32 %v2637, 0.0
        %v2670 = vmax.f32 %v2638, 0.0
        %v2671 = vmax.f32 %v2639, 0.0
        %v2672 = vmax.f32 %v2640, 0.0
        %v2673 = vmax.f32 %v2641, 0.0
        %v2674 = vmax.f32 %v2642, 0.0
        %v2675 = vmax.f32 %v2643, 0.0
        %v2676 = vmax.f32 %v2644, 0.0
        %v2677 = vmax.f32 %v2645, 0.0
        %v2678 = vmax.f32 %v2646, 0.0
        %v2679 = vmax.f32 %v2647, 0.0
        %v2680 = vmax.f32 %v2648, 0.0
        %v2681 = vmax.f32 %v2649, 0.0
        %2682 = vst [vmem:[#allocation3] sm:$0xff] 0
        %2683 = vst [vmem:[#allocation3 + $0x8] sm:$0xff] 0
        %2684 = vst [vmem:[#allocation3 + $0x10] sm:$0xff] 0
        %2685 = vst [vmem:[#allocation3 + $0x18] sm:$0xff] 0
        %2686 = vst [vmem:[#allocation3 + $0x20] sm:$0xff] 0
        %2687 = vst [vmem:[#allocation3 + $0x28] sm:$0xff] 0
        %2688 = vst [vmem:[#allocation3 + $0x30] sm:$0xff] 0
        %2689 = vst [vmem:[#allocation3 + $0x38] sm:$0xff] 0
        %2690 = vst [vmem:[#allocation3 + $0x40] sm:$0xff] 0
        %2691 = vst [vmem:[#allocation3 + $0x48] sm:$0xff] 0
        %2692 = vst [vmem:[#allocation3 + $0x50] sm:$0xff] 0
        %2693 = vst [vmem:[#allocation3 + $0x58] sm:$0xff] 0
        %2694 = vst [vmem:[#allocation3 + $0x60] sm:$0xff] 0
        %2695 = vst [vmem:[#allocation3 + $0x68] sm:$0xff] 0
        %2696 = vst [vmem:[#allocation3 + $0x70] sm:$0xff] 0
        %2697 = vst [vmem:[#allocation3 + $0x78] sm:$0xff] 0
        %2698 = vst [vmem:[#allocation3 + $0x80] sm:$0xff] 0
        %2699 = vst [vmem:[#allocation3 + $0x88] sm:$0xff] 0
        %2700 = vst [vmem:[#allocation3 + $0x90] sm:$0xff] 0
        %2701 = vst [vmem:[#allocation3 + $0x98] sm:$0xff] 0
        %2702 = vst [vmem:[#allocation3 + $0xa0] sm:$0xff] 0
        %2703 = vst [vmem:[#allocation3 + $0xa8] sm:$0xff] 0
        %2704 = vst [vmem:[#allocation3 + $0xb0] sm:$0xff] 0
        %2705 = vst [vmem:[#allocation3 + $0xb8] sm:$0xff] 0
        %2706 = vst [vmem:[#allocation3 + $0xc0] sm:$0xff] 0
        %2707 = vst [vmem:[#allocation3 + $0xc8] sm:$0xff] 0
        %2708 = vst [vmem:[#allocation3 + $0xd0] sm:$0xff] 0
        %2709 = vst [vmem:[#allocation3 + $0xd8] sm:$0xff] 0
        %2710 = vst [vmem:[#allocation3 + $0xe0] sm:$0xff] 0
        %2711 = vst [vmem:[#allocation3 + $0xe8] sm:$0xff] 0
        %2712 = vst [vmem:[#allocation3 + $0xf0] sm:$0xff] 0
        %2713 = vst [vmem:[#allocation3 + $0xf8] sm:$0xff] 0
        %2714 = vst [vmem:[#allocation3 + $0x100] sm:$0xff] 0
        %2715 = vst [vmem:[#allocation3 + $0x108] sm:$0xff] 0
        %2716 = vst [vmem:[#allocation3 + $0x110] sm:$0xff] 0
        %2717 = vst [vmem:[#allocation3 + $0x118] sm:$0xff] 0
        %v2718 = vpack.c.bf16 %v2651, %v2650
        %v2719 = vpack.c.bf16 %v2653, %v2652
        %v2720 = vpack.c.bf16 %v2655, %v2654
        %v2721 = vpack.c.bf16 %v2657, %v2656
        %v2722 = vpack.c.bf16 %v2659, %v2658
        %v2723 = vpack.c.bf16 %v2661, %v2660
        %v2724 = vpack.c.bf16 %v2663, %v2662
        %v2725 = vpack.c.bf16 %v2665, %v2664
        %v2726 = vpack.c.bf16 %v2667, %v2666
        %v2727 = vpack.c.bf16 %v2669, %v2668
        %v2728 = vpack.c.bf16 %v2671, %v2670
        %v2729 = vpack.c.bf16 %v2673, %v2672
        %v2730 = vpack.c.bf16 %v2675, %v2674
        %v2731 = vpack.c.bf16 %v2677, %v2676
        %v2732 = vpack.c.bf16 %v2679, %v2678
        %v2733 = vpack.c.bf16 %v2681, %v2680
        %v2750 = vrot.slane %v2718, 4
        %v2751 = vrot.slane %v2719, 4
        %v2752 = vrot.slane %v2720, 4
        %v2753 = vrot.slane %v2721, 4
        %v2754 = vrot.slane %v2722, 4
        %v2755 = vrot.slane %v2723, 4
        %v2756 = vrot.slane %v2724, 4
        %v2757 = vrot.slane %v2725, 4
        %v2758 = vrot.slane %v2726, 4
        %v2759 = vrot.slane %v2727, 4
        %v2760 = vrot.slane %v2728, 4
        %v2761 = vrot.slane %v2729, 4
        %v2762 = vrot.slane %v2730, 4
        %v2763 = vrot.slane %v2731, 4
        %v2764 = vrot.slane %v2732, 4
        %v2765 = vrot.slane %v2733, 4
        %s2782 = scalar_lea.vmem [#allocation3], 16
        %2783 = vst [vmem:[%s2782] sm:$0xf0] %v2750
        %2784 = vst [vmem:[%s2782 + $0x8] sm:$0xf] %v2750
        %2785 = vst [vmem:[%s2782 + $0x10] sm:$0xf0] %v2751
        %2786 = vst [vmem:[%s2782 + $0x18] sm:$0xf] %v2751
        %2787 = vst [vmem:[%s2782 + $0x20] sm:$0xf0] %v2752
        %2788 = vst [vmem:[%s2782 + $0x28] sm:$0xf] %v2752
        %2789 = vst [vmem:[%s2782 + $0x30] sm:$0xf0] %v2753
        %2790 = vst [vmem:[%s2782 + $0x38] sm:$0xf] %v2753
        %2791 = vst [vmem:[%s2782 + $0x40] sm:$0xf0] %v2754
        %2792 = vst [vmem:[%s2782 + $0x48] sm:$0xf] %v2754
        %2793 = vst [vmem:[%s2782 + $0x50] sm:$0xf0] %v2755
        %2794 = vst [vmem:[%s2782 + $0x58] sm:$0xf] %v2755
        %2795 = vst [vmem:[%s2782 + $0x60] sm:$0xf0] %v2756
        %2796 = vst [vmem:[%s2782 + $0x68] sm:$0xf] %v2756
        %2797 = vst [vmem:[%s2782 + $0x70] sm:$0xf0] %v2757
        %2798 = vst [vmem:[%s2782 + $0x78] sm:$0xf] %v2757
        %2799 = vst [vmem:[%s2782 + $0x80] sm:$0xf0] %v2758
        %2800 = vst [vmem:[%s2782 + $0x88] sm:$0xf] %v2758
        %2801 = vst [vmem:[%s2782 + $0x90] sm:$0xf0] %v2759
        %2802 = vst [vmem:[%s2782 + $0x98] sm:$0xf] %v2759
        %2803 = vst [vmem:[%s2782 + $0xa0] sm:$0xf0] %v2760
        %2804 = vst [vmem:[%s2782 + $0xa8] sm:$0xf] %v2760
        %2805 = vst [vmem:[%s2782 + $0xb0] sm:$0xf0] %v2761
        %2806 = vst [vmem:[%s2782 + $0xb8] sm:$0xf] %v2761
        %2807 = vst [vmem:[%s2782 + $0xc0] sm:$0xf0] %v2762
        %2808 = vst [vmem:[%s2782 + $0xc8] sm:$0xf] %v2762
        %2809 = vst [vmem:[%s2782 + $0xd0] sm:$0xf0] %v2763
        %2810 = vst [vmem:[%s2782 + $0xd8] sm:$0xf] %v2763
        %2811 = vst [vmem:[%s2782 + $0xe0] sm:$0xf0] %v2764
        %2812 = vst [vmem:[%s2782 + $0xe8] sm:$0xf] %v2764
        %2813 = vst [vmem:[%s2782 + $0xf0] sm:$0xf0] %v2765
        %2814 = vst [vmem:[%s2782 + $0xf8] sm:$0xf] %v2765
        %v2815 = vld [vmem:[#allocation3] sm:$0xf8]
        %v2816 = vld [vmem:[#allocation3 + $0x8] sm:$0xf]
        %v2817 = vld [vmem:[#allocation3 + $0x10] sm:$0xf8]
        %v2818 = vld [vmem:[#allocation3 + $0x18] sm:$0xf]
        %v2819 = vld [vmem:[#allocation3 + $0x20] sm:$0xf8]
        %v2820 = vld [vmem:[#allocation3 + $0x28] sm:$0xf]
        %v2821 = vld [vmem:[#allocation3 + $0x30] sm:$0xf8]
        %v2822 = vld [vmem:[#allocation3 + $0x38] sm:$0xf]
        %v2823 = vld [vmem:[#allocation3 + $0x40] sm:$0xf8]
        %v2824 = vld [vmem:[#allocation3 + $0x48] sm:$0xf]
        %v2825 = vld [vmem:[#allocation3 + $0x50] sm:$0xf8]
        %v2826 = vld [vmem:[#allocation3 + $0x58] sm:$0xf]
        %v2827 = vld [vmem:[#allocation3 + $0x60] sm:$0xf8]
        %v2828 = vld [vmem:[#allocation3 + $0x68] sm:$0xf]
        %v2829 = vld [vmem:[#allocation3 + $0x70] sm:$0xf8]
        %v2830 = vld [vmem:[#allocation3 + $0x78] sm:$0xf]
        %v2831 = vld [vmem:[#allocation3 + $0x80] sm:$0xf8]
        %v2832 = vld [vmem:[#allocation3 + $0x88] sm:$0xf]
        %v2833 = vld [vmem:[#allocation3 + $0x90] sm:$0xf8]
        %v2834 = vld [vmem:[#allocation3 + $0x98] sm:$0xf]
        %v2835 = vld [vmem:[#allocation3 + $0xa0] sm:$0xf8]
        %v2836 = vld [vmem:[#allocation3 + $0xa8] sm:$0xf]
        %v2837 = vld [vmem:[#allocation3 + $0xb0] sm:$0xf8]
        %v2838 = vld [vmem:[#allocation3 + $0xb8] sm:$0xf]
        %v2839 = vld [vmem:[#allocation3 + $0xc0] sm:$0xf8]
        %v2840 = vld [vmem:[#allocation3 + $0xc8] sm:$0xf]
        %v2841 = vld [vmem:[#allocation3 + $0xd0] sm:$0xf8]
        %v2842 = vld [vmem:[#allocation3 + $0xd8] sm:$0xf]
        %v2843 = vld [vmem:[#allocation3 + $0xe0] sm:$0xf8]
        %v2844 = vld [vmem:[#allocation3 + $0xe8] sm:$0xf]
        %v2845 = vld [vmem:[#allocation3 + $0xf0] sm:$0xf8]
        %v2846 = vld [vmem:[#allocation3 + $0xf8] sm:$0xf]
        %v2847 = vld [vmem:[#allocation3 + $0x100] sm:$0xf8]
        %v2848 = vld [vmem:[#allocation3 + $0x108] sm:$0xf]
        %v2849 = vld [vmem:[#allocation3 + $0x110] sm:$0xf8]
        %v2850 = vld [vmem:[#allocation3 + $0x118] sm:$0xf]
        %v2851 = vld [vmem:[#allocation3] sm:$0xf0]
        %v2852 = vld [vmem:[#allocation3 + $0x10] sm:$0xf0]
        %v2853 = vld [vmem:[#allocation3 + $0x20] sm:$0xf0]
        %v2854 = vld [vmem:[#allocation3 + $0x30] sm:$0xf0]
        %v2855 = vld [vmem:[#allocation3 + $0x40] sm:$0xf0]
        %v2856 = vld [vmem:[#allocation3 + $0x50] sm:$0xf0]
        %v2857 = vld [vmem:[#allocation3 + $0x60] sm:$0xf0]
        %v2858 = vld [vmem:[#allocation3 + $0x70] sm:$0xf0]
        %v2859 = vld [vmem:[#allocation3 + $0x80] sm:$0xf0]
        %v2860 = vld [vmem:[#allocation3 + $0x90] sm:$0xf0]
        %v2861 = vld [vmem:[#allocation3 + $0xa0] sm:$0xf0]
        %v2862 = vld [vmem:[#allocation3 + $0xb0] sm:$0xf0]
        %v2863 = vld [vmem:[#allocation3 + $0xc0] sm:$0xf0]
        %v2864 = vld [vmem:[#allocation3 + $0xd0] sm:$0xf0]
        %v2865 = vld [vmem:[#allocation3 + $0xe0] sm:$0xf0]
        %v2866 = vld [vmem:[#allocation3 + $0xf0] sm:$0xf0]
        %v2867 = vld [vmem:[#allocation3 + $0x100] sm:$0xf0]
        %v2868 = vld [vmem:[#allocation3 + $0x110] sm:$0xf0]
        %v2869 = vld [vmem:[#allocation3 + $0x8] sm:$0x1f]
        %v2870 = vld [vmem:[#allocation3 + $0x18] sm:$0x1f]
        %v2871 = vld [vmem:[#allocation3 + $0x28] sm:$0x1f]
        %v2872 = vld [vmem:[#allocation3 + $0x38] sm:$0x1f]
        %v2873 = vld [vmem:[#allocation3 + $0x48] sm:$0x1f]
        %v2874 = vld [vmem:[#allocation3 + $0x58] sm:$0x1f]
        %v2875 = vld [vmem:[#allocation3 + $0x68] sm:$0x1f]
        %v2876 = vld [vmem:[#allocation3 + $0x78] sm:$0x1f]
        %v2877 = vld [vmem:[#allocation3 + $0x88] sm:$0x1f]
        %v2878 = vld [vmem:[#allocation3 + $0x98] sm:$0x1f]
        %v2879 = vld [vmem:[#allocation3 + $0xa8] sm:$0x1f]
        %v2880 = vld [vmem:[#allocation3 + $0xb8] sm:$0x1f]
        %v2881 = vld [vmem:[#allocation3 + $0xc8] sm:$0x1f]
        %v2882 = vld [vmem:[#allocation3 + $0xd8] sm:$0x1f]
        %v2883 = vld [vmem:[#allocation3 + $0xe8] sm:$0x1f]
        %v2884 = vld [vmem:[#allocation3 + $0xf8] sm:$0x1f]
        %v2885 = vld [vmem:[#allocation3 + $0x108] sm:$0x1f]
        %v2886 = vld [vmem:[#allocation3 + $0x118] sm:$0x1f]
        %v2888 = vshrl.u32 %v2851, 16
        %v2890 = vshll.u32 %v2851, 16
        %v2892 = vrot.slane %v2890, 1
        %v2893 = vor.u32 %v2888, %v2892
        %v2895 = vshll.u32 %v2816, 16
        %v2897 = vrot.slane %v2895, 1
        %v2898 = vsel %vm473, %v2893, %v2897
        %v2899 = vshrl.u32 %v2816, 16
        %v2901 = vor.u32 %v2899, %v2897
        %v2903 = vshrl.u32 %v2852, 16
        %v2905 = vshll.u32 %v2852, 16
        %v2907 = vrot.slane %v2905, 1
        %v2908 = vor.u32 %v2903, %v2907
        %v2910 = vshll.u32 %v2818, 16
        %v2912 = vrot.slane %v2910, 1
        %v2913 = vsel %vm473, %v2908, %v2912
        %v2914 = vshrl.u32 %v2818, 16
        %v2916 = vor.u32 %v2914, %v2912
        %v2918 = vshrl.u32 %v2853, 16
        %v2920 = vshll.u32 %v2853, 16
        %v2922 = vrot.slane %v2920, 1
        %v2923 = vor.u32 %v2918, %v2922
        %v2925 = vshll.u32 %v2820, 16
        %v2927 = vrot.slane %v2925, 1
        %v2928 = vsel %vm473, %v2923, %v2927
        %v2929 = vshrl.u32 %v2820, 16
        %v2931 = vor.u32 %v2929, %v2927
        %v2933 = vshrl.u32 %v2854, 16
        %v2935 = vshll.u32 %v2854, 16
        %v2937 = vrot.slane %v2935, 1
        %v2938 = vor.u32 %v2933, %v2937
        %v2940 = vshll.u32 %v2822, 16
        %v2942 = vrot.slane %v2940, 1
        %v2943 = vsel %vm473, %v2938, %v2942
        %v2944 = vshrl.u32 %v2822, 16
        %v2946 = vor.u32 %v2944, %v2942
        %v2948 = vshrl.u32 %v2855, 16
        %v2950 = vshll.u32 %v2855, 16
        %v2952 = vrot.slane %v2950, 1
        %v2953 = vor.u32 %v2948, %v2952
        %v2955 = vshll.u32 %v2824, 16
        %v2957 = vrot.slane %v2955, 1
        %v2958 = vsel %vm473, %v2953, %v2957
        %v2959 = vshrl.u32 %v2824, 16
        %v2961 = vor.u32 %v2959, %v2957
        %v2963 = vshrl.u32 %v2856, 16
        %v2965 = vshll.u32 %v2856, 16
        %v2967 = vrot.slane %v2965, 1
        %v2968 = vor.u32 %v2963, %v2967
        %v2970 = vshll.u32 %v2826, 16
        %v2972 = vrot.slane %v2970, 1
        %v2973 = vsel %vm473, %v2968, %v2972
        %v2974 = vshrl.u32 %v2826, 16
        %v2976 = vor.u32 %v2974, %v2972
        %v2978 = vshrl.u32 %v2857, 16
        %v2980 = vshll.u32 %v2857, 16
        %v2982 = vrot.slane %v2980, 1
        %v2983 = vor.u32 %v2978, %v2982
        %v2985 = vshll.u32 %v2828, 16
        %v2987 = vrot.slane %v2985, 1
        %v2988 = vsel %vm473, %v2983, %v2987
        %v2989 = vshrl.u32 %v2828, 16
        %v2991 = vor.u32 %v2989, %v2987
        %v2993 = vshrl.u32 %v2858, 16
        %v2995 = vshll.u32 %v2858, 16
        %v2997 = vrot.slane %v2995, 1
        %v2998 = vor.u32 %v2993, %v2997
        %v3000 = vshll.u32 %v2830, 16
        %v3002 = vrot.slane %v3000, 1
        %v3003 = vsel %vm473, %v2998, %v3002
        %v3004 = vshrl.u32 %v2830, 16
        %v3006 = vor.u32 %v3004, %v3002
        %v3008 = vshrl.u32 %v2859, 16
        %v3010 = vshll.u32 %v2859, 16
        %v3012 = vrot.slane %v3010, 1
        %v3013 = vor.u32 %v3008, %v3012
        %v3015 = vshll.u32 %v2832, 16
        %v3017 = vrot.slane %v3015, 1
        %v3018 = vsel %vm473, %v3013, %v3017
        %v3019 = vshrl.u32 %v2832, 16
        %v3021 = vor.u32 %v3019, %v3017
        %v3023 = vshrl.u32 %v2860, 16
        %v3025 = vshll.u32 %v2860, 16
        %v3027 = vrot.slane %v3025, 1
        %v3028 = vor.u32 %v3023, %v3027
        %v3030 = vshll.u32 %v2834, 16
        %v3032 = vrot.slane %v3030, 1
        %v3033 = vsel %vm473, %v3028, %v3032
        %v3034 = vshrl.u32 %v2834, 16
        %v3036 = vor.u32 %v3034, %v3032
        %v3038 = vshrl.u32 %v2861, 16
        %v3040 = vshll.u32 %v2861, 16
        %v3042 = vrot.slane %v3040, 1
        %v3043 = vor.u32 %v3038, %v3042
        %v3045 = vshll.u32 %v2836, 16
        %v3047 = vrot.slane %v3045, 1
        %v3048 = vsel %vm473, %v3043, %v3047
        %v3049 = vshrl.u32 %v2836, 16
        %v3051 = vor.u32 %v3049, %v3047
        %v3053 = vshrl.u32 %v2862, 16
        %v3055 = vshll.u32 %v2862, 16
        %v3057 = vrot.slane %v3055, 1
        %v3058 = vor.u32 %v3053, %v3057
        %v3060 = vshll.u32 %v2838, 16
        %v3062 = vrot.slane %v3060, 1
        %v3063 = vsel %vm473, %v3058, %v3062
        %v3064 = vshrl.u32 %v2838, 16
        %v3066 = vor.u32 %v3064, %v3062
        %v3068 = vshrl.u32 %v2863, 16
        %v3070 = vshll.u32 %v2863, 16
        %v3072 = vrot.slane %v3070, 1
        %v3073 = vor.u32 %v3068, %v3072
        %v3075 = vshll.u32 %v2840, 16
        %v3077 = vrot.slane %v3075, 1
        %v3078 = vsel %vm473, %v3073, %v3077
        %v3079 = vshrl.u32 %v2840, 16
        %v3081 = vor.u32 %v3079, %v3077
        %v3083 = vshrl.u32 %v2864, 16
        %v3085 = vshll.u32 %v2864, 16
        %v3087 = vrot.slane %v3085, 1
        %v3088 = vor.u32 %v3083, %v3087
        %v3090 = vshll.u32 %v2842, 16
        %v3092 = vrot.slane %v3090, 1
        %v3093 = vsel %vm473, %v3088, %v3092
        %v3094 = vshrl.u32 %v2842, 16
        %v3096 = vor.u32 %v3094, %v3092
        %v3098 = vshrl.u32 %v2865, 16
        %v3100 = vshll.u32 %v2865, 16
        %v3102 = vrot.slane %v3100, 1
        %v3103 = vor.u32 %v3098, %v3102
        %v3105 = vshll.u32 %v2844, 16
        %v3107 = vrot.slane %v3105, 1
        %v3108 = vsel %vm473, %v3103, %v3107
        %v3109 = vshrl.u32 %v2844, 16
        %v3111 = vor.u32 %v3109, %v3107
        %v3113 = vshrl.u32 %v2866, 16
        %v3115 = vshll.u32 %v2866, 16
        %v3117 = vrot.slane %v3115, 1
        %v3118 = vor.u32 %v3113, %v3117
        %v3120 = vshll.u32 %v2846, 16
        %v3122 = vrot.slane %v3120, 1
        %v3123 = vsel %vm473, %v3118, %v3122
        %v3124 = vshrl.u32 %v2846, 16
        %v3126 = vor.u32 %v3124, %v3122
        %v3128 = vshrl.u32 %v2867, 16
        %v3130 = vshll.u32 %v2867, 16
        %v3132 = vrot.slane %v3130, 1
        %v3133 = vor.u32 %v3128, %v3132
        %v3135 = vshll.u32 %v2848, 16
        %v3137 = vrot.slane %v3135, 1
        %v3138 = vsel %vm473, %v3133, %v3137
        %v3139 = vshrl.u32 %v2848, 16
        %v3141 = vor.u32 %v3139, %v3137
        %v3143 = vshrl.u32 %v2868, 16
        %v3145 = vshll.u32 %v2868, 16
        %v3147 = vrot.slane %v3145, 1
        %v3148 = vor.u32 %v3143, %v3147
        %v3150 = vshll.u32 %v2850, 16
        %v3152 = vrot.slane %v3150, 1
        %v3153 = vsel %vm473, %v3148, %v3152
        %v3154 = vshrl.u32 %v2850, 16
        %v3156 = vor.u32 %v3154, %v3152
        %v3193 = vrot.slane %v2851, 1
        %v3194 = vrot.slane %v2869, 1
        %v3195 = vsel %vm762, %v3193, %v3194
        %v3196 = vrot.slane %v2852, 1
        %v3197 = vrot.slane %v2870, 1
        %v3198 = vsel %vm762, %v3196, %v3197
        %v3199 = vrot.slane %v2853, 1
        %v3200 = vrot.slane %v2871, 1
        %v3201 = vsel %vm762, %v3199, %v3200
        %v3202 = vrot.slane %v2854, 1
        %v3203 = vrot.slane %v2872, 1
        %v3204 = vsel %vm762, %v3202, %v3203
        %v3205 = vrot.slane %v2855, 1
        %v3206 = vrot.slane %v2873, 1
        %v3207 = vsel %vm762, %v3205, %v3206
        %v3208 = vrot.slane %v2856, 1
        %v3209 = vrot.slane %v2874, 1
        %v3210 = vsel %vm762, %v3208, %v3209
        %v3211 = vrot.slane %v2857, 1
        %v3212 = vrot.slane %v2875, 1
        %v3213 = vsel %vm762, %v3211, %v3212
        %v3214 = vrot.slane %v2858, 1
        %v3215 = vrot.slane %v2876, 1
        %v3216 = vsel %vm762, %v3214, %v3215
        %v3217 = vrot.slane %v2859, 1
        %v3218 = vrot.slane %v2877, 1
        %v3219 = vsel %vm762, %v3217, %v3218
        %v3220 = vrot.slane %v2860, 1
        %v3221 = vrot.slane %v2878, 1
        %v3222 = vsel %vm762, %v3220, %v3221
        %v3223 = vrot.slane %v2861, 1
        %v3224 = vrot.slane %v2879, 1
        %v3225 = vsel %vm762, %v3223, %v3224
        %v3226 = vrot.slane %v2862, 1
        %v3227 = vrot.slane %v2880, 1
        %v3228 = vsel %vm762, %v3226, %v3227
        %v3229 = vrot.slane %v2863, 1
        %v3230 = vrot.slane %v2881, 1
        %v3231 = vsel %vm762, %v3229, %v3230
        %v3232 = vrot.slane %v2864, 1
        %v3233 = vrot.slane %v2882, 1
        %v3234 = vsel %vm762, %v3232, %v3233
        %v3235 = vrot.slane %v2865, 1
        %v3236 = vrot.slane %v2883, 1
        %v3237 = vsel %vm762, %v3235, %v3236
        %v3238 = vrot.slane %v2866, 1
        %v3239 = vrot.slane %v2884, 1
        %v3240 = vsel %vm762, %v3238, %v3239
        %v3241 = vrot.slane %v2867, 1
        %v3242 = vrot.slane %v2885, 1
        %v3243 = vsel %vm762, %v3241, %v3242
        %v3244 = vrot.slane %v2868, 1
        %v3245 = vrot.slane %v2886, 1
        %v3246 = vsel %vm762, %v3244, %v3245
        %vm3247 = vsmask.f32 4352
        %v3249 = vshrl.u32 %v2815, 16
        %v3251 = vrot.slane %v3249, 3
        %v3252 = vshll.u32 %v2815, 16
        %v3254 = vrot.slane %v3252, 4
        %v3255 = vor.u32 %v3251, %v3254
        %v3256 = vrot.slane %v2899, 3
        %v3257 = vrot.slane %v2895, 4
        %v3258 = vor.u32 %v3256, %v3257
        %v3259 = vsel %vm3247, %v3255, %v3258
        %v3261 = vshrl.u32 %v2898, 16
        %v3263 = vrot.slane %v3261, 3
        %v3264 = vshll.u32 %v2898, 16
        %v3266 = vrot.slane %v3264, 4
        %v3267 = vor.u32 %v3263, %v3266
        %v3269 = vshrl.u32 %v2901, 16
        %v3271 = vrot.slane %v3269, 3
        %v3272 = vshll.u32 %v2901, 16
        %v3274 = vrot.slane %v3272, 4
        %v3275 = vor.u32 %v3271, %v3274
        %v3276 = vsel %vm3247, %v3267, %v3275
        %v3278 = vshrl.u32 %v3195, 16
        %v3280 = vrot.slane %v3278, 3
        %v3281 = vshll.u32 %v3195, 16
        %v3283 = vrot.slane %v3281, 4
        %v3284 = vor.u32 %v3280, %v3283
        %v3286 = vshrl.u32 %v3194, 16
        %v3288 = vrot.slane %v3286, 3
        %v3289 = vshll.u32 %v3194, 16
        %v3291 = vrot.slane %v3289, 4
        %v3292 = vor.u32 %v3288, %v3291
        %v3293 = vsel %vm3247, %v3284, %v3292
        %v3295 = vshrl.u32 %v2817, 16
        %v3297 = vrot.slane %v3295, 3
        %v3298 = vshll.u32 %v2817, 16
        %v3300 = vrot.slane %v3298, 4
        %v3301 = vor.u32 %v3297, %v3300
        %v3302 = vrot.slane %v2914, 3
        %v3303 = vrot.slane %v2910, 4
        %v3304 = vor.u32 %v3302, %v3303
        %v3305 = vsel %vm3247, %v3301, %v3304
        %v3307 = vshrl.u32 %v2913, 16
        %v3309 = vrot.slane %v3307, 3
        %v3310 = vshll.u32 %v2913, 16
        %v3312 = vrot.slane %v3310, 4
        %v3313 = vor.u32 %v3309, %v3312
        %v3315 = vshrl.u32 %v2916, 16
        %v3317 = vrot.slane %v3315, 3
        %v3318 = vshll.u32 %v2916, 16
        %v3320 = vrot.slane %v3318, 4
        %v3321 = vor.u32 %v3317, %v3320
        %v3322 = vsel %vm3247, %v3313, %v3321
        %v3324 = vshrl.u32 %v3198, 16
        %v3326 = vrot.slane %v3324, 3
        %v3327 = vshll.u32 %v3198, 16
        %v3329 = vrot.slane %v3327, 4
        %v3330 = vor.u32 %v3326, %v3329
        %v3332 = vshrl.u32 %v3197, 16
        %v3334 = vrot.slane %v3332, 3
        %v3335 = vshll.u32 %v3197, 16
        %v3337 = vrot.slane %v3335, 4
        %v3338 = vor.u32 %v3334, %v3337
        %v3339 = vsel %vm3247, %v3330, %v3338
        %v3341 = vshrl.u32 %v2819, 16
        %v3343 = vrot.slane %v3341, 3
        %v3344 = vshll.u32 %v2819, 16
        %v3346 = vrot.slane %v3344, 4
        %v3347 = vor.u32 %v3343, %v3346
        %v3348 = vrot.slane %v2929, 3
        %v3349 = vrot.slane %v2925, 4
        %v3350 = vor.u32 %v3348, %v3349
        %v3351 = vsel %vm3247, %v3347, %v3350
        %v3353 = vshrl.u32 %v2928, 16
        %v3355 = vrot.slane %v3353, 3
        %v3356 = vshll.u32 %v2928, 16
        %v3358 = vrot.slane %v3356, 4
        %v3359 = vor.u32 %v3355, %v3358
        %v3361 = vshrl.u32 %v2931, 16
        %v3363 = vrot.slane %v3361, 3
        %v3364 = vshll.u32 %v2931, 16
        %v3366 = vrot.slane %v3364, 4
        %v3367 = vor.u32 %v3363, %v3366
        %v3368 = vsel %vm3247, %v3359, %v3367
        %v3370 = vshrl.u32 %v3201, 16
        %v3372 = vrot.slane %v3370, 3
        %v3373 = vshll.u32 %v3201, 16
        %v3375 = vrot.slane %v3373, 4
        %v3376 = vor.u32 %v3372, %v3375
        %v3378 = vshrl.u32 %v3200, 16
        %v3380 = vrot.slane %v3378, 3
        %v3381 = vshll.u32 %v3200, 16
        %v3383 = vrot.slane %v3381, 4
        %v3384 = vor.u32 %v3380, %v3383
        %v3385 = vsel %vm3247, %v3376, %v3384
        %v3387 = vshrl.u32 %v2821, 16
        %v3389 = vrot.slane %v3387, 3
        %v3390 = vshll.u32 %v2821, 16
        %v3392 = vrot.slane %v3390, 4
        %v3393 = vor.u32 %v3389, %v3392
        %v3394 = vrot.slane %v2944, 3
        %v3395 = vrot.slane %v2940, 4
        %v3396 = vor.u32 %v3394, %v3395
        %v3397 = vsel %vm3247, %v3393, %v3396
        %v3399 = vshrl.u32 %v2943, 16
        %v3401 = vrot.slane %v3399, 3
        %v3402 = vshll.u32 %v2943, 16
        %v3404 = vrot.slane %v3402, 4
        %v3405 = vor.u32 %v3401, %v3404
        %v3407 = vshrl.u32 %v2946, 16
        %v3409 = vrot.slane %v3407, 3
        %v3410 = vshll.u32 %v2946, 16
        %v3412 = vrot.slane %v3410, 4
        %v3413 = vor.u32 %v3409, %v3412
        %v3414 = vsel %vm3247, %v3405, %v3413
        %v3416 = vshrl.u32 %v3204, 16
        %v3418 = vrot.slane %v3416, 3
        %v3419 = vshll.u32 %v3204, 16
        %v3421 = vrot.slane %v3419, 4
        %v3422 = vor.u32 %v3418, %v3421
        %v3424 = vshrl.u32 %v3203, 16
        %v3426 = vrot.slane %v3424, 3
        %v3427 = vshll.u32 %v3203, 16
        %v3429 = vrot.slane %v3427, 4
        %v3430 = vor.u32 %v3426, %v3429
        %v3431 = vsel %vm3247, %v3422, %v3430
        %v3433 = vshrl.u32 %v2823, 16
        %v3435 = vrot.slane %v3433, 3
        %v3436 = vshll.u32 %v2823, 16
        %v3438 = vrot.slane %v3436, 4
        %v3439 = vor.u32 %v3435, %v3438
        %v3440 = vrot.slane %v2959, 3
        %v3441 = vrot.slane %v2955, 4
        %v3442 = vor.u32 %v3440, %v3441
        %v3443 = vsel %vm3247, %v3439, %v3442
        %v3445 = vshrl.u32 %v2958, 16
        %v3447 = vrot.slane %v3445, 3
        %v3448 = vshll.u32 %v2958, 16
        %v3450 = vrot.slane %v3448, 4
        %v3451 = vor.u32 %v3447, %v3450
        %v3453 = vshrl.u32 %v2961, 16
        %v3455 = vrot.slane %v3453, 3
        %v3456 = vshll.u32 %v2961, 16
        %v3458 = vrot.slane %v3456, 4
        %v3459 = vor.u32 %v3455, %v3458
        %v3460 = vsel %vm3247, %v3451, %v3459
        %v3462 = vshrl.u32 %v3207, 16
        %v3464 = vrot.slane %v3462, 3
        %v3465 = vshll.u32 %v3207, 16
        %v3467 = vrot.slane %v3465, 4
        %v3468 = vor.u32 %v3464, %v3467
        %v3470 = vshrl.u32 %v3206, 16
        %v3472 = vrot.slane %v3470, 3
        %v3473 = vshll.u32 %v3206, 16
        %v3475 = vrot.slane %v3473, 4
        %v3476 = vor.u32 %v3472, %v3475
        %v3477 = vsel %vm3247, %v3468, %v3476
        %v3479 = vshrl.u32 %v2825, 16
        %v3481 = vrot.slane %v3479, 3
        %v3482 = vshll.u32 %v2825, 16
        %v3484 = vrot.slane %v3482, 4
        %v3485 = vor.u32 %v3481, %v3484
        %v3486 = vrot.slane %v2974, 3
        %v3487 = vrot.slane %v2970, 4
        %v3488 = vor.u32 %v3486, %v3487
        %v3489 = vsel %vm3247, %v3485, %v3488
        %v3491 = vshrl.u32 %v2973, 16
        %v3493 = vrot.slane %v3491, 3
        %v3494 = vshll.u32 %v2973, 16
        %v3496 = vrot.slane %v3494, 4
        %v3497 = vor.u32 %v3493, %v3496
        %v3499 = vshrl.u32 %v2976, 16
        %v3501 = vrot.slane %v3499, 3
        %v3502 = vshll.u32 %v2976, 16
        %v3504 = vrot.slane %v3502, 4
        %v3505 = vor.u32 %v3501, %v3504
        %v3506 = vsel %vm3247, %v3497, %v3505
        %v3508 = vshrl.u32 %v3210, 16
        %v3510 = vrot.slane %v3508, 3
        %v3511 = vshll.u32 %v3210, 16
        %v3513 = vrot.slane %v3511, 4
        %v3514 = vor.u32 %v3510, %v3513
        %v3516 = vshrl.u32 %v3209, 16
        %v3518 = vrot.slane %v3516, 3
        %v3519 = vshll.u32 %v3209, 16
        %v3521 = vrot.slane %v3519, 4
        %v3522 = vor.u32 %v3518, %v3521
        %v3523 = vsel %vm3247, %v3514, %v3522
        %v3525 = vshrl.u32 %v2827, 16
        %v3527 = vrot.slane %v3525, 3
        %v3528 = vshll.u32 %v2827, 16
        %v3530 = vrot.slane %v3528, 4
        %v3531 = vor.u32 %v3527, %v3530
        %v3532 = vrot.slane %v2989, 3
        %v3533 = vrot.slane %v2985, 4
        %v3534 = vor.u32 %v3532, %v3533
        %v3535 = vsel %vm3247, %v3531, %v3534
        %v3537 = vshrl.u32 %v2988, 16
        %v3539 = vrot.slane %v3537, 3
        %v3540 = vshll.u32 %v2988, 16
        %v3542 = vrot.slane %v3540, 4
        %v3543 = vor.u32 %v3539, %v3542
        %v3545 = vshrl.u32 %v2991, 16
        %v3547 = vrot.slane %v3545, 3
        %v3548 = vshll.u32 %v2991, 16
        %v3550 = vrot.slane %v3548, 4
        %v3551 = vor.u32 %v3547, %v3550
        %v3552 = vsel %vm3247, %v3543, %v3551
        %v3554 = vshrl.u32 %v3213, 16
        %v3556 = vrot.slane %v3554, 3
        %v3557 = vshll.u32 %v3213, 16
        %v3559 = vrot.slane %v3557, 4
        %v3560 = vor.u32 %v3556, %v3559
        %v3562 = vshrl.u32 %v3212, 16
        %v3564 = vrot.slane %v3562, 3
        %v3565 = vshll.u32 %v3212, 16
        %v3567 = vrot.slane %v3565, 4
        %v3568 = vor.u32 %v3564, %v3567
        %v3569 = vsel %vm3247, %v3560, %v3568
        %v3571 = vshrl.u32 %v2829, 16
        %v3573 = vrot.slane %v3571, 3
        %v3574 = vshll.u32 %v2829, 16
        %v3576 = vrot.slane %v3574, 4
        %v3577 = vor.u32 %v3573, %v3576
        %v3578 = vrot.slane %v3004, 3
        %v3579 = vrot.slane %v3000, 4
        %v3580 = vor.u32 %v3578, %v3579
        %v3581 = vsel %vm3247, %v3577, %v3580
        %v3583 = vshrl.u32 %v3003, 16
        %v3585 = vrot.slane %v3583, 3
        %v3586 = vshll.u32 %v3003, 16
        %v3588 = vrot.slane %v3586, 4
        %v3589 = vor.u32 %v3585, %v3588
        %v3591 = vshrl.u32 %v3006, 16
        %v3593 = vrot.slane %v3591, 3
        %v3594 = vshll.u32 %v3006, 16
        %v3596 = vrot.slane %v3594, 4
        %v3597 = vor.u32 %v3593, %v3596
        %v3598 = vsel %vm3247, %v3589, %v3597
        %v3600 = vshrl.u32 %v3216, 16
        %v3602 = vrot.slane %v3600, 3
        %v3603 = vshll.u32 %v3216, 16
        %v3605 = vrot.slane %v3603, 4
        %v3606 = vor.u32 %v3602, %v3605
        %v3608 = vshrl.u32 %v3215, 16
        %v3610 = vrot.slane %v3608, 3
        %v3611 = vshll.u32 %v3215, 16
        %v3613 = vrot.slane %v3611, 4
        %v3614 = vor.u32 %v3610, %v3613
        %v3615 = vsel %vm3247, %v3606, %v3614
        %v3617 = vshrl.u32 %v2831, 16
        %v3619 = vrot.slane %v3617, 3
        %v3620 = vshll.u32 %v2831, 16
        %v3622 = vrot.slane %v3620, 4
        %v3623 = vor.u32 %v3619, %v3622
        %v3624 = vrot.slane %v3019, 3
        %v3625 = vrot.slane %v3015, 4
        %v3626 = vor.u32 %v3624, %v3625
        %v3627 = vsel %vm3247, %v3623, %v3626
        %v3629 = vshrl.u32 %v3018, 16
        %v3631 = vrot.slane %v3629, 3
        %v3632 = vshll.u32 %v3018, 16
        %v3634 = vrot.slane %v3632, 4
        %v3635 = vor.u32 %v3631, %v3634
        %v3637 = vshrl.u32 %v3021, 16
        %v3639 = vrot.slane %v3637, 3
        %v3640 = vshll.u32 %v3021, 16
        %v3642 = vrot.slane %v3640, 4
        %v3643 = vor.u32 %v3639, %v3642
        %v3644 = vsel %vm3247, %v3635, %v3643
        %v3646 = vshrl.u32 %v3219, 16
        %v3648 = vrot.slane %v3646, 3
        %v3649 = vshll.u32 %v3219, 16
        %v3651 = vrot.slane %v3649, 4
        %v3652 = vor.u32 %v3648, %v3651
        %v3654 = vshrl.u32 %v3218, 16
        %v3656 = vrot.slane %v3654, 3
        %v3657 = vshll.u32 %v3218, 16
        %v3659 = vrot.slane %v3657, 4
        %v3660 = vor.u32 %v3656, %v3659
        %v3661 = vsel %vm3247, %v3652, %v3660
        %v3663 = vshrl.u32 %v2833, 16
        %v3665 = vrot.slane %v3663, 3
        %v3666 = vshll.u32 %v2833, 16
        %v3668 = vrot.slane %v3666, 4
        %v3669 = vor.u32 %v3665, %v3668
        %v3670 = vrot.slane %v3034, 3
        %v3671 = vrot.slane %v3030, 4
        %v3672 = vor.u32 %v3670, %v3671
        %v3673 = vsel %vm3247, %v3669, %v3672
        %v3675 = vshrl.u32 %v3033, 16
        %v3677 = vrot.slane %v3675, 3
        %v3678 = vshll.u32 %v3033, 16
        %v3680 = vrot.slane %v3678, 4
        %v3681 = vor.u32 %v3677, %v3680
        %v3683 = vshrl.u32 %v3036, 16
        %v3685 = vrot.slane %v3683, 3
        %v3686 = vshll.u32 %v3036, 16
        %v3688 = vrot.slane %v3686, 4
        %v3689 = vor.u32 %v3685, %v3688
        %v3690 = vsel %vm3247, %v3681, %v3689
        %v3692 = vshrl.u32 %v3222, 16
        %v3694 = vrot.slane %v3692, 3
        %v3695 = vshll.u32 %v3222, 16
        %v3697 = vrot.slane %v3695, 4
        %v3698 = vor.u32 %v3694, %v3697
        %v3700 = vshrl.u32 %v3221, 16
        %v3702 = vrot.slane %v3700, 3
        %v3703 = vshll.u32 %v3221, 16
        %v3705 = vrot.slane %v3703, 4
        %v3706 = vor.u32 %v3702, %v3705
        %v3707 = vsel %vm3247, %v3698, %v3706
        %v3709 = vshrl.u32 %v2835, 16
        %v3711 = vrot.slane %v3709, 3
        %v3712 = vshll.u32 %v2835, 16
        %v3714 = vrot.slane %v3712, 4
        %v3715 = vor.u32 %v3711, %v3714
        %v3716 = vrot.slane %v3049, 3
        %v3717 = vrot.slane %v3045, 4
        %v3718 = vor.u32 %v3716, %v3717
        %v3719 = vsel %vm3247, %v3715, %v3718
        %v3721 = vshrl.u32 %v3048, 16
        %v3723 = vrot.slane %v3721, 3
        %v3724 = vshll.u32 %v3048, 16
        %v3726 = vrot.slane %v3724, 4
        %v3727 = vor.u32 %v3723, %v3726
        %v3729 = vshrl.u32 %v3051, 16
        %v3731 = vrot.slane %v3729, 3
        %v3732 = vshll.u32 %v3051, 16
        %v3734 = vrot.slane %v3732, 4
        %v3735 = vor.u32 %v3731, %v3734
        %v3736 = vsel %vm3247, %v3727, %v3735
        %v3738 = vshrl.u32 %v3225, 16
        %v3740 = vrot.slane %v3738, 3
        %v3741 = vshll.u32 %v3225, 16
        %v3743 = vrot.slane %v3741, 4
        %v3744 = vor.u32 %v3740, %v3743
        %v3746 = vshrl.u32 %v3224, 16
        %v3748 = vrot.slane %v3746, 3
        %v3749 = vshll.u32 %v3224, 16
        %v3751 = vrot.slane %v3749, 4
        %v3752 = vor.u32 %v3748, %v3751
        %v3753 = vsel %vm3247, %v3744, %v3752
        %v3755 = vshrl.u32 %v2837, 16
        %v3757 = vrot.slane %v3755, 3
        %v3758 = vshll.u32 %v2837, 16
        %v3760 = vrot.slane %v3758, 4
        %v3761 = vor.u32 %v3757, %v3760
        %v3762 = vrot.slane %v3064, 3
        %v3763 = vrot.slane %v3060, 4
        %v3764 = vor.u32 %v3762, %v3763
        %v3765 = vsel %vm3247, %v3761, %v3764
        %v3767 = vshrl.u32 %v3063, 16
        %v3769 = vrot.slane %v3767, 3
        %v3770 = vshll.u32 %v3063, 16
        %v3772 = vrot.slane %v3770, 4
        %v3773 = vor.u32 %v3769, %v3772
        %v3775 = vshrl.u32 %v3066, 16
        %v3777 = vrot.slane %v3775, 3
        %v3778 = vshll.u32 %v3066, 16
        %v3780 = vrot.slane %v3778, 4
        %v3781 = vor.u32 %v3777, %v3780
        %v3782 = vsel %vm3247, %v3773, %v3781
        %v3784 = vshrl.u32 %v3228, 16
        %v3786 = vrot.slane %v3784, 3
        %v3787 = vshll.u32 %v3228, 16
        %v3789 = vrot.slane %v3787, 4
        %v3790 = vor.u32 %v3786, %v3789
        %v3792 = vshrl.u32 %v3227, 16
        %v3794 = vrot.slane %v3792, 3
        %v3795 = vshll.u32 %v3227, 16
        %v3797 = vrot.slane %v3795, 4
        %v3798 = vor.u32 %v3794, %v3797
        %v3799 = vsel %vm3247, %v3790, %v3798
        %v3801 = vshrl.u32 %v2839, 16
        %v3803 = vrot.slane %v3801, 3
        %v3804 = vshll.u32 %v2839, 16
        %v3806 = vrot.slane %v3804, 4
        %v3807 = vor.u32 %v3803, %v3806
        %v3808 = vrot.slane %v3079, 3
        %v3809 = vrot.slane %v3075, 4
        %v3810 = vor.u32 %v3808, %v3809
        %v3811 = vsel %vm3247, %v3807, %v3810
        %v3813 = vshrl.u32 %v3078, 16
        %v3815 = vrot.slane %v3813, 3
        %v3816 = vshll.u32 %v3078, 16
        %v3818 = vrot.slane %v3816, 4
        %v3819 = vor.u32 %v3815, %v3818
        %v3821 = vshrl.u32 %v3081, 16
        %v3823 = vrot.slane %v3821, 3
        %v3824 = vshll.u32 %v3081, 16
        %v3826 = vrot.slane %v3824, 4
        %v3827 = vor.u32 %v3823, %v3826
        %v3828 = vsel %vm3247, %v3819, %v3827
        %v3830 = vshrl.u32 %v3231, 16
        %v3832 = vrot.slane %v3830, 3
        %v3833 = vshll.u32 %v3231, 16
        %v3835 = vrot.slane %v3833, 4
        %v3836 = vor.u32 %v3832, %v3835
        %v3838 = vshrl.u32 %v3230, 16
        %v3840 = vrot.slane %v3838, 3
        %v3841 = vshll.u32 %v3230, 16
        %v3843 = vrot.slane %v3841, 4
        %v3844 = vor.u32 %v3840, %v3843
        %v3845 = vsel %vm3247, %v3836, %v3844
        %v3847 = vshrl.u32 %v2841, 16
        %v3849 = vrot.slane %v3847, 3
        %v3850 = vshll.u32 %v2841, 16
        %v3852 = vrot.slane %v3850, 4
        %v3853 = vor.u32 %v3849, %v3852
        %v3854 = vrot.slane %v3094, 3
        %v3855 = vrot.slane %v3090, 4
        %v3856 = vor.u32 %v3854, %v3855
        %v3857 = vsel %vm3247, %v3853, %v3856
        %v3859 = vshrl.u32 %v3093, 16
        %v3861 = vrot.slane %v3859, 3
        %v3862 = vshll.u32 %v3093, 16
        %v3864 = vrot.slane %v3862, 4
        %v3865 = vor.u32 %v3861, %v3864
        %v3867 = vshrl.u32 %v3096, 16
        %v3869 = vrot.slane %v3867, 3
        %v3870 = vshll.u32 %v3096, 16
        %v3872 = vrot.slane %v3870, 4
        %v3873 = vor.u32 %v3869, %v3872
        %v3874 = vsel %vm3247, %v3865, %v3873
        %v3876 = vshrl.u32 %v3234, 16
        %v3878 = vrot.slane %v3876, 3
        %v3879 = vshll.u32 %v3234, 16
        %v3881 = vrot.slane %v3879, 4
        %v3882 = vor.u32 %v3878, %v3881
        %v3884 = vshrl.u32 %v3233, 16
        %v3886 = vrot.slane %v3884, 3
        %v3887 = vshll.u32 %v3233, 16
        %v3889 = vrot.slane %v3887, 4
        %v3890 = vor.u32 %v3886, %v3889
        %v3891 = vsel %vm3247, %v3882, %v3890
        %v3893 = vshrl.u32 %v2843, 16
        %v3895 = vrot.slane %v3893, 3
        %v3896 = vshll.u32 %v2843, 16
        %v3898 = vrot.slane %v3896, 4
        %v3899 = vor.u32 %v3895, %v3898
        %v3900 = vrot.slane %v3109, 3
        %v3901 = vrot.slane %v3105, 4
        %v3902 = vor.u32 %v3900, %v3901
        %v3903 = vsel %vm3247, %v3899, %v3902
        %v3905 = vshrl.u32 %v3108, 16
        %v3907 = vrot.slane %v3905, 3
        %v3908 = vshll.u32 %v3108, 16
        %v3910 = vrot.slane %v3908, 4
        %v3911 = vor.u32 %v3907, %v3910
        %v3913 = vshrl.u32 %v3111, 16
        %v3915 = vrot.slane %v3913, 3
        %v3916 = vshll.u32 %v3111, 16
        %v3918 = vrot.slane %v3916, 4
        %v3919 = vor.u32 %v3915, %v3918
        %v3920 = vsel %vm3247, %v3911, %v3919
        %v3922 = vshrl.u32 %v3237, 16
        %v3924 = vrot.slane %v3922, 3
        %v3925 = vshll.u32 %v3237, 16
        %v3927 = vrot.slane %v3925, 4
        %v3928 = vor.u32 %v3924, %v3927
        %v3930 = vshrl.u32 %v3236, 16
        %v3932 = vrot.slane %v3930, 3
        %v3933 = vshll.u32 %v3236, 16
        %v3935 = vrot.slane %v3933, 4
        %v3936 = vor.u32 %v3932, %v3935
        %v3937 = vsel %vm3247, %v3928, %v3936
        %v3939 = vshrl.u32 %v2845, 16
        %v3941 = vrot.slane %v3939, 3
        %v3942 = vshll.u32 %v2845, 16
        %v3944 = vrot.slane %v3942, 4
        %v3945 = vor.u32 %v3941, %v3944
        %v3946 = vrot.slane %v3124, 3
        %v3947 = vrot.slane %v3120, 4
        %v3948 = vor.u32 %v3946, %v3947
        %v3949 = vsel %vm3247, %v3945, %v3948
        %v3951 = vshrl.u32 %v3123, 16
        %v3953 = vrot.slane %v3951, 3
        %v3954 = vshll.u32 %v3123, 16
        %v3956 = vrot.slane %v3954, 4
        %v3957 = vor.u32 %v3953, %v3956
        %v3959 = vshrl.u32 %v3126, 16
        %v3961 = vrot.slane %v3959, 3
        %v3962 = vshll.u32 %v3126, 16
        %v3964 = vrot.slane %v3962, 4
        %v3965 = vor.u32 %v3961, %v3964
        %v3966 = vsel %vm3247, %v3957, %v3965
        %v3968 = vshrl.u32 %v3240, 16
        %v3970 = vrot.slane %v3968, 3
        %v3971 = vshll.u32 %v3240, 16
        %v3973 = vrot.slane %v3971, 4
        %v3974 = vor.u32 %v3970, %v3973
        %v3976 = vshrl.u32 %v3239, 16
        %v3978 = vrot.slane %v3976, 3
        %v3979 = vshll.u32 %v3239, 16
        %v3981 = vrot.slane %v3979, 4
        %v3982 = vor.u32 %v3978, %v3981
        %v3983 = vsel %vm3247, %v3974, %v3982
        %v3985 = vshrl.u32 %v2847, 16
        %v3987 = vrot.slane %v3985, 3
        %v3988 = vshll.u32 %v2847, 16
        %v3990 = vrot.slane %v3988, 4
        %v3991 = vor.u32 %v3987, %v3990
        %v3992 = vrot.slane %v3139, 3
        %v3993 = vrot.slane %v3135, 4
        %v3994 = vor.u32 %v3992, %v3993
        %v3995 = vsel %vm3247, %v3991, %v3994
        %v3997 = vshrl.u32 %v3138, 16
        %v3999 = vrot.slane %v3997, 3
        %v4000 = vshll.u32 %v3138, 16
        %v4002 = vrot.slane %v4000, 4
        %v4003 = vor.u32 %v3999, %v4002
        %v4005 = vshrl.u32 %v3141, 16
        %v4007 = vrot.slane %v4005, 3
        %v4008 = vshll.u32 %v3141, 16
        %v4010 = vrot.slane %v4008, 4
        %v4011 = vor.u32 %v4007, %v4010
        %v4012 = vsel %vm3247, %v4003, %v4011
        %v4014 = vshrl.u32 %v3243, 16
        %v4016 = vrot.slane %v4014, 3
        %v4017 = vshll.u32 %v3243, 16
        %v4019 = vrot.slane %v4017, 4
        %v4020 = vor.u32 %v4016, %v4019
        %v4022 = vshrl.u32 %v3242, 16
        %v4024 = vrot.slane %v4022, 3
        %v4025 = vshll.u32 %v3242, 16
        %v4027 = vrot.slane %v4025, 4
        %v4028 = vor.u32 %v4024, %v4027
        %v4029 = vsel %vm3247, %v4020, %v4028
        %v4031 = vshrl.u32 %v2849, 16
        %v4033 = vrot.slane %v4031, 3
        %v4034 = vshll.u32 %v2849, 16
        %v4036 = vrot.slane %v4034, 4
        %v4037 = vor.u32 %v4033, %v4036
        %v4038 = vrot.slane %v3154, 3
        %v4039 = vrot.slane %v3150, 4
        %v4040 = vor.u32 %v4038, %v4039
        %v4041 = vsel %vm3247, %v4037, %v4040
        %v4043 = vshrl.u32 %v3153, 16
        %v4045 = vrot.slane %v4043, 3
        %v4046 = vshll.u32 %v3153, 16
        %v4048 = vrot.slane %v4046, 4
        %v4049 = vor.u32 %v4045, %v4048
        %v4051 = vshrl.u32 %v3156, 16
        %v4053 = vrot.slane %v4051, 3
        %v4054 = vshll.u32 %v3156, 16
        %v4056 = vrot.slane %v4054, 4
        %v4057 = vor.u32 %v4053, %v4056
        %v4058 = vsel %vm3247, %v4049, %v4057
        %v4060 = vshrl.u32 %v3246, 16
        %v4062 = vrot.slane %v4060, 3
        %v4063 = vshll.u32 %v3246, 16
        %v4065 = vrot.slane %v4063, 4
        %v4066 = vor.u32 %v4062, %v4065
        %v4068 = vshrl.u32 %v3245, 16
        %v4070 = vrot.slane %v4068, 3
        %v4071 = vshll.u32 %v3245, 16
        %v4073 = vrot.slane %v4071, 4
        %v4074 = vor.u32 %v4070, %v4073
        %v4075 = vsel %vm3247, %v4066, %v4074
        %4130 = vst [vmem:[#allocation4] sm:$0xff] %v3259
        %4131 = vst [vmem:[#allocation4 + $0x8] sm:$0xff] %v3276
        %4132 = vst [vmem:[#allocation4 + $0x10] sm:$0xff] %v3293
        %4133 = vst [vmem:[#allocation4 + $0x18] sm:$0xff] %v3305
        %4134 = vst [vmem:[#allocation4 + $0x20] sm:$0xff] %v3322
        %4135 = vst [vmem:[#allocation4 + $0x28] sm:$0xff] %v3339
        %4136 = vst [vmem:[#allocation4 + $0x30] sm:$0xff] %v3351
        %4137 = vst [vmem:[#allocation4 + $0x38] sm:$0xff] %v3368
        %4138 = vst [vmem:[#allocation4 + $0x40] sm:$0xff] %v3385
        %4139 = vst [vmem:[#allocation4 + $0x48] sm:$0xff] %v3397
        %4140 = vst [vmem:[#allocation4 + $0x50] sm:$0xff] %v3414
        %4141 = vst [vmem:[#allocation4 + $0x58] sm:$0xff] %v3431
        %4142 = vst [vmem:[#allocation4 + $0x60] sm:$0xff] %v3443
        %4143 = vst [vmem:[#allocation4 + $0x68] sm:$0xff] %v3460
        %4144 = vst [vmem:[#allocation4 + $0x70] sm:$0xff] %v3477
        %4145 = vst [vmem:[#allocation4 + $0x78] sm:$0xff] %v3489
        %4146 = vst [vmem:[#allocation4 + $0x80] sm:$0xff] %v3506
        %4147 = vst [vmem:[#allocation4 + $0x88] sm:$0xff] %v3523
        %4148 = vst [vmem:[#allocation4 + $0x90] sm:$0xff] %v3535
        %4149 = vst [vmem:[#allocation4 + $0x98] sm:$0xff] %v3552
        %4150 = vst [vmem:[#allocation4 + $0xa0] sm:$0xff] %v3569
        %4151 = vst [vmem:[#allocation4 + $0xa8] sm:$0xff] %v3581
        %4152 = vst [vmem:[#allocation4 + $0xb0] sm:$0xff] %v3598
        %4153 = vst [vmem:[#allocation4 + $0xb8] sm:$0xff] %v3615
        %4154 = vst [vmem:[#allocation4 + $0xc0] sm:$0xff] %v3627
        %4155 = vst [vmem:[#allocation4 + $0xc8] sm:$0xff] %v3644
        %4156 = vst [vmem:[#allocation4 + $0xd0] sm:$0xff] %v3661
        %4157 = vst [vmem:[#allocation4 + $0xd8] sm:$0xff] %v3673
        %4158 = vst [vmem:[#allocation4 + $0xe0] sm:$0xff] %v3690
        %4159 = vst [vmem:[#allocation4 + $0xe8] sm:$0xff] %v3707
        %4160 = vst [vmem:[#allocation4 + $0xf0] sm:$0xff] %v3719
        %4161 = vst [vmem:[#allocation4 + $0xf8] sm:$0xff] %v3736
        %4162 = vst [vmem:[#allocation4 + $0x100] sm:$0xff] %v3753
        %4163 = vst [vmem:[#allocation4 + $0x108] sm:$0xff] %v3765
        %4164 = vst [vmem:[#allocation4 + $0x110] sm:$0xff] %v3782
        %4165 = vst [vmem:[#allocation4 + $0x118] sm:$0xff] %v3799
        %4166 = vst [vmem:[#allocation4 + $0x120] sm:$0xff] %v3811
        %4167 = vst [vmem:[#allocation4 + $0x128] sm:$0xff] %v3828
        %4168 = vst [vmem:[#allocation4 + $0x130] sm:$0xff] %v3845
        %4169 = vst [vmem:[#allocation4 + $0x138] sm:$0xff] %v3857
        %4170 = vst [vmem:[#allocation4 + $0x140] sm:$0xff] %v3874
        %4171 = vst [vmem:[#allocation4 + $0x148] sm:$0xff] %v3891
        %4172 = vst [vmem:[#allocation4 + $0x150] sm:$0xff] %v3903
        %4173 = vst [vmem:[#allocation4 + $0x158] sm:$0xff] %v3920
        %4174 = vst [vmem:[#allocation4 + $0x160] sm:$0xff] %v3937
        %4175 = vst [vmem:[#allocation4 + $0x168] sm:$0xff] %v3949
        %4176 = vst [vmem:[#allocation4 + $0x170] sm:$0xff] %v3966
        %4177 = vst [vmem:[#allocation4 + $0x178] sm:$0xff] %v3983
        %4178 = vst [vmem:[#allocation4 + $0x180] sm:$0xff] %v3995
        %4179 = vst [vmem:[#allocation4 + $0x188] sm:$0xff] %v4012
        %4180 = vst [vmem:[#allocation4 + $0x190] sm:$0xff] %v4029
        %4181 = vst [vmem:[#allocation4 + $0x198] sm:$0xff] %v4041
        %4182 = vst [vmem:[#allocation4 + $0x1a0] sm:$0xff] %v4058
        %4183 = vst [vmem:[#allocation4 + $0x1a8] sm:$0xff] %v4075
        %v4184 = vld [vmem:[#allocation4] sm:$0xff]
        %v4185 = vld [vmem:[#allocation4 + $0x8] sm:$0xff]
        %v4186 = vld [vmem:[#allocation4 + $0x10] sm:$0xff]
        %v4187 = vld [vmem:[#allocation4 + $0x18] sm:$0xff]
        %v4188 = vld [vmem:[#allocation4 + $0x20] sm:$0xff]
        %v4189 = vld [vmem:[#allocation4 + $0x28] sm:$0xff]
        %v4190 = vld [vmem:[#allocation4 + $0x30] sm:$0xff]
        %v4191 = vld [vmem:[#allocation4 + $0x38] sm:$0xff]
        %v4192 = vld [vmem:[#allocation4 + $0x40] sm:$0xff]
        %v4193 = vld [vmem:[#allocation4 + $0x48] sm:$0xff]
        %v4194 = vld [vmem:[#allocation4 + $0x50] sm:$0xff]
        %v4195 = vld [vmem:[#allocation4 + $0x58] sm:$0xff]
        %v4196 = vld [vmem:[#allocation4 + $0x60] sm:$0xff]
        %v4197 = vld [vmem:[#allocation4 + $0x68] sm:$0xff]
        %v4198 = vld [vmem:[#allocation4 + $0x70] sm:$0xff]
        %v4199 = vld [vmem:[#allocation4 + $0x78] sm:$0xff]
        %v4200 = vld [vmem:[#allocation4 + $0x80] sm:$0xff]
        %v4201 = vld [vmem:[#allocation4 + $0x88] sm:$0xff]
        %v4202 = vld [vmem:[#allocation4 + $0x90] sm:$0xff]
        %v4203 = vld [vmem:[#allocation4 + $0x98] sm:$0xff]
        %v4204 = vld [vmem:[#allocation4 + $0xa0] sm:$0xff]
        %v4205 = vld [vmem:[#allocation4 + $0xa8] sm:$0xff]
        %v4206 = vld [vmem:[#allocation4 + $0xb0] sm:$0xff]
        %v4207 = vld [vmem:[#allocation4 + $0xb8] sm:$0xff]
        %v4208 = vld [vmem:[#allocation4 + $0xc0] sm:$0xff]
        %v4209 = vld [vmem:[#allocation4 + $0xc8] sm:$0xff]
        %v4210 = vld [vmem:[#allocation4 + $0xd0] sm:$0xff]
        %v4211 = vld [vmem:[#allocation4 + $0xd8] sm:$0xff]
        %v4212 = vld [vmem:[#allocation4 + $0xe0] sm:$0xff]
        %v4213 = vld [vmem:[#allocation4 + $0xe8] sm:$0xff]
        %v4214 = vld [vmem:[#allocation4 + $0xf0] sm:$0xff]
        %v4215 = vld [vmem:[#allocation4 + $0xf8] sm:$0xff]
        %v4216 = vld [vmem:[#allocation4 + $0x100] sm:$0xff]
        %v4217 = vld [vmem:[#allocation4 + $0x108] sm:$0xff]
        %v4218 = vld [vmem:[#allocation4 + $0x110] sm:$0xff]
        %v4219 = vld [vmem:[#allocation4 + $0x118] sm:$0xff]
        %v4220 = vld [vmem:[#allocation4 + $0x120] sm:$0xff]
        %v4221 = vld [vmem:[#allocation4 + $0x128] sm:$0xff]
        %v4222 = vld [vmem:[#allocation4 + $0x130] sm:$0xff]
        %v4223 = vld [vmem:[#allocation4 + $0x138] sm:$0xff]
        %v4224 = vld [vmem:[#allocation4 + $0x140] sm:$0xff]
        %v4225 = vld [vmem:[#allocation4 + $0x148] sm:$0xff]
        %v4226 = vld [vmem:[#allocation4 + $0x150] sm:$0xff]
        %v4227 = vld [vmem:[#allocation4 + $0x158] sm:$0xff]
        %v4228 = vld [vmem:[#allocation4 + $0x160] sm:$0xff]
        %v4229 = vld [vmem:[#allocation4 + $0x168] sm:$0xff]
        %v4230 = vld [vmem:[#allocation4 + $0x170] sm:$0xff]
        %v4231 = vld [vmem:[#allocation4 + $0x178] sm:$0xff]
        %v4232 = vld [vmem:[#allocation5] sm:$0xf]
        %v4233 = vld [vmem:[#allocation5 + $0x4] sm:$0xf]
        %v4234 = vld [vmem:[#allocation5 + $0x8] sm:$0xf]
        %v4235 = vld [vmem:[#allocation5 + $0xc] sm:$0xf]
        %v4236 = vld [vmem:[#allocation5 + $0x10] sm:$0xf]
        %v4237 = vld [vmem:[#allocation5 + $0x14] sm:$0xf]
        %v4238 = vld [vmem:[#allocation5 + $0x18] sm:$0xf]
        %v4239 = vld [vmem:[#allocation5 + $0x1c] sm:$0xf]
        %v4240 = vld [vmem:[#allocation5 + $0x20] sm:$0xf]
        %v4241 = vld [vmem:[#allocation5 + $0x24] sm:$0xf]
        %v4242 = vld [vmem:[#allocation5 + $0x28] sm:$0xf]
        %v4243 = vld [vmem:[#allocation5 + $0x2c] sm:$0xf]
        %v4244 = vld [vmem:[#allocation5 + $0x30] sm:$0xf]
        %v4245 = vld [vmem:[#allocation5 + $0x34] sm:$0xf]
        %v4246 = vld [vmem:[#allocation5 + $0x38] sm:$0xf]
        %v4247 = vld [vmem:[#allocation5 + $0x3c] sm:$0xf]
        %v4248 = vld [vmem:[#allocation5 + $0x40] sm:$0xf]
        %v4249 = vld [vmem:[#allocation5 + $0x44] sm:$0xf]
        %v4250 = vld [vmem:[#allocation5 + $0x48] sm:$0xf]
        %v4251 = vld [vmem:[#allocation5 + $0x4c] sm:$0xf]
        %v4252 = vld [vmem:[#allocation5 + $0x50] sm:$0xf]
        %v4253 = vld [vmem:[#allocation5 + $0x54] sm:$0xf]
        %v4254 = vld [vmem:[#allocation5 + $0x58] sm:$0xf]
        %v4255 = vld [vmem:[#allocation5 + $0x5c] sm:$0xf]
        %v4256 = vld [vmem:[#allocation5 + $0x60] sm:$0xf]
        %v4257 = vld [vmem:[#allocation5 + $0x64] sm:$0xf]
        %v4258 = vld [vmem:[#allocation5 + $0x68] sm:$0xf]
        %v4259 = vld [vmem:[#allocation5 + $0x6c] sm:$0xf]
        %v4260 = vld [vmem:[#allocation5 + $0x70] sm:$0xf]
        %v4261 = vld [vmem:[#allocation5 + $0x74] sm:$0xf]
        %v4262 = vld [vmem:[#allocation5 + $0x78] sm:$0xf]
        %v4263 = vld [vmem:[#allocation5 + $0x7c] sm:$0xf]
        %v4264 = vld [vmem:[#allocation5 + $0x80] sm:$0xf]
        %v4265 = vld [vmem:[#allocation5 + $0x84] sm:$0xf]
        %v4266 = vld [vmem:[#allocation5 + $0x88] sm:$0xf]
        %v4267 = vld [vmem:[#allocation5 + $0x8c] sm:$0xf]
        %v4268 = vld [vmem:[#allocation5 + $0x90] sm:$0xf]
        %v4269 = vld [vmem:[#allocation5 + $0x94] sm:$0xf]
        %v4270 = vld [vmem:[#allocation5 + $0x98] sm:$0xf]
        %v4271 = vld [vmem:[#allocation5 + $0x9c] sm:$0xf]
        %v4272 = vld [vmem:[#allocation5 + $0xa0] sm:$0xf]
        %v4273 = vld [vmem:[#allocation5 + $0xa4] sm:$0xf]
        %v4274 = vld [vmem:[#allocation5 + $0xa8] sm:$0xf]
        %v4275 = vld [vmem:[#allocation5 + $0xac] sm:$0xf]
        %v4276 = vld [vmem:[#allocation5 + $0xb0] sm:$0xf]
        %v4277 = vld [vmem:[#allocation5 + $0xb4] sm:$0xf]
        %v4278 = vld [vmem:[#allocation5 + $0xb8] sm:$0xf]
        %v4279 = vld [vmem:[#allocation5 + $0xbc] sm:$0xf]
        %s4280 = scalar_lea.vmem [#allocation4], 24
        %v4281 = vld [vmem:[%s4280] sm:$0xff]
        %v4282 = vld [vmem:[%s4280 + $0x8] sm:$0xff]
        %v4283 = vld [vmem:[%s4280 + $0x10] sm:$0xff]
        %v4284 = vld [vmem:[%s4280 + $0x18] sm:$0xff]
        %v4285 = vld [vmem:[%s4280 + $0x20] sm:$0xff]
        %v4286 = vld [vmem:[%s4280 + $0x28] sm:$0xff]
        %v4287 = vld [vmem:[%s4280 + $0x30] sm:$0xff]
        %v4288 = vld [vmem:[%s4280 + $0x38] sm:$0xff]
        %v4289 = vld [vmem:[%s4280 + $0x40] sm:$0xff]
        %v4290 = vld [vmem:[%s4280 + $0x48] sm:$0xff]
        %v4291 = vld [vmem:[%s4280 + $0x50] sm:$0xff]
        %v4292 = vld [vmem:[%s4280 + $0x58] sm:$0xff]
        %v4293 = vld [vmem:[%s4280 + $0x60] sm:$0xff]
        %v4294 = vld [vmem:[%s4280 + $0x68] sm:$0xff]
        %v4295 = vld [vmem:[%s4280 + $0x70] sm:$0xff]
        %v4296 = vld [vmem:[%s4280 + $0x78] sm:$0xff]
        %v4297 = vld [vmem:[%s4280 + $0x80] sm:$0xff]
        %v4298 = vld [vmem:[%s4280 + $0x88] sm:$0xff]
        %v4299 = vld [vmem:[%s4280 + $0x90] sm:$0xff]
        %v4300 = vld [vmem:[%s4280 + $0x98] sm:$0xff]
        %v4301 = vld [vmem:[%s4280 + $0xa0] sm:$0xff]
        %v4302 = vld [vmem:[%s4280 + $0xa8] sm:$0xff]
        %v4303 = vld [vmem:[%s4280 + $0xb0] sm:$0xff]
        %v4304 = vld [vmem:[%s4280 + $0xb8] sm:$0xff]
        %v4305 = vld [vmem:[%s4280 + $0xc0] sm:$0xff]
        %v4306 = vld [vmem:[%s4280 + $0xc8] sm:$0xff]
        %v4307 = vld [vmem:[%s4280 + $0xd0] sm:$0xff]
        %v4308 = vld [vmem:[%s4280 + $0xd8] sm:$0xff]
        %v4309 = vld [vmem:[%s4280 + $0xe0] sm:$0xff]
        %v4310 = vld [vmem:[%s4280 + $0xe8] sm:$0xff]
        %v4311 = vld [vmem:[%s4280 + $0xf0] sm:$0xff]
        %v4312 = vld [vmem:[%s4280 + $0xf8] sm:$0xff]
        %v4313 = vld [vmem:[%s4280 + $0x100] sm:$0xff]
        %v4314 = vld [vmem:[%s4280 + $0x108] sm:$0xff]
        %v4315 = vld [vmem:[%s4280 + $0x110] sm:$0xff]
        %v4316 = vld [vmem:[%s4280 + $0x118] sm:$0xff]
        %v4317 = vld [vmem:[%s4280 + $0x120] sm:$0xff]
        %v4318 = vld [vmem:[%s4280 + $0x128] sm:$0xff]
        %v4319 = vld [vmem:[%s4280 + $0x130] sm:$0xff]
        %v4320 = vld [vmem:[%s4280 + $0x138] sm:$0xff]
        %v4321 = vld [vmem:[%s4280 + $0x140] sm:$0xff]
        %v4322 = vld [vmem:[%s4280 + $0x148] sm:$0xff]
        %v4323 = vld [vmem:[%s4280 + $0x150] sm:$0xff]
        %v4324 = vld [vmem:[%s4280 + $0x158] sm:$0xff]
        %v4325 = vld [vmem:[%s4280 + $0x160] sm:$0xff]
        %v4326 = vld [vmem:[%s4280 + $0x168] sm:$0xff]
        %v4327 = vld [vmem:[%s4280 + $0x170] sm:$0xff]
        %v4328 = vld [vmem:[%s4280 + $0x178] sm:$0xff]
        %s4329 = scalar_lea.vmem [#allocation5], 192
        %v4330 = vld [vmem:[%s4329] sm:$0xf]
        %v4331 = vld [vmem:[%s4329 + $0x4] sm:$0xf]
        %v4332 = vld [vmem:[%s4329 + $0x8] sm:$0xf]
        %v4333 = vld [vmem:[%s4329 + $0xc] sm:$0xf]
        %v4334 = vld [vmem:[%s4329 + $0x10] sm:$0xf]
        %v4335 = vld [vmem:[%s4329 + $0x14] sm:$0xf]
        %v4336 = vld [vmem:[%s4329 + $0x18] sm:$0xf]
        %v4337 = vld [vmem:[%s4329 + $0x1c] sm:$0xf]
        %v4338 = vld [vmem:[%s4329 + $0x20] sm:$0xf]
        %v4339 = vld [vmem:[%s4329 + $0x24] sm:$0xf]
        %v4340 = vld [vmem:[%s4329 + $0x28] sm:$0xf]
        %v4341 = vld [vmem:[%s4329 + $0x2c] sm:$0xf]
        %v4342 = vld [vmem:[%s4329 + $0x30] sm:$0xf]
        %v4343 = vld [vmem:[%s4329 + $0x34] sm:$0xf]
        %v4344 = vld [vmem:[%s4329 + $0x38] sm:$0xf]
        %v4345 = vld [vmem:[%s4329 + $0x3c] sm:$0xf]
        %v4346 = vld [vmem:[%s4329 + $0x40] sm:$0xf]
        %v4347 = vld [vmem:[%s4329 + $0x44] sm:$0xf]
        %v4348 = vld [vmem:[%s4329 + $0x48] sm:$0xf]
        %v4349 = vld [vmem:[%s4329 + $0x4c] sm:$0xf]
        %v4350 = vld [vmem:[%s4329 + $0x50] sm:$0xf]
        %v4351 = vld [vmem:[%s4329 + $0x54] sm:$0xf]
        %v4352 = vld [vmem:[%s4329 + $0x58] sm:$0xf]
        %v4353 = vld [vmem:[%s4329 + $0x5c] sm:$0xf]
        %v4354 = vld [vmem:[%s4329 + $0x60] sm:$0xf]
        %v4355 = vld [vmem:[%s4329 + $0x64] sm:$0xf]
        %v4356 = vld [vmem:[%s4329 + $0x68] sm:$0xf]
        %v4357 = vld [vmem:[%s4329 + $0x6c] sm:$0xf]
        %v4358 = vld [vmem:[%s4329 + $0x70] sm:$0xf]
        %v4359 = vld [vmem:[%s4329 + $0x74] sm:$0xf]
        %v4360 = vld [vmem:[%s4329 + $0x78] sm:$0xf]
        %v4361 = vld [vmem:[%s4329 + $0x7c] sm:$0xf]
        %v4362 = vld [vmem:[%s4329 + $0x80] sm:$0xf]
        %v4363 = vld [vmem:[%s4329 + $0x84] sm:$0xf]
        %v4364 = vld [vmem:[%s4329 + $0x88] sm:$0xf]
        %v4365 = vld [vmem:[%s4329 + $0x8c] sm:$0xf]
        %v4366 = vld [vmem:[%s4329 + $0x90] sm:$0xf]
        %v4367 = vld [vmem:[%s4329 + $0x94] sm:$0xf]
        %v4368 = vld [vmem:[%s4329 + $0x98] sm:$0xf]
        %v4369 = vld [vmem:[%s4329 + $0x9c] sm:$0xf]
        %v4370 = vld [vmem:[%s4329 + $0xa0] sm:$0xf]
        %v4371 = vld [vmem:[%s4329 + $0xa4] sm:$0xf]
        %v4372 = vld [vmem:[%s4329 + $0xa8] sm:$0xf]
        %v4373 = vld [vmem:[%s4329 + $0xac] sm:$0xf]
        %v4374 = vld [vmem:[%s4329 + $0xb0] sm:$0xf]
        %v4375 = vld [vmem:[%s4329 + $0xb4] sm:$0xf]
        %v4376 = vld [vmem:[%s4329 + $0xb8] sm:$0xf]
        %v4377 = vld [vmem:[%s4329 + $0xbc] sm:$0xf]
        %v4426 = vunpack.c.l.b16 %v4330
        %v4427 = vunpack.c.l.b16 %v4331
        %v4428 = vunpack.c.l.b16 %v4332
        %v4429 = vunpack.c.l.b16 %v4333
        %v4430 = vunpack.c.l.b16 %v4334
        %v4431 = vunpack.c.l.b16 %v4335
        %v4432 = vunpack.c.l.b16 %v4336
        %v4433 = vunpack.c.l.b16 %v4337
        %v4434 = vunpack.c.l.b16 %v4338
        %v4435 = vunpack.c.l.b16 %v4339
        %v4436 = vunpack.c.l.b16 %v4340
        %v4437 = vunpack.c.l.b16 %v4341
        %v4438 = vunpack.c.l.b16 %v4342
        %v4439 = vunpack.c.l.b16 %v4343
        %v4440 = vunpack.c.l.b16 %v4344
        %v4441 = vunpack.c.l.b16 %v4345
        %v4442 = vunpack.c.l.b16 %v4346
        %v4443 = vunpack.c.l.b16 %v4347
        %v4444 = vunpack.c.l.b16 %v4348
        %v4445 = vunpack.c.l.b16 %v4349
        %v4446 = vunpack.c.l.b16 %v4350
        %v4447 = vunpack.c.l.b16 %v4351
        %v4448 = vunpack.c.l.b16 %v4352
        %v4449 = vunpack.c.l.b16 %v4353
        %v4450 = vunpack.c.l.b16 %v4354
        %v4451 = vunpack.c.l.b16 %v4355
        %v4452 = vunpack.c.l.b16 %v4356
        %v4453 = vunpack.c.l.b16 %v4357
        %v4454 = vunpack.c.l.b16 %v4358
        %v4455 = vunpack.c.l.b16 %v4359
        %v4456 = vunpack.c.l.b16 %v4360
        %v4457 = vunpack.c.l.b16 %v4361
        %v4458 = vunpack.c.l.b16 %v4362
        %v4459 = vunpack.c.l.b16 %v4363
        %v4460 = vunpack.c.l.b16 %v4364
        %v4461 = vunpack.c.l.b16 %v4365
        %v4462 = vunpack.c.l.b16 %v4366
        %v4463 = vunpack.c.l.b16 %v4367
        %v4464 = vunpack.c.l.b16 %v4368
        %v4465 = vunpack.c.l.b16 %v4369
        %v4466 = vunpack.c.l.b16 %v4370
        %v4467 = vunpack.c.l.b16 %v4371
        %v4468 = vunpack.c.l.b16 %v4372
        %v4469 = vunpack.c.l.b16 %v4373
        %v4470 = vunpack.c.l.b16 %v4374
        %v4471 = vunpack.c.l.b16 %v4375
        %v4472 = vunpack.c.l.b16 %v4376
        %v4473 = vunpack.c.l.b16 %v4377
        %v4474 = vpack.c.b16 %v4427, %v4426
        %v4475 = vpack.c.b16 %v4429, %v4428
        %v4476 = vpack.c.b16 %v4431, %v4430
        %v4477 = vpack.c.b16 %v4433, %v4432
        %v4478 = vpack.c.b16 %v4435, %v4434
        %v4479 = vpack.c.b16 %v4437, %v4436
        %v4480 = vpack.c.b16 %v4439, %v4438
        %v4481 = vpack.c.b16 %v4441, %v4440
        %v4482 = vpack.c.b16 %v4443, %v4442
        %v4483 = vpack.c.b16 %v4445, %v4444
        %v4484 = vpack.c.b16 %v4447, %v4446
        %v4485 = vpack.c.b16 %v4449, %v4448
        %v4486 = vpack.c.b16 %v4451, %v4450
        %v4487 = vpack.c.b16 %v4453, %v4452
        %v4488 = vpack.c.b16 %v4455, %v4454
        %v4489 = vpack.c.b16 %v4457, %v4456
        %v4490 = vpack.c.b16 %v4459, %v4458
        %v4491 = vpack.c.b16 %v4461, %v4460
        %v4492 = vpack.c.b16 %v4463, %v4462
        %v4493 = vpack.c.b16 %v4465, %v4464
        %v4494 = vpack.c.b16 %v4467, %v4466
        %v4495 = vpack.c.b16 %v4469, %v4468
        %v4496 = vpack.c.b16 %v4471, %v4470
        %v4497 = vpack.c.b16 %v4473, %v4472
        %4522 = vmatprep.subr.bf16.mxu0 0
        %4523 = vmatpush1.bf16.msra.mxu0 %v4474
        %4524 = vmatprep.subr.bf16.mxu0 0
        %4525 = vmatpush1.bf16.msra.mxu0 %v4475
        %4526 = vmatprep.subr.bf16.mxu0 0
        %4527 = vmatpush1.bf16.msra.mxu0 %v4476
        %4528 = vmatprep.subr.bf16.mxu0 0
        %4529 = vmatpush1.bf16.msra.mxu0 %v4477
        %4530 = vmatprep.subr.bf16.mxu0 0
        %4531 = vmatpush1.bf16.msra.mxu0 %v4478
        %4532 = vmatprep.subr.bf16.mxu0 0
        %4533 = vmatpush1.bf16.msra.mxu0 %v4479
        %4534 = vmatprep.subr.bf16.mxu0 0
        %4535 = vmatpush1.bf16.msra.mxu0 %v4480
        %4536 = vmatprep.subr.bf16.mxu0 0
        %4537 = vmatpush1.bf16.msra.mxu0 %v4481
        %4538 = vmatprep.subr.bf16.mxu0 0
        %4539 = vmatpush1.bf16.msra.mxu0 %v4482
        %4540 = vmatprep.subr.bf16.mxu0 0
        %4541 = vmatpush1.bf16.msra.mxu0 %v4483
        %4542 = vmatprep.subr.bf16.mxu0 0
        %4543 = vmatpush1.bf16.msra.mxu0 %v4484
        %4544 = vmatprep.subr.bf16.mxu0 0
        %4545 = vmatpush1.bf16.msra.mxu0 %v4485
        %4546 = vmatprep.subr.bf16.mxu0 0
        %4547 = vmatpush1.bf16.msra.mxu0 %v4486
        %4548 = vmatprep.subr.bf16.mxu0 0
        %4549 = vmatpush1.bf16.msra.mxu0 %v4487
        %4550 = vmatprep.subr.bf16.mxu0 0
        %4551 = vmatpush1.bf16.msra.mxu0 %v4488
        %4552 = vmatprep.subr.bf16.mxu0 0
        %4553 = vmatpush1.bf16.msra.mxu0 %v4489
        %4554 = vmatprep.mubr.bf16.mxu0 %v4282
        %4555 = vmatmul.mubr.bf16.gmra.mrb[0].mxu0 %v4281
        %v4556 = vpop.f32.mrb[0].mxu0
        %v4557 = vadd.f32 0.0, %v4556
        %v4558 = vpop.f32.mrb[0].mxu0
        %v4559 = vpop.f32.mrb[0].mxu0
        %v4560 = vadd.f32 0.0, %v4559
        %v4561 = vpop.f32.mrb[0].mxu0
        %4562 = vmatprep.mubr.bf16.mxu0 %v4285
        %4563 = vmatmul.mubr.bf16.gmra.mrb[0].mxu0 %v4284
        %v4564 = vpop.f32.mrb[0].mxu0
        %v4565 = vadd.f32 0.0, %v4564
        %v4566 = vpop.f32.mrb[0].mxu0
        %v4567 = vpop.f32.mrb[0].mxu0
        %v4568 = vadd.f32 0.0, %v4567
        %v4569 = vpop.f32.mrb[0].mxu0
        %4570 = vmatprep.mubr.bf16.mxu0 %v4288
        %4571 = vmatmul.mubr.bf16.gmra.mrb[0].mxu0 %v4287
        %v4572 = vpop.f32.mrb[0].mxu0
        %v4573 = vadd.f32 0.0, %v4572
        %v4574 = vpop.f32.mrb[0].mxu0
        %v4575 = vpop.f32.mrb[0].mxu0
        %v4576 = vadd.f32 0.0, %v4575
        %v4577 = vpop.f32.mrb[0].mxu0
        %4578 = vmatprep.mubr.bf16.mxu0 %v4291
        %4579 = vmatmul.mubr.bf16.gmra.mrb[0].mxu0 %v4290
        %v4580 = vpop.f32.mrb[0].mxu0
        %v4581 = vadd.f32 0.0, %v4580
        %v4582 = vpop.f32.mrb[0].mxu0
        %v4583 = vpop.f32.mrb[0].mxu0
        %v4584 = vadd.f32 0.0, %v4583
        %v4585 = vpop.f32.mrb[0].mxu0
        %4586 = vmatprep.mubr.bf16.mxu0 %v4294
        %4587 = vmatmul.mubr.bf16.gmra.mrb[0].mxu0 %v4293
        %v4588 = vpop.f32.mrb[0].mxu0
        %v4589 = vadd.f32 0.0, %v4588
        %v4590 = vpop.f32.mrb[0].mxu0
        %v4591 = vpop.f32.mrb[0].mxu0
        %v4592 = vadd.f32 0.0, %v4591
        %v4593 = vpop.f32.mrb[0].mxu0
        %4594 = vmatprep.mubr.bf16.mxu0 %v4297
        %4595 = vmatmul.mubr.bf16.gmra.mrb[0].mxu0 %v4296
        %v4596 = vpop.f32.mrb[0].mxu0
        %v4597 = vadd.f32 0.0, %v4596
        %v4598 = vpop.f32.mrb[0].mxu0
        %v4599 = vpop.f32.mrb[0].mxu0
        %v4600 = vadd.f32 0.0, %v4599
        %v4601 = vpop.f32.mrb[0].mxu0
        %4602 = vmatprep.mubr.bf16.mxu0 %v4300
        %4603 = vmatmul.mubr.bf16.gmra.mrb[0].mxu0 %v4299
        %v4604 = vpop.f32.mrb[0].mxu0
        %v4605 = vadd.f32 0.0, %v4604
        %v4606 = vpop.f32.mrb[0].mxu0
        %v4607 = vpop.f32.mrb[0].mxu0
        %v4608 = vadd.f32 0.0, %v4607
        %v4609 = vpop.f32.mrb[0].mxu0
        %4610 = vmatprep.mubr.bf16.mxu0 %v4303
        %4611 = vmatmul.mubr.bf16.gmra.mrb[0].mxu0 %v4302
        %v4612 = vpop.f32.mrb[0].mxu0
        %v4613 = vadd.f32 0.0, %v4612
        %v4614 = vpop.f32.mrb[0].mxu0
        %v4615 = vpop.f32.mrb[0].mxu0
        %v4616 = vadd.f32 0.0, %v4615
        %v4617 = vpop.f32.mrb[0].mxu0
        %4618 = vmatprep.mubr.bf16.mxu0 %v4306
        %4619 = vmatmul.mubr.bf16.gmra.mrb[0].mxu0 %v4305
        %v4620 = vpop.f32.mrb[0].mxu0
        %v4621 = vadd.f32 0.0, %v4620
        %v4622 = vpop.f32.mrb[0].mxu0
        %v4623 = vpop.f32.mrb[0].mxu0
        %v4624 = vadd.f32 0.0, %v4623
        %v4625 = vpop.f32.mrb[0].mxu0
        %4626 = vmatprep.mubr.bf16.mxu0 %v4309
        %4627 = vmatmul.mubr.bf16.gmra.mrb[0].mxu0 %v4308
        %v4628 = vpop.f32.mrb[0].mxu0
        %v4629 = vadd.f32 0.0, %v4628
        %v4630 = vpop.f32.mrb[0].mxu0
        %v4631 = vpop.f32.mrb[0].mxu0
        %v4632 = vadd.f32 0.0, %v4631
        %v4633 = vpop.f32.mrb[0].mxu0
        %4634 = vmatprep.mubr.bf16.mxu0 %v4312
        %4635 = vmatmul.mubr.bf16.gmra.mrb[0].mxu0 %v4311
        %v4636 = vpop.f32.mrb[0].mxu0
        %v4637 = vadd.f32 0.0, %v4636
        %v4638 = vpop.f32.mrb[0].mxu0
        %v4639 = vpop.f32.mrb[0].mxu0
        %v4640 = vadd.f32 0.0, %v4639
        %v4641 = vpop.f32.mrb[0].mxu0
        %4642 = vmatprep.mubr.bf16.mxu0 %v4315
        %4643 = vmatmul.mubr.bf16.gmra.mrb[0].mxu0 %v4314
        %v4644 = vpop.f32.mrb[0].mxu0
        %v4645 = vadd.f32 0.0, %v4644
        %v4646 = vpop.f32.mrb[0].mxu0
        %v4647 = vpop.f32.mrb[0].mxu0
        %v4648 = vadd.f32 0.0, %v4647
        %v4649 = vpop.f32.mrb[0].mxu0
        %4650 = vmatprep.mubr.bf16.mxu0 %v4318
        %4651 = vmatmul.mubr.bf16.gmra.mrb[0].mxu0 %v4317
        %v4652 = vpop.f32.mrb[0].mxu0
        %v4653 = vadd.f32 0.0, %v4652
        %v4654 = vpop.f32.mrb[0].mxu0
        %v4655 = vpop.f32.mrb[0].mxu0
        %v4656 = vadd.f32 0.0, %v4655
        %v4657 = vpop.f32.mrb[0].mxu0
        %4658 = vmatprep.mubr.bf16.mxu0 %v4321
        %4659 = vmatmul.mubr.bf16.gmra.mrb[0].mxu0 %v4320
        %v4660 = vpop.f32.mrb[0].mxu0
        %v4661 = vadd.f32 0.0, %v4660
        %v4662 = vpop.f32.mrb[0].mxu0
        %v4663 = vpop.f32.mrb[0].mxu0
        %v4664 = vadd.f32 0.0, %v4663
        %v4665 = vpop.f32.mrb[0].mxu0
        %4666 = vmatprep.mubr.bf16.mxu0 %v4324
        %4667 = vmatmul.mubr.bf16.gmra.mrb[0].mxu0 %v4323
        %v4668 = vpop.f32.mrb[0].mxu0
        %v4669 = vadd.f32 0.0, %v4668
        %v4670 = vpop.f32.mrb[0].mxu0
        %v4671 = vpop.f32.mrb[0].mxu0
        %v4672 = vadd.f32 0.0, %v4671
        %v4673 = vpop.f32.mrb[0].mxu0
        %4674 = vmatprep.mubr.bf16.mxu0 %v4327
        %4675 = vmatmul.mubr.bf16.gmra.mrb[0].mxu0 %v4326
        %v4676 = vpop.f32.mrb[0].mxu0
        %v4677 = vadd.f32 0.0, %v4676
        %v4678 = vpop.f32.mrb[0].mxu0
        %v4679 = vpop.f32.mrb[0].mxu0
        %v4680 = vadd.f32 0.0, %v4679
        %v4681 = vpop.f32.mrb[0].mxu0
        %4682 = vdwg.mxu0
        %4683 = vmatprep.subr.bf16.mxu0 0
        %4684 = vmatpush1.bf16.msra.mxu0 %v4490
        %4685 = vmatprep.subr.bf16.mxu0 0
        %4686 = vmatpush1.bf16.msra.mxu0 %v4491
        %4687 = vmatprep.subr.bf16.mxu0 0
        %4688 = vmatpush1.bf16.msra.mxu0 %v4492
        %4689 = vmatprep.subr.bf16.mxu0 0
        %4690 = vmatpush1.bf16.msra.mxu0 %v4493
        %4691 = vmatprep.subr.bf16.mxu0 0
        %4692 = vmatpush1.bf16.msra.mxu0 %v4494
        %4693 = vmatprep.subr.bf16.mxu0 0
        %4694 = vmatpush1.bf16.msra.mxu0 %v4495
        %4695 = vmatprep.subr.bf16.mxu0 0
        %4696 = vmatpush1.bf16.msra.mxu0 %v4496
        %4697 = vmatprep.subr.bf16.mxu0 0
        %4698 = vmatpush1.bf16.msra.mxu0 %v4497
        %4699 = vmatprep.subr.bf16.mxu0 0
        %4700 = vmatpush1.bf16.msra.mxu0 0
        %4701 = vmatprep.subr.bf16.mxu0 0
        %4702 = vmatpush1.bf16.msra.mxu0 0
        %4703 = vmatprep.subr.bf16.mxu0 0
        %4704 = vmatpush1.bf16.msra.mxu0 0
        %4705 = vmatprep.subr.bf16.mxu0 0
        %4706 = vmatpush1.bf16.msra.mxu0 0
        %4707 = vmatprep.subr.bf16.mxu0 0
        %4708 = vmatpush1.bf16.msra.mxu0 0
        %4709 = vmatprep.subr.bf16.mxu0 0
        %4710 = vmatpush1.bf16.msra.mxu0 0
        %4711 = vmatprep.subr.bf16.mxu0 0
        %4712 = vmatpush1.bf16.msra.mxu0 0
        %4713 = vmatprep.subr.bf16.mxu0 0
        %4714 = vmatpush1.bf16.msra.mxu0 0
        %4715 = vmatprep.mubr.bf16.mxu0 0
        %4716 = vmatmul.mubr.bf16.gmra.mrb[0].mxu0 %v4283
        %v4717 = vpop.f32.mrb[0].mxu0
        %v4718 = vadd.f32 %v4557, %v4717
        %v4719 = vpop.f32.mrb[0].mxu0
        %v4720 = vpop.f32.mrb[0].mxu0
        %v4721 = vadd.f32 %v4560, %v4720
        %v4722 = vpop.f32.mrb[0].mxu0
        %4723 = vmatprep.mubr.bf16.mxu0 0
        %4724 = vmatmul.mubr.bf16.gmra.mrb[0].mxu0 %v4286
        %v4725 = vpop.f32.mrb[0].mxu0
        %v4726 = vadd.f32 %v4565, %v4725
        %v4727 = vpop.f32.mrb[0].mxu0
        %v4728 = vpop.f32.mrb[0].mxu0
        %v4729 = vadd.f32 %v4568, %v4728
        %v4730 = vpop.f32.mrb[0].mxu0
        %4731 = vmatprep.mubr.bf16.mxu0 0
        %4732 = vmatmul.mubr.bf16.gmra.mrb[0].mxu0 %v4289
        %v4733 = vpop.f32.mrb[0].mxu0
        %v4734 = vadd.f32 %v4573, %v4733
        %v4735 = vpop.f32.mrb[0].mxu0
        %v4736 = vpop.f32.mrb[0].mxu0
        %v4737 = vadd.f32 %v4576, %v4736
        %v4738 = vpop.f32.mrb[0].mxu0
        %4739 = vmatprep.mubr.bf16.mxu0 0
        %4740 = vmatmul.mubr.bf16.gmra.mrb[0].mxu0 %v4292
        %v4741 = vpop.f32.mrb[0].mxu0
        %v4742 = vadd.f32 %v4581, %v4741
        %v4743 = vpop.f32.mrb[0].mxu0
        %v4744 = vpop.f32.mrb[0].mxu0
        %v4745 = vadd.f32 %v4584, %v4744
        %v4746 = vpop.f32.mrb[0].mxu0
        %4747 = vmatprep.mubr.bf16.mxu0 0
        %4748 = vmatmul.mubr.bf16.gmra.mrb[0].mxu0 %v4295
        %v4749 = vpop.f32.mrb[0].mxu0
        %v4750 = vadd.f32 %v4589, %v4749
        %v4751 = vpop.f32.mrb[0].mxu0
        %v4752 = vpop.f32.mrb[0].mxu0
        %v4753 = vadd.f32 %v4592, %v4752
        %v4754 = vpop.f32.mrb[0].mxu0
        %4755 = vmatprep.mubr.bf16.mxu0 0
        %4756 = vmatmul.mubr.bf16.gmra.mrb[0].mxu0 %v4298
        %v4757 = vpop.f32.mrb[0].mxu0
        %v4758 = vadd.f32 %v4597, %v4757
        %v4759 = vpop.f32.mrb[0].mxu0
        %v4760 = vpop.f32.mrb[0].mxu0
        %v4761 = vadd.f32 %v4600, %v4760
        %v4762 = vpop.f32.mrb[0].mxu0
        %4763 = vmatprep.mubr.bf16.mxu0 0
        %4764 = vmatmul.mubr.bf16.gmra.mrb[0].mxu0 %v4301
        %v4765 = vpop.f32.mrb[0].mxu0
        %v4766 = vadd.f32 %v4605, %v4765
        %v4767 = vpop.f32.mrb[0].mxu0
        %v4768 = vpop.f32.mrb[0].mxu0
        %v4769 = vadd.f32 %v4608, %v4768
        %v4770 = vpop.f32.mrb[0].mxu0
        %4771 = vmatprep.mubr.bf16.mxu0 0
        %4772 = vmatmul.mubr.bf16.gmra.mrb[0].mxu0 %v4304
        %v4773 = vpop.f32.mrb[0].mxu0
        %v4774 = vadd.f32 %v4613, %v4773
        %v4775 = vpop.f32.mrb[0].mxu0
        %v4776 = vpop.f32.mrb[0].mxu0
        %v4777 = vadd.f32 %v4616, %v4776
        %v4778 = vpop.f32.mrb[0].mxu0
        %4779 = vmatprep.mubr.bf16.mxu0 0
        %4780 = vmatmul.mubr.bf16.gmra.mrb[0].mxu0 %v4307
        %v4781 = vpop.f32.mrb[0].mxu0
        %v4782 = vadd.f32 %v4621, %v4781
        %v4783 = vpop.f32.mrb[0].mxu0
        %v4784 = vpop.f32.mrb[0].mxu0
        %v4785 = vadd.f32 %v4624, %v4784
        %v4786 = vpop.f32.mrb[0].mxu0
        %4787 = vmatprep.mubr.bf16.mxu0 0
        %4788 = vmatmul.mubr.bf16.gmra.mrb[0].mxu0 %v4310
        %v4789 = vpop.f32.mrb[0].mxu0
        %v4790 = vadd.f32 %v4629, %v4789
        %v4791 = vpop.f32.mrb[0].mxu0
        %v4792 = vpop.f32.mrb[0].mxu0
        %v4793 = vadd.f32 %v4632, %v4792
        %v4794 = vpop.f32.mrb[0].mxu0
        %4795 = vmatprep.mubr.bf16.mxu0 0
        %4796 = vmatmul.mubr.bf16.gmra.mrb[0].mxu0 %v4313
        %v4797 = vpop.f32.mrb[0].mxu0
        %v4798 = vadd.f32 %v4637, %v4797
        %v4799 = vpop.f32.mrb[0].mxu0
        %v4800 = vpop.f32.mrb[0].mxu0
        %v4801 = vadd.f32 %v4640, %v4800
        %v4802 = vpop.f32.mrb[0].mxu0
        %4803 = vmatprep.mubr.bf16.mxu0 0
        %4804 = vmatmul.mubr.bf16.gmra.mrb[0].mxu0 %v4316
        %v4805 = vpop.f32.mrb[0].mxu0
        %v4806 = vadd.f32 %v4645, %v4805
        %v4807 = vpop.f32.mrb[0].mxu0
        %v4808 = vpop.f32.mrb[0].mxu0
        %v4809 = vadd.f32 %v4648, %v4808
        %v4810 = vpop.f32.mrb[0].mxu0
        %4811 = vmatprep.mubr.bf16.mxu0 0
        %4812 = vmatmul.mubr.bf16.gmra.mrb[0].mxu0 %v4319
        %v4813 = vpop.f32.mrb[0].mxu0
        %v4814 = vadd.f32 %v4653, %v4813
        %v4815 = vpop.f32.mrb[0].mxu0
        %v4816 = vpop.f32.mrb[0].mxu0
        %v4817 = vadd.f32 %v4656, %v4816
        %v4818 = vpop.f32.mrb[0].mxu0
        %4819 = vmatprep.mubr.bf16.mxu0 0
        %4820 = vmatmul.mubr.bf16.gmra.mrb[0].mxu0 %v4322
        %v4821 = vpop.f32.mrb[0].mxu0
        %v4822 = vadd.f32 %v4661, %v4821
        %v4823 = vpop.f32.mrb[0].mxu0
        %v4824 = vpop.f32.mrb[0].mxu0
        %v4825 = vadd.f32 %v4664, %v4824
        %v4826 = vpop.f32.mrb[0].mxu0
        %4827 = vmatprep.mubr.bf16.mxu0 0
        %4828 = vmatmul.mubr.bf16.gmra.mrb[0].mxu0 %v4325
        %v4829 = vpop.f32.mrb[0].mxu0
        %v4830 = vadd.f32 %v4669, %v4829
        %v4831 = vpop.f32.mrb[0].mxu0
        %v4832 = vpop.f32.mrb[0].mxu0
        %v4833 = vadd.f32 %v4672, %v4832
        %v4834 = vpop.f32.mrb[0].mxu0
        %4835 = vmatprep.mubr.bf16.mxu0 0
        %4836 = vmatmul.mubr.bf16.gmra.mrb[0].mxu0 %v4328
        %v4837 = vpop.f32.mrb[0].mxu0
        %v4838 = vadd.f32 %v4677, %v4837
        %v4839 = vpop.f32.mrb[0].mxu0
        %v4840 = vpop.f32.mrb[0].mxu0
        %v4841 = vadd.f32 %v4680, %v4840
        %v4842 = vpop.f32.mrb[0].mxu0
        %4843 = vdwg.mxu0
        %v4892 = vunpack.c.l.b16 %v4232
        %v4893 = vunpack.c.l.b16 %v4233
        %v4894 = vunpack.c.l.b16 %v4234
        %v4895 = vunpack.c.l.b16 %v4235
        %v4896 = vunpack.c.l.b16 %v4236
        %v4897 = vunpack.c.l.b16 %v4237
        %v4898 = vunpack.c.l.b16 %v4238
        %v4899 = vunpack.c.l.b16 %v4239
        %v4900 = vunpack.c.l.b16 %v4240
        %v4901 = vunpack.c.l.b16 %v4241
        %v4902 = vunpack.c.l.b16 %v4242
        %v4903 = vunpack.c.l.b16 %v4243
        %v4904 = vunpack.c.l.b16 %v4244
        %v4905 = vunpack.c.l.b16 %v4245
        %v4906 = vunpack.c.l.b16 %v4246
        %v4907 = vunpack.c.l.b16 %v4247
        %v4908 = vunpack.c.l.b16 %v4248
        %v4909 = vunpack.c.l.b16 %v4249
        %v4910 = vunpack.c.l.b16 %v4250
        %v4911 = vunpack.c.l.b16 %v4251
        %v4912 = vunpack.c.l.b16 %v4252
        %v4913 = vunpack.c.l.b16 %v4253
        %v4914 = vunpack.c.l.b16 %v4254
        %v4915 = vunpack.c.l.b16 %v4255
        %v4916 = vunpack.c.l.b16 %v4256
        %v4917 = vunpack.c.l.b16 %v4257
        %v4918 = vunpack.c.l.b16 %v4258
        %v4919 = vunpack.c.l.b16 %v4259
        %v4920 = vunpack.c.l.b16 %v4260
        %v4921 = vunpack.c.l.b16 %v4261
        %v4922 = vunpack.c.l.b16 %v4262
        %v4923 = vunpack.c.l.b16 %v4263
        %v4924 = vunpack.c.l.b16 %v4264
        %v4925 = vunpack.c.l.b16 %v4265
        %v4926 = vunpack.c.l.b16 %v4266
        %v4927 = vunpack.c.l.b16 %v4267
        %v4928 = vunpack.c.l.b16 %v4268
        %v4929 = vunpack.c.l.b16 %v4269
        %v4930 = vunpack.c.l.b16 %v4270
        %v4931 = vunpack.c.l.b16 %v4271
        %v4932 = vunpack.c.l.b16 %v4272
        %v4933 = vunpack.c.l.b16 %v4273
        %v4934 = vunpack.c.l.b16 %v4274
        %v4935 = vunpack.c.l.b16 %v4275
        %v4936 = vunpack.c.l.b16 %v4276
        %v4937 = vunpack.c.l.b16 %v4277
        %v4938 = vunpack.c.l.b16 %v4278
        %v4939 = vunpack.c.l.b16 %v4279
        %v4940 = vpack.c.b16 %v4893, %v4892
        %v4941 = vpack.c.b16 %v4895, %v4894
        %v4942 = vpack.c.b16 %v4897, %v4896
        %v4943 = vpack.c.b16 %v4899, %v4898
        %v4944 = vpack.c.b16 %v4901, %v4900
        %v4945 = vpack.c.b16 %v4903, %v4902
        %v4946 = vpack.c.b16 %v4905, %v4904
        %v4947 = vpack.c.b16 %v4907, %v4906
        %v4948 = vpack.c.b16 %v4909, %v4908
        %v4949 = vpack.c.b16 %v4911, %v4910
        %v4950 = vpack.c.b16 %v4913, %v4912
        %v4951 = vpack.c.b16 %v4915, %v4914
        %v4952 = vpack.c.b16 %v4917, %v4916
        %v4953 = vpack.c.b16 %v4919, %v4918
        %v4954 = vpack.c.b16 %v4921, %v4920
        %v4955 = vpack.c.b16 %v4923, %v4922
        %v4956 = vpack.c.b16 %v4925, %v4924
        %v4957 = vpack.c.b16 %v4927, %v4926
        %v4958 = vpack.c.b16 %v4929, %v4928
        %v4959 = vpack.c.b16 %v4931, %v4930
        %v4960 = vpack.c.b16 %v4933, %v4932
        %v4961 = vpack.c.b16 %v4935, %v4934
        %v4962 = vpack.c.b16 %v4937, %v4936
        %v4963 = vpack.c.b16 %v4939, %v4938
        %4988 = vmatprep.subr.bf16.mxu0 0
        %4989 = vmatpush1.bf16.msra.mxu0 %v4940
        %4990 = vmatprep.subr.bf16.mxu0 0
        %4991 = vmatpush1.bf16.msra.mxu0 %v4941
        %4992 = vmatprep.subr.bf16.mxu0 0
        %4993 = vmatpush1.bf16.msra.mxu0 %v4942
        %4994 = vmatprep.subr.bf16.mxu0 0
        %4995 = vmatpush1.bf16.msra.mxu0 %v4943
        %4996 = vmatprep.subr.bf16.mxu0 0
        %4997 = vmatpush1.bf16.msra.mxu0 %v4944
        %4998 = vmatprep.subr.bf16.mxu0 0
        %4999 = vmatpush1.bf16.msra.mxu0 %v4945
        %5000 = vmatprep.subr.bf16.mxu0 0
        %5001 = vmatpush1.bf16.msra.mxu0 %v4946
        %5002 = vmatprep.subr.bf16.mxu0 0
        %5003 = vmatpush1.bf16.msra.mxu0 %v4947
        %5004 = vmatprep.subr.bf16.mxu0 0
        %5005 = vmatpush1.bf16.msra.mxu0 %v4948
        %5006 = vmatprep.subr.bf16.mxu0 0
        %5007 = vmatpush1.bf16.msra.mxu0 %v4949
        %5008 = vmatprep.subr.bf16.mxu0 0
        %5009 = vmatpush1.bf16.msra.mxu0 %v4950
        %5010 = vmatprep.subr.bf16.mxu0 0
        %5011 = vmatpush1.bf16.msra.mxu0 %v4951
        %5012 = vmatprep.subr.bf16.mxu0 0
        %5013 = vmatpush1.bf16.msra.mxu0 %v4952
        %5014 = vmatprep.subr.bf16.mxu0 0
        %5015 = vmatpush1.bf16.msra.mxu0 %v4953
        %5016 = vmatprep.subr.bf16.mxu0 0
        %5017 = vmatpush1.bf16.msra.mxu0 %v4954
        %5018 = vmatprep.subr.bf16.mxu0 0
        %5019 = vmatpush1.bf16.msra.mxu0 %v4955
        %5020 = vmatprep.mubr.bf16.mxu0 %v4185
        %5021 = vmatmul.mubr.bf16.gmra.mrb[0].mxu0 %v4184
        %v5022 = vpop.f32.mrb[0].mxu0
        %v5023 = vadd.f32 %v4718, %v5022
        %v5024 = vpop.f32.mrb[0].mxu0
        %v5025 = vpop.f32.mrb[0].mxu0
        %v5026 = vadd.f32 %v4721, %v5025
        %v5027 = vpop.f32.mrb[0].mxu0
        %5028 = vmatprep.mubr.bf16.mxu0 %v4188
        %5029 = vmatmul.mubr.bf16.gmra.mrb[0].mxu0 %v4187
        %v5030 = vpop.f32.mrb[0].mxu0
        %v5031 = vadd.f32 %v4726, %v5030
        %v5032 = vpop.f32.mrb[0].mxu0
        %v5033 = vpop.f32.mrb[0].mxu0
        %v5034 = vadd.f32 %v4729, %v5033
        %v5035 = vpop.f32.mrb[0].mxu0
        %5036 = vmatprep.mubr.bf16.mxu0 %v4191
        %5037 = vmatmul.mubr.bf16.gmra.mrb[0].mxu0 %v4190
        %v5038 = vpop.f32.mrb[0].mxu0
        %v5039 = vadd.f32 %v4734, %v5038
        %v5040 = vpop.f32.mrb[0].mxu0
        %v5041 = vpop.f32.mrb[0].mxu0
        %v5042 = vadd.f32 %v4737, %v5041
        %v5043 = vpop.f32.mrb[0].mxu0
        %5044 = vmatprep.mubr.bf16.mxu0 %v4194
        %5045 = vmatmul.mubr.bf16.gmra.mrb[0].mxu0 %v4193
        %v5046 = vpop.f32.mrb[0].mxu0
        %v5047 = vadd.f32 %v4742, %v5046
        %v5048 = vpop.f32.mrb[0].mxu0
        %v5049 = vpop.f32.mrb[0].mxu0
        %v5050 = vadd.f32 %v4745, %v5049
        %v5051 = vpop.f32.mrb[0].mxu0
        %5052 = vmatprep.mubr.bf16.mxu0 %v4197
        %5053 = vmatmul.mubr.bf16.gmra.mrb[0].mxu0 %v4196
        %v5054 = vpop.f32.mrb[0].mxu0
        %v5055 = vadd.f32 %v4750, %v5054
        %v5056 = vpop.f32.mrb[0].mxu0
        %v5057 = vpop.f32.mrb[0].mxu0
        %v5058 = vadd.f32 %v4753, %v5057
        %v5059 = vpop.f32.mrb[0].mxu0
        %5060 = vmatprep.mubr.bf16.mxu0 %v4200
        %5061 = vmatmul.mubr.bf16.gmra.mrb[0].mxu0 %v4199
        %v5062 = vpop.f32.mrb[0].mxu0
        %v5063 = vadd.f32 %v4758, %v5062
        %v5064 = vpop.f32.mrb[0].mxu0
        %v5065 = vpop.f32.mrb[0].mxu0
        %v5066 = vadd.f32 %v4761, %v5065
        %v5067 = vpop.f32.mrb[0].mxu0
        %5068 = vmatprep.mubr.bf16.mxu0 %v4203
        %5069 = vmatmul.mubr.bf16.gmra.mrb[0].mxu0 %v4202
        %v5070 = vpop.f32.mrb[0].mxu0
        %v5071 = vadd.f32 %v4766, %v5070
        %v5072 = vpop.f32.mrb[0].mxu0
        %v5073 = vpop.f32.mrb[0].mxu0
        %v5074 = vadd.f32 %v4769, %v5073
        %v5075 = vpop.f32.mrb[0].mxu0
        %5076 = vmatprep.mubr.bf16.mxu0 %v4206
        %5077 = vmatmul.mubr.bf16.gmra.mrb[0].mxu0 %v4205
        %v5078 = vpop.f32.mrb[0].mxu0
        %v5079 = vadd.f32 %v4774, %v5078
        %v5080 = vpop.f32.mrb[0].mxu0
        %v5081 = vpop.f32.mrb[0].mxu0
        %v5082 = vadd.f32 %v4777, %v5081
        %v5083 = vpop.f32.mrb[0].mxu0
        %5084 = vmatprep.mubr.bf16.mxu0 %v4209
        %5085 = vmatmul.mubr.bf16.gmra.mrb[0].mxu0 %v4208
        %v5086 = vpop.f32.mrb[0].mxu0
        %v5087 = vadd.f32 %v4782, %v5086
        %v5088 = vpop.f32.mrb[0].mxu0
        %v5089 = vpop.f32.mrb[0].mxu0
        %v5090 = vadd.f32 %v4785, %v5089
        %v5091 = vpop.f32.mrb[0].mxu0
        %5092 = vmatprep.mubr.bf16.mxu0 %v4212
        %5093 = vmatmul.mubr.bf16.gmra.mrb[0].mxu0 %v4211
        %v5094 = vpop.f32.mrb[0].mxu0
        %v5095 = vadd.f32 %v4790, %v5094
        %v5096 = vpop.f32.mrb[0].mxu0
        %v5097 = vpop.f32.mrb[0].mxu0
        %v5098 = vadd.f32 %v4793, %v5097
        %v5099 = vpop.f32.mrb[0].mxu0
        %5100 = vmatprep.mubr.bf16.mxu0 %v4215
        %5101 = vmatmul.mubr.bf16.gmra.mrb[0].mxu0 %v4214
        %v5102 = vpop.f32.mrb[0].mxu0
        %v5103 = vadd.f32 %v4798, %v5102
        %v5104 = vpop.f32.mrb[0].mxu0
        %v5105 = vpop.f32.mrb[0].mxu0
        %v5106 = vadd.f32 %v4801, %v5105
        %v5107 = vpop.f32.mrb[0].mxu0
        %5108 = vmatprep.mubr.bf16.mxu0 %v4218
        %5109 = vmatmul.mubr.bf16.gmra.mrb[0].mxu0 %v4217
        %v5110 = vpop.f32.mrb[0].mxu0
        %v5111 = vadd.f32 %v4806, %v5110
        %v5112 = vpop.f32.mrb[0].mxu0
        %v5113 = vpop.f32.mrb[0].mxu0
        %v5114 = vadd.f32 %v4809, %v5113
        %v5115 = vpop.f32.mrb[0].mxu0
        %5116 = vmatprep.mubr.bf16.mxu0 %v4221
        %5117 = vmatmul.mubr.bf16.gmra.mrb[0].mxu0 %v4220
        %v5118 = vpop.f32.mrb[0].mxu0
        %v5119 = vadd.f32 %v4814, %v5118
        %v5120 = vpop.f32.mrb[0].mxu0
        %v5121 = vpop.f32.mrb[0].mxu0
        %v5122 = vadd.f32 %v4817, %v5121
        %v5123 = vpop.f32.mrb[0].mxu0
        %5124 = vmatprep.mubr.bf16.mxu0 %v4224
        %5125 = vmatmul.mubr.bf16.gmra.mrb[0].mxu0 %v4223
        %v5126 = vpop.f32.mrb[0].mxu0
        %v5127 = vadd.f32 %v4822, %v5126
        %v5128 = vpop.f32.mrb[0].mxu0
        %v5129 = vpop.f32.mrb[0].mxu0
        %v5130 = vadd.f32 %v4825, %v5129
        %v5131 = vpop.f32.mrb[0].mxu0
        %5132 = vmatprep.mubr.bf16.mxu0 %v4227
        %5133 = vmatmul.mubr.bf16.gmra.mrb[0].mxu0 %v4226
        %v5134 = vpop.f32.mrb[0].mxu0
        %v5135 = vadd.f32 %v4830, %v5134
        %v5136 = vpop.f32.mrb[0].mxu0
        %v5137 = vpop.f32.mrb[0].mxu0
        %v5138 = vadd.f32 %v4833, %v5137
        %v5139 = vpop.f32.mrb[0].mxu0
        %5140 = vmatprep.mubr.bf16.mxu0 %v4230
        %5141 = vmatmul.mubr.bf16.gmra.mrb[0].mxu0 %v4229
        %v5142 = vpop.f32.mrb[0].mxu0
        %v5143 = vadd.f32 %v4838, %v5142
        %v5144 = vpop.f32.mrb[0].mxu0
        %v5145 = vpop.f32.mrb[0].mxu0
        %v5146 = vadd.f32 %v4841, %v5145
        %v5147 = vpop.f32.mrb[0].mxu0
        %5148 = vdwg.mxu0
        %5149 = vmatprep.subr.bf16.mxu0 0
        %5150 = vmatpush1.bf16.msra.mxu0 %v4956
        %5151 = vmatprep.subr.bf16.mxu0 0
        %5152 = vmatpush1.bf16.msra.mxu0 %v4957
        %5153 = vmatprep.subr.bf16.mxu0 0
        %5154 = vmatpush1.bf16.msra.mxu0 %v4958
        %5155 = vmatprep.subr.bf16.mxu0 0
        %5156 = vmatpush1.bf16.msra.mxu0 %v4959
        %5157 = vmatprep.subr.bf16.mxu0 0
        %5158 = vmatpush1.bf16.msra.mxu0 %v4960
        %5159 = vmatprep.subr.bf16.mxu0 0
        %5160 = vmatpush1.bf16.msra.mxu0 %v4961
        %5161 = vmatprep.subr.bf16.mxu0 0
        %5162 = vmatpush1.bf16.msra.mxu0 %v4962
        %5163 = vmatprep.subr.bf16.mxu0 0
        %5164 = vmatpush1.bf16.msra.mxu0 %v4963
        %5165 = vmatprep.subr.bf16.mxu0 0
        %5166 = vmatpush1.bf16.msra.mxu0 0
        %5167 = vmatprep.subr.bf16.mxu0 0
        %5168 = vmatpush1.bf16.msra.mxu0 0
        %5169 = vmatprep.subr.bf16.mxu0 0
        %5170 = vmatpush1.bf16.msra.mxu0 0
        %5171 = vmatprep.subr.bf16.mxu0 0
        %5172 = vmatpush1.bf16.msra.mxu0 0
        %5173 = vmatprep.subr.bf16.mxu0 0
        %5174 = vmatpush1.bf16.msra.mxu0 0
        %5175 = vmatprep.subr.bf16.mxu0 0
        %5176 = vmatpush1.bf16.msra.mxu0 0
        %5177 = vmatprep.subr.bf16.mxu0 0
        %5178 = vmatpush1.bf16.msra.mxu0 0
        %5179 = vmatprep.subr.bf16.mxu0 0
        %5180 = vmatpush1.bf16.msra.mxu0 0
        %5181 = vmatprep.mubr.bf16.mxu0 0
        %5182 = vmatmul.mubr.bf16.gmra.mrb[0].mxu0 %v4186
        %v5183 = vpop.f32.mrb[0].mxu0
        %v5184 = vadd.f32 %v5023, %v5183
        %v5185 = vpop.f32.mrb[0].mxu0
        %v5186 = vpop.f32.mrb[0].mxu0
        %v5187 = vadd.f32 %v5026, %v5186
        %v5188 = vpop.f32.mrb[0].mxu0
        %5189 = vmatprep.mubr.bf16.mxu0 0
        %5190 = vmatmul.mubr.bf16.gmra.mrb[0].mxu0 %v4189
        %v5191 = vpop.f32.mrb[0].mxu0
        %v5192 = vadd.f32 %v5031, %v5191
        %v5193 = vpop.f32.mrb[0].mxu0
        %v5194 = vpop.f32.mrb[0].mxu0
        %v5195 = vadd.f32 %v5034, %v5194
        %v5196 = vpop.f32.mrb[0].mxu0
        %5197 = vmatprep.mubr.bf16.mxu0 0
        %5198 = vmatmul.mubr.bf16.gmra.mrb[0].mxu0 %v4192
        %v5199 = vpop.f32.mrb[0].mxu0
        %v5200 = vadd.f32 %v5039, %v5199
        %v5201 = vpop.f32.mrb[0].mxu0
        %v5202 = vpop.f32.mrb[0].mxu0
        %v5203 = vadd.f32 %v5042, %v5202
        %v5204 = vpop.f32.mrb[0].mxu0
        %5205 = vmatprep.mubr.bf16.mxu0 0
        %5206 = vmatmul.mubr.bf16.gmra.mrb[0].mxu0 %v4195
        %v5207 = vpop.f32.mrb[0].mxu0
        %v5208 = vadd.f32 %v5047, %v5207
        %v5209 = vpop.f32.mrb[0].mxu0
        %v5210 = vpop.f32.mrb[0].mxu0
        %v5211 = vadd.f32 %v5050, %v5210
        %v5212 = vpop.f32.mrb[0].mxu0
        %5213 = vmatprep.mubr.bf16.mxu0 0
        %5214 = vmatmul.mubr.bf16.gmra.mrb[0].mxu0 %v4198
        %v5215 = vpop.f32.mrb[0].mxu0
        %v5216 = vadd.f32 %v5055, %v5215
        %v5217 = vpop.f32.mrb[0].mxu0
        %v5218 = vpop.f32.mrb[0].mxu0
        %v5219 = vadd.f32 %v5058, %v5218
        %v5220 = vpop.f32.mrb[0].mxu0
        %5221 = vmatprep.mubr.bf16.mxu0 0
        %5222 = vmatmul.mubr.bf16.gmra.mrb[0].mxu0 %v4201
        %v5223 = vpop.f32.mrb[0].mxu0
        %v5224 = vadd.f32 %v5063, %v5223
        %v5225 = vpop.f32.mrb[0].mxu0
        %v5226 = vpop.f32.mrb[0].mxu0
        %v5227 = vadd.f32 %v5066, %v5226
        %v5228 = vpop.f32.mrb[0].mxu0
        %5229 = vmatprep.mubr.bf16.mxu0 0
        %5230 = vmatmul.mubr.bf16.gmra.mrb[0].mxu0 %v4204
        %v5231 = vpop.f32.mrb[0].mxu0
        %v5232 = vadd.f32 %v5071, %v5231
        %v5233 = vpop.f32.mrb[0].mxu0
        %v5234 = vpop.f32.mrb[0].mxu0
        %v5235 = vadd.f32 %v5074, %v5234
        %v5236 = vpop.f32.mrb[0].mxu0
        %5237 = vmatprep.mubr.bf16.mxu0 0
        %5238 = vmatmul.mubr.bf16.gmra.mrb[0].mxu0 %v4207
        %v5239 = vpop.f32.mrb[0].mxu0
        %v5240 = vadd.f32 %v5079, %v5239
        %v5241 = vpop.f32.mrb[0].mxu0
        %v5242 = vpop.f32.mrb[0].mxu0
        %v5243 = vadd.f32 %v5082, %v5242
        %v5244 = vpop.f32.mrb[0].mxu0
        %5245 = vmatprep.mubr.bf16.mxu0 0
        %5246 = vmatmul.mubr.bf16.gmra.mrb[0].mxu0 %v4210
        %v5247 = vpop.f32.mrb[0].mxu0
        %v5248 = vadd.f32 %v5087, %v5247
        %v5249 = vpop.f32.mrb[0].mxu0
        %v5250 = vpop.f32.mrb[0].mxu0
        %v5251 = vadd.f32 %v5090, %v5250
        %v5252 = vpop.f32.mrb[0].mxu0
        %5253 = vmatprep.mubr.bf16.mxu0 0
        %5254 = vmatmul.mubr.bf16.gmra.mrb[0].mxu0 %v4213
        %v5255 = vpop.f32.mrb[0].mxu0
        %v5256 = vadd.f32 %v5095, %v5255
        %v5257 = vpop.f32.mrb[0].mxu0
        %v5258 = vpop.f32.mrb[0].mxu0
        %v5259 = vadd.f32 %v5098, %v5258
        %v5260 = vpop.f32.mrb[0].mxu0
        %5261 = vmatprep.mubr.bf16.mxu0 0
        %5262 = vmatmul.mubr.bf16.gmra.mrb[0].mxu0 %v4216
        %v5263 = vpop.f32.mrb[0].mxu0
        %v5264 = vadd.f32 %v5103, %v5263
        %v5265 = vpop.f32.mrb[0].mxu0
        %v5266 = vpop.f32.mrb[0].mxu0
        %v5267 = vadd.f32 %v5106, %v5266
        %v5268 = vpop.f32.mrb[0].mxu0
        %5269 = vmatprep.mubr.bf16.mxu0 0
        %5270 = vmatmul.mubr.bf16.gmra.mrb[0].mxu0 %v4219
        %v5271 = vpop.f32.mrb[0].mxu0
        %v5272 = vadd.f32 %v5111, %v5271
        %v5273 = vpop.f32.mrb[0].mxu0
        %v5274 = vpop.f32.mrb[0].mxu0
        %v5275 = vadd.f32 %v5114, %v5274
        %v5276 = vpop.f32.mrb[0].mxu0
        %5277 = vmatprep.mubr.bf16.mxu0 0
        %5278 = vmatmul.mubr.bf16.gmra.mrb[0].mxu0 %v4222
        %v5279 = vpop.f32.mrb[0].mxu0
        %v5280 = vadd.f32 %v5119, %v5279
        %v5281 = vpop.f32.mrb[0].mxu0
        %v5282 = vpop.f32.mrb[0].mxu0
        %v5283 = vadd.f32 %v5122, %v5282
        %v5284 = vpop.f32.mrb[0].mxu0
        %5285 = vmatprep.mubr.bf16.mxu0 0
        %5286 = vmatmul.mubr.bf16.gmra.mrb[0].mxu0 %v4225
        %v5287 = vpop.f32.mrb[0].mxu0
        %v5288 = vadd.f32 %v5127, %v5287
        %v5289 = vpop.f32.mrb[0].mxu0
        %v5290 = vpop.f32.mrb[0].mxu0
        %v5291 = vadd.f32 %v5130, %v5290
        %v5292 = vpop.f32.mrb[0].mxu0
        %5293 = vmatprep.mubr.bf16.mxu0 0
        %5294 = vmatmul.mubr.bf16.gmra.mrb[0].mxu0 %v4228
        %v5295 = vpop.f32.mrb[0].mxu0
        %v5296 = vadd.f32 %v5135, %v5295
        %v5297 = vpop.f32.mrb[0].mxu0
        %v5298 = vpop.f32.mrb[0].mxu0
        %v5299 = vadd.f32 %v5138, %v5298
        %v5300 = vpop.f32.mrb[0].mxu0
        %5301 = vmatprep.mubr.bf16.mxu0 0
        %5302 = vmatmul.mubr.bf16.gmra.mrb[0].mxu0 %v4231
        %v5303 = vpop.f32.mrb[0].mxu0
        %v5304 = vadd.f32 %v5143, %v5303
        %v5305 = vpop.f32.mrb[0].mxu0
        %v5306 = vpop.f32.mrb[0].mxu0
        %v5307 = vadd.f32 %v5146, %v5306
        %v5308 = vpop.f32.mrb[0].mxu0
        %5309 = vdwg.mxu0
        %s5310 = scalar_lea.vmem [#allocation4], 48
        %v5311 = vld [vmem:[%s5310] sm:$0xff]
        %v5312 = vld [vmem:[%s5310 + $0x8] sm:$0xff]
        %v5313 = vld [vmem:[%s5310 + $0x10] sm:$0xff]
        %v5314 = vld [vmem:[%s5310 + $0x18] sm:$0xff]
        %v5315 = vld [vmem:[%s5310 + $0x20] sm:$0xff]
        %v5316 = vld [vmem:[%s5310 + $0x28] sm:$0xff]
        %v5317 = vld [vmem:[%s5310 + $0x30] sm:$0xff]
        %v5318 = vld [vmem:[%s5310 + $0x38] sm:$0xff]
        %v5319 = vld [vmem:[%s5310 + $0x40] sm:$0xff]
        %v5320 = vld [vmem:[%s5310 + $0x48] sm:$0xff]
        %v5321 = vld [vmem:[%s5310 + $0x50] sm:$0xff]
        %v5322 = vld [vmem:[%s5310 + $0x58] sm:$0xff]
        %v5323 = vld [vmem:[%s5310 + $0x60] sm:$0xff]
        %v5324 = vld [vmem:[%s5310 + $0x68] sm:$0xff]
        %v5325 = vld [vmem:[%s5310 + $0x70] sm:$0xff]
        %v5326 = vld [vmem:[%s5310 + $0x78] sm:$0xff]
        %v5327 = vld [vmem:[%s5310 + $0x80] sm:$0xff]
        %v5328 = vld [vmem:[%s5310 + $0x88] sm:$0xff]
        %v5329 = vld [vmem:[%s5310 + $0x90] sm:$0xff]
        %v5330 = vld [vmem:[%s5310 + $0x98] sm:$0xff]
        %v5331 = vld [vmem:[%s5310 + $0xa0] sm:$0xff]
        %v5332 = vld [vmem:[%s5310 + $0xa8] sm:$0xff]
        %v5333 = vld [vmem:[%s5310 + $0xb0] sm:$0xff]
        %v5334 = vld [vmem:[%s5310 + $0xb8] sm:$0xff]
        %v5335 = vld [vmem:[%s5310 + $0xc0] sm:$0xff]
        %v5336 = vld [vmem:[%s5310 + $0xc8] sm:$0xff]
        %v5337 = vld [vmem:[%s5310 + $0xd0] sm:$0xff]
        %v5338 = vld [vmem:[%s5310 + $0xd8] sm:$0xff]
        %v5339 = vld [vmem:[%s5310 + $0xe0] sm:$0xff]
        %v5340 = vld [vmem:[%s5310 + $0xe8] sm:$0xff]
        %v5341 = vld [vmem:[%s5310 + $0xf0] sm:$0xff]
        %v5342 = vld [vmem:[%s5310 + $0xf8] sm:$0xff]
        %v5343 = vld [vmem:[%s5310 + $0x100] sm:$0xff]
        %v5344 = vld [vmem:[%s5310 + $0x108] sm:$0xff]
        %v5345 = vld [vmem:[%s5310 + $0x110] sm:$0xff]
        %v5346 = vld [vmem:[%s5310 + $0x118] sm:$0xff]
        %v5347 = vld [vmem:[%s5310 + $0x120] sm:$0xff]
        %v5348 = vld [vmem:[%s5310 + $0x128] sm:$0xff]
        %v5349 = vld [vmem:[%s5310 + $0x130] sm:$0xff]
        %v5350 = vld [vmem:[%s5310 + $0x138] sm:$0xff]
        %v5351 = vld [vmem:[%s5310 + $0x140] sm:$0xff]
        %v5352 = vld [vmem:[%s5310 + $0x148] sm:$0xff]
        %v5353 = vld [vmem:[%s5310 + $0x150] sm:$0xff]
        %v5354 = vld [vmem:[%s5310 + $0x158] sm:$0xff]
        %v5355 = vld [vmem:[%s5310 + $0x160] sm:$0xff]
        %v5356 = vld [vmem:[%s5310 + $0x168] sm:$0xff]
        %v5357 = vld [vmem:[%s5310 + $0x170] sm:$0xff]
        %v5358 = vld [vmem:[%s5310 + $0x178] sm:$0xff]
        %s5359 = scalar_lea.vmem [#allocation5], 384
        %v5360 = vld [vmem:[%s5359] sm:$0xf]
        %v5361 = vld [vmem:[%s5359 + $0x4] sm:$0xf]
        %v5362 = vld [vmem:[%s5359 + $0x8] sm:$0xf]
        %v5363 = vld [vmem:[%s5359 + $0xc] sm:$0xf]
        %v5364 = vld [vmem:[%s5359 + $0x10] sm:$0xf]
        %v5365 = vld [vmem:[%s5359 + $0x14] sm:$0xf]
        %v5366 = vld [vmem:[%s5359 + $0x18] sm:$0xf]
        %v5367 = vld [vmem:[%s5359 + $0x1c] sm:$0xf]
        %v5368 = vld [vmem:[%s5359 + $0x20] sm:$0xf]
        %v5369 = vld [vmem:[%s5359 + $0x24] sm:$0xf]
        %v5370 = vld [vmem:[%s5359 + $0x28] sm:$0xf]
        %v5371 = vld [vmem:[%s5359 + $0x2c] sm:$0xf]
        %v5372 = vld [vmem:[%s5359 + $0x30] sm:$0xf]
        %v5373 = vld [vmem:[%s5359 + $0x34] sm:$0xf]
        %v5374 = vld [vmem:[%s5359 + $0x38] sm:$0xf]
        %v5375 = vld [vmem:[%s5359 + $0x3c] sm:$0xf]
        %v5376 = vld [vmem:[%s5359 + $0x40] sm:$0xf]
        %v5377 = vld [vmem:[%s5359 + $0x44] sm:$0xf]
        %v5378 = vld [vmem:[%s5359 + $0x48] sm:$0xf]
        %v5379 = vld [vmem:[%s5359 + $0x4c] sm:$0xf]
        %v5380 = vld [vmem:[%s5359 + $0x50] sm:$0xf]
        %v5381 = vld [vmem:[%s5359 + $0x54] sm:$0xf]
        %v5382 = vld [vmem:[%s5359 + $0x58] sm:$0xf]
        %v5383 = vld [vmem:[%s5359 + $0x5c] sm:$0xf]
        %v5384 = vld [vmem:[%s5359 + $0x60] sm:$0xf]
        %v5385 = vld [vmem:[%s5359 + $0x64] sm:$0xf]
        %v5386 = vld [vmem:[%s5359 + $0x68] sm:$0xf]
        %v5387 = vld [vmem:[%s5359 + $0x6c] sm:$0xf]
        %v5388 = vld [vmem:[%s5359 + $0x70] sm:$0xf]
        %v5389 = vld [vmem:[%s5359 + $0x74] sm:$0xf]
        %v5390 = vld [vmem:[%s5359 + $0x78] sm:$0xf]
        %v5391 = vld [vmem:[%s5359 + $0x7c] sm:$0xf]
        %v5392 = vld [vmem:[%s5359 + $0x80] sm:$0xf]
        %v5393 = vld [vmem:[%s5359 + $0x84] sm:$0xf]
        %v5394 = vld [vmem:[%s5359 + $0x88] sm:$0xf]
        %v5395 = vld [vmem:[%s5359 + $0x8c] sm:$0xf]
        %v5396 = vld [vmem:[%s5359 + $0x90] sm:$0xf]
        %v5397 = vld [vmem:[%s5359 + $0x94] sm:$0xf]
        %v5398 = vld [vmem:[%s5359 + $0x98] sm:$0xf]
        %v5399 = vld [vmem:[%s5359 + $0x9c] sm:$0xf]
        %v5400 = vld [vmem:[%s5359 + $0xa0] sm:$0xf]
        %v5401 = vld [vmem:[%s5359 + $0xa4] sm:$0xf]
        %v5402 = vld [vmem:[%s5359 + $0xa8] sm:$0xf]
        %v5403 = vld [vmem:[%s5359 + $0xac] sm:$0xf]
        %v5404 = vld [vmem:[%s5359 + $0xb0] sm:$0xf]
        %v5405 = vld [vmem:[%s5359 + $0xb4] sm:$0xf]
        %v5406 = vld [vmem:[%s5359 + $0xb8] sm:$0xf]
        %v5407 = vld [vmem:[%s5359 + $0xbc] sm:$0xf]
        %v5456 = vunpack.c.l.b16 %v5360
        %v5457 = vunpack.c.l.b16 %v5361
        %v5458 = vunpack.c.l.b16 %v5362
        %v5459 = vunpack.c.l.b16 %v5363
        %v5460 = vunpack.c.l.b16 %v5364
        %v5461 = vunpack.c.l.b16 %v5365
        %v5462 = vunpack.c.l.b16 %v5366
        %v5463 = vunpack.c.l.b16 %v5367
        %v5464 = vunpack.c.l.b16 %v5368
        %v5465 = vunpack.c.l.b16 %v5369
        %v5466 = vunpack.c.l.b16 %v5370
        %v5467 = vunpack.c.l.b16 %v5371
        %v5468 = vunpack.c.l.b16 %v5372
        %v5469 = vunpack.c.l.b16 %v5373
        %v5470 = vunpack.c.l.b16 %v5374
        %v5471 = vunpack.c.l.b16 %v5375
        %v5472 = vunpack.c.l.b16 %v5376
        %v5473 = vunpack.c.l.b16 %v5377
        %v5474 = vunpack.c.l.b16 %v5378
        %v5475 = vunpack.c.l.b16 %v5379
        %v5476 = vunpack.c.l.b16 %v5380
        %v5477 = vunpack.c.l.b16 %v5381
        %v5478 = vunpack.c.l.b16 %v5382
        %v5479 = vunpack.c.l.b16 %v5383
        %v5480 = vunpack.c.l.b16 %v5384
        %v5481 = vunpack.c.l.b16 %v5385
        %v5482 = vunpack.c.l.b16 %v5386
        %v5483 = vunpack.c.l.b16 %v5387
        %v5484 = vunpack.c.l.b16 %v5388
        %v5485 = vunpack.c.l.b16 %v5389
        %v5486 = vunpack.c.l.b16 %v5390
        %v5487 = vunpack.c.l.b16 %v5391
        %v5488 = vunpack.c.l.b16 %v5392
        %v5489 = vunpack.c.l.b16 %v5393
        %v5490 = vunpack.c.l.b16 %v5394
        %v5491 = vunpack.c.l.b16 %v5395
        %v5492 = vunpack.c.l.b16 %v5396
        %v5493 = vunpack.c.l.b16 %v5397
        %v5494 = vunpack.c.l.b16 %v5398
        %v5495 = vunpack.c.l.b16 %v5399
        %v5496 = vunpack.c.l.b16 %v5400
        %v5497 = vunpack.c.l.b16 %v5401
        %v5498 = vunpack.c.l.b16 %v5402
        %v5499 = vunpack.c.l.b16 %v5403
        %v5500 = vunpack.c.l.b16 %v5404
        %v5501 = vunpack.c.l.b16 %v5405
        %v5502 = vunpack.c.l.b16 %v5406
        %v5503 = vunpack.c.l.b16 %v5407
        %v5504 = vpack.c.b16 %v5457, %v5456
        %v5505 = vpack.c.b16 %v5459, %v5458
        %v5506 = vpack.c.b16 %v5461, %v5460
        %v5507 = vpack.c.b16 %v5463, %v5462
        %v5508 = vpack.c.b16 %v5465, %v5464
        %v5509 = vpack.c.b16 %v5467, %v5466
        %v5510 = vpack.c.b16 %v5469, %v5468
        %v5511 = vpack.c.b16 %v5471, %v5470
        %v5512 = vpack.c.b16 %v5473, %v5472
        %v5513 = vpack.c.b16 %v5475, %v5474
        %v5514 = vpack.c.b16 %v5477, %v5476
        %v5515 = vpack.c.b16 %v5479, %v5478
        %v5516 = vpack.c.b16 %v5481, %v5480
        %v5517 = vpack.c.b16 %v5483, %v5482
        %v5518 = vpack.c.b16 %v5485, %v5484
        %v5519 = vpack.c.b16 %v5487, %v5486
        %v5520 = vpack.c.b16 %v5489, %v5488
        %v5521 = vpack.c.b16 %v5491, %v5490
        %v5522 = vpack.c.b16 %v5493, %v5492
        %v5523 = vpack.c.b16 %v5495, %v5494
        %v5524 = vpack.c.b16 %v5497, %v5496
        %v5525 = vpack.c.b16 %v5499, %v5498
        %v5526 = vpack.c.b16 %v5501, %v5500
        %v5527 = vpack.c.b16 %v5503, %v5502
        %5552 = vmatprep.subr.bf16.mxu0 0
        %5553 = vmatpush1.bf16.msra.mxu0 %v5504
        %5554 = vmatprep.subr.bf16.mxu0 0
        %5555 = vmatpush1.bf16.msra.mxu0 %v5505
        %5556 = vmatprep.subr.bf16.mxu0 0
        %5557 = vmatpush1.bf16.msra.mxu0 %v5506
        %5558 = vmatprep.subr.bf16.mxu0 0
        %5559 = vmatpush1.bf16.msra.mxu0 %v5507
        %5560 = vmatprep.subr.bf16.mxu0 0
        %5561 = vmatpush1.bf16.msra.mxu0 %v5508
        %5562 = vmatprep.subr.bf16.mxu0 0
        %5563 = vmatpush1.bf16.msra.mxu0 %v5509
        %5564 = vmatprep.subr.bf16.mxu0 0
        %5565 = vmatpush1.bf16.msra.mxu0 %v5510
        %5566 = vmatprep.subr.bf16.mxu0 0
        %5567 = vmatpush1.bf16.msra.mxu0 %v5511
        %5568 = vmatprep.subr.bf16.mxu0 0
        %5569 = vmatpush1.bf16.msra.mxu0 %v5512
        %5570 = vmatprep.subr.bf16.mxu0 0
        %5571 = vmatpush1.bf16.msra.mxu0 %v5513
        %5572 = vmatprep.subr.bf16.mxu0 0
        %5573 = vmatpush1.bf16.msra.mxu0 %v5514
        %5574 = vmatprep.subr.bf16.mxu0 0
        %5575 = vmatpush1.bf16.msra.mxu0 %v5515
        %5576 = vmatprep.subr.bf16.mxu0 0
        %5577 = vmatpush1.bf16.msra.mxu0 %v5516
        %5578 = vmatprep.subr.bf16.mxu0 0
        %5579 = vmatpush1.bf16.msra.mxu0 %v5517
        %5580 = vmatprep.subr.bf16.mxu0 0
        %5581 = vmatpush1.bf16.msra.mxu0 %v5518
        %5582 = vmatprep.subr.bf16.mxu0 0
        %5583 = vmatpush1.bf16.msra.mxu0 %v5519
        %5584 = vmatprep.mubr.bf16.mxu0 %v5312
        %5585 = vmatmul.mubr.bf16.gmra.mrb[0].mxu0 %v5311
        %v5586 = vpop.f32.mrb[0].mxu0
        %v5587 = vadd.f32 0.0, %v5586
        %v5588 = vpop.f32.mrb[0].mxu0
        %v5589 = vpop.f32.mrb[0].mxu0
        %v5590 = vadd.f32 0.0, %v5589
        %v5591 = vpop.f32.mrb[0].mxu0
        %5592 = vmatprep.mubr.bf16.mxu0 %v5315
        %5593 = vmatmul.mubr.bf16.gmra.mrb[0].mxu0 %v5314
        %v5594 = vpop.f32.mrb[0].mxu0
        %v5595 = vadd.f32 0.0, %v5594
        %v5596 = vpop.f32.mrb[0].mxu0
        %v5597 = vpop.f32.mrb[0].mxu0
        %v5598 = vadd.f32 0.0, %v5597
        %v5599 = vpop.f32.mrb[0].mxu0
        %5600 = vmatprep.mubr.bf16.mxu0 %v5318
        %5601 = vmatmul.mubr.bf16.gmra.mrb[0].mxu0 %v5317
        %v5602 = vpop.f32.mrb[0].mxu0
        %v5603 = vadd.f32 0.0, %v5602
        %v5604 = vpop.f32.mrb[0].mxu0
        %v5605 = vpop.f32.mrb[0].mxu0
        %v5606 = vadd.f32 0.0, %v5605
        %v5607 = vpop.f32.mrb[0].mxu0
        %5608 = vmatprep.mubr.bf16.mxu0 %v5321
        %5609 = vmatmul.mubr.bf16.gmra.mrb[0].mxu0 %v5320
        %v5610 = vpop.f32.mrb[0].mxu0
        %v5611 = vadd.f32 0.0, %v5610
        %v5612 = vpop.f32.mrb[0].mxu0
        %v5613 = vpop.f32.mrb[0].mxu0
        %v5614 = vadd.f32 0.0, %v5613
        %v5615 = vpop.f32.mrb[0].mxu0
        %5616 = vmatprep.mubr.bf16.mxu0 %v5324
        %5617 = vmatmul.mubr.bf16.gmra.mrb[0].mxu0 %v5323
        %v5618 = vpop.f32.mrb[0].mxu0
        %v5619 = vadd.f32 0.0, %v5618
        %v5620 = vpop.f32.mrb[0].mxu0
        %v5621 = vpop.f32.mrb[0].mxu0
        %v5622 = vadd.f32 0.0, %v5621
        %v5623 = vpop.f32.mrb[0].mxu0
        %5624 = vmatprep.mubr.bf16.mxu0 %v5327
        %5625 = vmatmul.mubr.bf16.gmra.mrb[0].mxu0 %v5326
        %v5626 = vpop.f32.mrb[0].mxu0
        %v5627 = vadd.f32 0.0, %v5626
        %v5628 = vpop.f32.mrb[0].mxu0
        %v5629 = vpop.f32.mrb[0].mxu0
        %v5630 = vadd.f32 0.0, %v5629
        %v5631 = vpop.f32.mrb[0].mxu0
        %5632 = vmatprep.mubr.bf16.mxu0 %v5330
        %5633 = vmatmul.mubr.bf16.gmra.mrb[0].mxu0 %v5329
        %v5634 = vpop.f32.mrb[0].mxu0
        %v5635 = vadd.f32 0.0, %v5634
        %v5636 = vpop.f32.mrb[0].mxu0
        %v5637 = vpop.f32.mrb[0].mxu0
        %v5638 = vadd.f32 0.0, %v5637
        %v5639 = vpop.f32.mrb[0].mxu0
        %5640 = vmatprep.mubr.bf16.mxu0 %v5333
        %5641 = vmatmul.mubr.bf16.gmra.mrb[0].mxu0 %v5332
        %v5642 = vpop.f32.mrb[0].mxu0
        %v5643 = vadd.f32 0.0, %v5642
        %v5644 = vpop.f32.mrb[0].mxu0
        %v5645 = vpop.f32.mrb[0].mxu0
        %v5646 = vadd.f32 0.0, %v5645
        %v5647 = vpop.f32.mrb[0].mxu0
        %5648 = vmatprep.mubr.bf16.mxu0 %v5336
        %5649 = vmatmul.mubr.bf16.gmra.mrb[0].mxu0 %v5335
        %v5650 = vpop.f32.mrb[0].mxu0
        %v5651 = vadd.f32 0.0, %v5650
        %v5652 = vpop.f32.mrb[0].mxu0
        %v5653 = vpop.f32.mrb[0].mxu0
        %v5654 = vadd.f32 0.0, %v5653
        %v5655 = vpop.f32.mrb[0].mxu0
        %5656 = vmatprep.mubr.bf16.mxu0 %v5339
        %5657 = vmatmul.mubr.bf16.gmra.mrb[0].mxu0 %v5338
        %v5658 = vpop.f32.mrb[0].mxu0
        %v5659 = vadd.f32 0.0, %v5658
        %v5660 = vpop.f32.mrb[0].mxu0
        %v5661 = vpop.f32.mrb[0].mxu0
        %v5662 = vadd.f32 0.0, %v5661
        %v5663 = vpop.f32.mrb[0].mxu0
        %5664 = vmatprep.mubr.bf16.mxu0 %v5342
        %5665 = vmatmul.mubr.bf16.gmra.mrb[0].mxu0 %v5341
        %v5666 = vpop.f32.mrb[0].mxu0
        %v5667 = vadd.f32 0.0, %v5666
        %v5668 = vpop.f32.mrb[0].mxu0
        %v5669 = vpop.f32.mrb[0].mxu0
        %v5670 = vadd.f32 0.0, %v5669
        %v5671 = vpop.f32.mrb[0].mxu0
        %5672 = vmatprep.mubr.bf16.mxu0 %v5345
        %5673 = vmatmul.mubr.bf16.gmra.mrb[0].mxu0 %v5344
        %v5674 = vpop.f32.mrb[0].mxu0
        %v5675 = vadd.f32 0.0, %v5674
        %v5676 = vpop.f32.mrb[0].mxu0
        %v5677 = vpop.f32.mrb[0].mxu0
        %v5678 = vadd.f32 0.0, %v5677
        %v5679 = vpop.f32.mrb[0].mxu0
        %5680 = vmatprep.mubr.bf16.mxu0 %v5348
        %5681 = vmatmul.mubr.bf16.gmra.mrb[0].mxu0 %v5347
        %v5682 = vpop.f32.mrb[0].mxu0
        %v5683 = vadd.f32 0.0, %v5682
        %v5684 = vpop.f32.mrb[0].mxu0
        %v5685 = vpop.f32.mrb[0].mxu0
        %v5686 = vadd.f32 0.0, %v5685
        %v5687 = vpop.f32.mrb[0].mxu0
        %5688 = vmatprep.mubr.bf16.mxu0 %v5351
        %5689 = vmatmul.mubr.bf16.gmra.mrb[0].mxu0 %v5350
        %v5690 = vpop.f32.mrb[0].mxu0
        %v5691 = vadd.f32 0.0, %v5690
        %v5692 = vpop.f32.mrb[0].mxu0
        %v5693 = vpop.f32.mrb[0].mxu0
        %v5694 = vadd.f32 0.0, %v5693
        %v5695 = vpop.f32.mrb[0].mxu0
        %5696 = vmatprep.mubr.bf16.mxu0 %v5354
        %5697 = vmatmul.mubr.bf16.gmra.mrb[0].mxu0 %v5353
        %v5698 = vpop.f32.mrb[0].mxu0
        %v5699 = vadd.f32 0.0, %v5698
        %v5700 = vpop.f32.mrb[0].mxu0
        %v5701 = vpop.f32.mrb[0].mxu0
        %v5702 = vadd.f32 0.0, %v5701
        %v5703 = vpop.f32.mrb[0].mxu0
        %5704 = vmatprep.mubr.bf16.mxu0 %v5357
        %5705 = vmatmul.mubr.bf16.gmra.mrb[0].mxu0 %v5356
        %v5706 = vpop.f32.mrb[0].mxu0
        %v5707 = vadd.f32 0.0, %v5706
        %v5708 = vpop.f32.mrb[0].mxu0
        %v5709 = vpop.f32.mrb[0].mxu0
        %v5710 = vadd.f32 0.0, %v5709
        %v5711 = vpop.f32.mrb[0].mxu0
        %5712 = vdwg.mxu0
        %5713 = vmatprep.subr.bf16.mxu0 0
        %5714 = vmatpush1.bf16.msra.mxu0 %v5520
        %5715 = vmatprep.subr.bf16.mxu0 0
        %5716 = vmatpush1.bf16.msra.mxu0 %v5521
        %5717 = vmatprep.subr.bf16.mxu0 0
        %5718 = vmatpush1.bf16.msra.mxu0 %v5522
        %5719 = vmatprep.subr.bf16.mxu0 0
        %5720 = vmatpush1.bf16.msra.mxu0 %v5523
        %5721 = vmatprep.subr.bf16.mxu0 0
        %5722 = vmatpush1.bf16.msra.mxu0 %v5524
        %5723 = vmatprep.subr.bf16.mxu0 0
        %5724 = vmatpush1.bf16.msra.mxu0 %v5525
        %5725 = vmatprep.subr.bf16.mxu0 0
        %5726 = vmatpush1.bf16.msra.mxu0 %v5526
        %5727 = vmatprep.subr.bf16.mxu0 0
        %5728 = vmatpush1.bf16.msra.mxu0 %v5527
        %5729 = vmatprep.subr.bf16.mxu0 0
        %5730 = vmatpush1.bf16.msra.mxu0 0
        %5731 = vmatprep.subr.bf16.mxu0 0
        %5732 = vmatpush1.bf16.msra.mxu0 0
        %5733 = vmatprep.subr.bf16.mxu0 0
        %5734 = vmatpush1.bf16.msra.mxu0 0
        %5735 = vmatprep.subr.bf16.mxu0 0
        %5736 = vmatpush1.bf16.msra.mxu0 0
        %5737 = vmatprep.subr.bf16.mxu0 0
        %5738 = vmatpush1.bf16.msra.mxu0 0
        %5739 = vmatprep.subr.bf16.mxu0 0
        %5740 = vmatpush1.bf16.msra.mxu0 0
        %5741 = vmatprep.subr.bf16.mxu0 0
        %5742 = vmatpush1.bf16.msra.mxu0 0
        %5743 = vmatprep.subr.bf16.mxu0 0
        %5744 = vmatpush1.bf16.msra.mxu0 0
        %5745 = vmatprep.mubr.bf16.mxu0 0
        %5746 = vmatmul.mubr.bf16.gmra.mrb[0].mxu0 %v5313
        %v5747 = vpop.f32.mrb[0].mxu0
        %v5748 = vadd.f32 %v5587, %v5747
        %v5749 = vpop.f32.mrb[0].mxu0
        %v5750 = vpop.f32.mrb[0].mxu0
        %v5751 = vadd.f32 %v5590, %v5750
        %v5752 = vpop.f32.mrb[0].mxu0
        %5753 = vmatprep.mubr.bf16.mxu0 0
        %5754 = vmatmul.mubr.bf16.gmra.mrb[0].mxu0 %v5316
        %v5755 = vpop.f32.mrb[0].mxu0
        %v5756 = vadd.f32 %v5595, %v5755
        %v5757 = vpop.f32.mrb[0].mxu0
        %v5758 = vpop.f32.mrb[0].mxu0
        %v5759 = vadd.f32 %v5598, %v5758
        %v5760 = vpop.f32.mrb[0].mxu0
        %5761 = vmatprep.mubr.bf16.mxu0 0
        %5762 = vmatmul.mubr.bf16.gmra.mrb[0].mxu0 %v5319
        %v5763 = vpop.f32.mrb[0].mxu0
        %v5764 = vadd.f32 %v5603, %v5763
        %v5765 = vpop.f32.mrb[0].mxu0
        %v5766 = vpop.f32.mrb[0].mxu0
        %v5767 = vadd.f32 %v5606, %v5766
        %v5768 = vpop.f32.mrb[0].mxu0
        %5769 = vmatprep.mubr.bf16.mxu0 0
        %5770 = vmatmul.mubr.bf16.gmra.mrb[0].mxu0 %v5322
        %v5771 = vpop.f32.mrb[0].mxu0
        %v5772 = vadd.f32 %v5611, %v5771
        %v5773 = vpop.f32.mrb[0].mxu0
        %v5774 = vpop.f32.mrb[0].mxu0
        %v5775 = vadd.f32 %v5614, %v5774
        %v5776 = vpop.f32.mrb[0].mxu0
        %5777 = vmatprep.mubr.bf16.mxu0 0
        %5778 = vmatmul.mubr.bf16.gmra.mrb[0].mxu0 %v5325
        %v5779 = vpop.f32.mrb[0].mxu0
        %v5780 = vadd.f32 %v5619, %v5779
        %v5781 = vpop.f32.mrb[0].mxu0
        %v5782 = vpop.f32.mrb[0].mxu0
        %v5783 = vadd.f32 %v5622, %v5782
        %v5784 = vpop.f32.mrb[0].mxu0
        %5785 = vmatprep.mubr.bf16.mxu0 0
        %5786 = vmatmul.mubr.bf16.gmra.mrb[0].mxu0 %v5328
        %v5787 = vpop.f32.mrb[0].mxu0
        %v5788 = vadd.f32 %v5627, %v5787
        %v5789 = vpop.f32.mrb[0].mxu0
        %v5790 = vpop.f32.mrb[0].mxu0
        %v5791 = vadd.f32 %v5630, %v5790
        %v5792 = vpop.f32.mrb[0].mxu0
        %5793 = vmatprep.mubr.bf16.mxu0 0
        %5794 = vmatmul.mubr.bf16.gmra.mrb[0].mxu0 %v5331
        %v5795 = vpop.f32.mrb[0].mxu0
        %v5796 = vadd.f32 %v5635, %v5795
        %v5797 = vpop.f32.mrb[0].mxu0
        %v5798 = vpop.f32.mrb[0].mxu0
        %v5799 = vadd.f32 %v5638, %v5798
        %v5800 = vpop.f32.mrb[0].mxu0
        %5801 = vmatprep.mubr.bf16.mxu0 0
        %5802 = vmatmul.mubr.bf16.gmra.mrb[0].mxu0 %v5334
        %v5803 = vpop.f32.mrb[0].mxu0
        %v5804 = vadd.f32 %v5643, %v5803
        %v5805 = vpop.f32.mrb[0].mxu0
        %v5806 = vpop.f32.mrb[0].mxu0
        %v5807 = vadd.f32 %v5646, %v5806
        %v5808 = vpop.f32.mrb[0].mxu0
        %5809 = vmatprep.mubr.bf16.mxu0 0
        %5810 = vmatmul.mubr.bf16.gmra.mrb[0].mxu0 %v5337
        %v5811 = vpop.f32.mrb[0].mxu0
        %v5812 = vadd.f32 %v5651, %v5811
        %v5813 = vpop.f32.mrb[0].mxu0
        %v5814 = vpop.f32.mrb[0].mxu0
        %v5815 = vadd.f32 %v5654, %v5814
        %v5816 = vpop.f32.mrb[0].mxu0
        %5817 = vmatprep.mubr.bf16.mxu0 0
        %5818 = vmatmul.mubr.bf16.gmra.mrb[0].mxu0 %v5340
        %v5819 = vpop.f32.mrb[0].mxu0
        %v5820 = vadd.f32 %v5659, %v5819
        %v5821 = vpop.f32.mrb[0].mxu0
        %v5822 = vpop.f32.mrb[0].mxu0
        %v5823 = vadd.f32 %v5662, %v5822
        %v5824 = vpop.f32.mrb[0].mxu0
        %5825 = vmatprep.mubr.bf16.mxu0 0
        %5826 = vmatmul.mubr.bf16.gmra.mrb[0].mxu0 %v5343
        %v5827 = vpop.f32.mrb[0].mxu0
        %v5828 = vadd.f32 %v5667, %v5827
        %v5829 = vpop.f32.mrb[0].mxu0
        %v5830 = vpop.f32.mrb[0].mxu0
        %v5831 = vadd.f32 %v5670, %v5830
        %v5832 = vpop.f32.mrb[0].mxu0
        %5833 = vmatprep.mubr.bf16.mxu0 0
        %5834 = vmatmul.mubr.bf16.gmra.mrb[0].mxu0 %v5346
        %v5835 = vpop.f32.mrb[0].mxu0
        %v5836 = vadd.f32 %v5675, %v5835
        %v5837 = vpop.f32.mrb[0].mxu0
        %v5838 = vpop.f32.mrb[0].mxu0
        %v5839 = vadd.f32 %v5678, %v5838
        %v5840 = vpop.f32.mrb[0].mxu0
        %5841 = vmatprep.mubr.bf16.mxu0 0
        %5842 = vmatmul.mubr.bf16.gmra.mrb[0].mxu0 %v5349
        %v5843 = vpop.f32.mrb[0].mxu0
        %v5844 = vadd.f32 %v5683, %v5843
        %v5845 = vpop.f32.mrb[0].mxu0
        %v5846 = vpop.f32.mrb[0].mxu0
        %v5847 = vadd.f32 %v5686, %v5846
        %v5848 = vpop.f32.mrb[0].mxu0
        %5849 = vmatprep.mubr.bf16.mxu0 0
        %5850 = vmatmul.mubr.bf16.gmra.mrb[0].mxu0 %v5352
        %v5851 = vpop.f32.mrb[0].mxu0
        %v5852 = vadd.f32 %v5691, %v5851
        %v5853 = vpop.f32.mrb[0].mxu0
        %v5854 = vpop.f32.mrb[0].mxu0
        %v5855 = vadd.f32 %v5694, %v5854
        %v5856 = vpop.f32.mrb[0].mxu0
        %5857 = vmatprep.mubr.bf16.mxu0 0
        %5858 = vmatmul.mubr.bf16.gmra.mrb[0].mxu0 %v5355
        %v5859 = vpop.f32.mrb[0].mxu0
        %v5860 = vadd.f32 %v5699, %v5859
        %v5861 = vpop.f32.mrb[0].mxu0
        %v5862 = vpop.f32.mrb[0].mxu0
        %v5863 = vadd.f32 %v5702, %v5862
        %v5864 = vpop.f32.mrb[0].mxu0
        %5865 = vmatprep.mubr.bf16.mxu0 0
        %5866 = vmatmul.mubr.bf16.gmra.mrb[0].mxu0 %v5358
        %v5867 = vpop.f32.mrb[0].mxu0
        %v5868 = vadd.f32 %v5707, %v5867
        %v5869 = vpop.f32.mrb[0].mxu0
        %v5870 = vpop.f32.mrb[0].mxu0
        %v5871 = vadd.f32 %v5710, %v5870
        %v5872 = vpop.f32.mrb[0].mxu0
        %5873 = vdwg.mxu0
        %v5874 = vadd.f32 %v5184, %v5748
        %v5875 = vadd.f32 %v5187, %v5751
        %v5876 = vadd.f32 %v5192, %v5756
        %v5877 = vadd.f32 %v5195, %v5759
        %v5878 = vadd.f32 %v5200, %v5764
        %v5879 = vadd.f32 %v5203, %v5767
        %v5880 = vadd.f32 %v5208, %v5772
        %v5881 = vadd.f32 %v5211, %v5775
        %v5882 = vadd.f32 %v5216, %v5780
        %v5883 = vadd.f32 %v5219, %v5783
        %v5884 = vadd.f32 %v5224, %v5788
        %v5885 = vadd.f32 %v5227, %v5791
        %v5886 = vadd.f32 %v5232, %v5796
        %v5887 = vadd.f32 %v5235, %v5799
        %v5888 = vadd.f32 %v5240, %v5804
        %v5889 = vadd.f32 %v5243, %v5807
        %v5890 = vadd.f32 %v5248, %v5812
        %v5891 = vadd.f32 %v5251, %v5815
        %v5892 = vadd.f32 %v5256, %v5820
        %v5893 = vadd.f32 %v5259, %v5823
        %v5894 = vadd.f32 %v5264, %v5828
        %v5895 = vadd.f32 %v5267, %v5831
        %v5896 = vadd.f32 %v5272, %v5836
        %v5897 = vadd.f32 %v5275, %v5839
        %v5898 = vadd.f32 %v5280, %v5844
        %v5899 = vadd.f32 %v5283, %v5847
        %v5900 = vadd.f32 %v5288, %v5852
        %v5901 = vadd.f32 %v5291, %v5855
        %v5902 = vadd.f32 %v5296, %v5860
        %v5903 = vadd.f32 %v5299, %v5863
        %v5904 = vadd.f32 %v5304, %v5868
        %v5905 = vadd.f32 %v5307, %v5871
        %v5906 = vld [vmem:[%s4] sm:$0x1]
        %v5908 = vlaneseq
        %v5909 = vshrl.u32 %v5908, 7
        %v5910 = vsub.s32 0, %v5909
        %v5911 = vrot.slane %v5906, %v5910
        %v5913 = vadd.f32 %v5874, %v5911
        %v5914 = vadd.f32 %v5875, %v5911
        %v5915 = vadd.f32 %v5876, %v5911
        %v5916 = vadd.f32 %v5877, %v5911
        %v5917 = vadd.f32 %v5878, %v5911
        %v5918 = vadd.f32 %v5879, %v5911
        %v5919 = vadd.f32 %v5880, %v5911
        %v5920 = vadd.f32 %v5881, %v5911
        %v5921 = vadd.f32 %v5882, %v5911
        %v5922 = vadd.f32 %v5883, %v5911
        %v5923 = vadd.f32 %v5884, %v5911
        %v5924 = vadd.f32 %v5885, %v5911
        %v5925 = vadd.f32 %v5886, %v5911
        %v5926 = vadd.f32 %v5887, %v5911
        %v5927 = vadd.f32 %v5888, %v5911
        %v5928 = vadd.f32 %v5889, %v5911
        %v5929 = vadd.f32 %v5890, %v5911
        %v5930 = vadd.f32 %v5891, %v5911
        %v5931 = vadd.f32 %v5892, %v5911
        %v5932 = vadd.f32 %v5893, %v5911
        %v5933 = vadd.f32 %v5894, %v5911
        %v5934 = vadd.f32 %v5895, %v5911
        %v5935 = vadd.f32 %v5896, %v5911
        %v5936 = vadd.f32 %v5897, %v5911
        %v5937 = vadd.f32 %v5898, %v5911
        %v5938 = vadd.f32 %v5899, %v5911
        %v5939 = vadd.f32 %v5900, %v5911
        %v5940 = vadd.f32 %v5901, %v5911
        %v5941 = vadd.f32 %v5902, %v5911
        %v5942 = vadd.f32 %v5903, %v5911
        %v5943 = vadd.f32 %v5904, %v5911
        %v5944 = vadd.f32 %v5905, %v5911
        %v5945 = vxor.u32 %v5913, 2147483648
        %v5946 = vxor.u32 %v5914, 2147483648
        %v5947 = vxor.u32 %v5915, 2147483648
        %v5948 = vxor.u32 %v5916, 2147483648
        %v5949 = vxor.u32 %v5917, 2147483648
        %v5950 = vxor.u32 %v5918, 2147483648
        %v5951 = vxor.u32 %v5919, 2147483648
        %v5952 = vxor.u32 %v5920, 2147483648
        %v5953 = vxor.u32 %v5921, 2147483648
        %v5954 = vxor.u32 %v5922, 2147483648
        %v5955 = vxor.u32 %v5923, 2147483648
        %v5956 = vxor.u32 %v5924, 2147483648
        %v5957 = vxor.u32 %v5925, 2147483648
        %v5958 = vxor.u32 %v5926, 2147483648
        %v5959 = vxor.u32 %v5927, 2147483648
        %v5960 = vxor.u32 %v5928, 2147483648
        %v5961 = vxor.u32 %v5929, 2147483648
        %v5962 = vxor.u32 %v5930, 2147483648
        %v5963 = vxor.u32 %v5931, 2147483648
        %v5964 = vxor.u32 %v5932, 2147483648
        %v5965 = vxor.u32 %v5933, 2147483648
        %v5966 = vxor.u32 %v5934, 2147483648
        %v5967 = vxor.u32 %v5935, 2147483648
        %v5968 = vxor.u32 %v5936, 2147483648
        %v5969 = vxor.u32 %v5937, 2147483648
        %v5970 = vxor.u32 %v5938, 2147483648
        %v5971 = vxor.u32 %v5939, 2147483648
        %v5972 = vxor.u32 %v5940, 2147483648
        %v5973 = vxor.u32 %v5941, 2147483648
        %v5974 = vxor.u32 %v5942, 2147483648
        %v5975 = vxor.u32 %v5943, 2147483648
        %v5976 = vxor.u32 %v5944, 2147483648
        %v5977 = vmul.f32 %v5945, 1.442695
        %v5978 = vpow.pop %v5977
        %v5979 = vmul.f32 %v5946, 1.442695
        %v5980 = vpow.pop %v5979
        %v5981 = vmul.f32 %v5947, 1.442695
        %v5982 = vpow.pop %v5981
        %v5983 = vmul.f32 %v5948, 1.442695
        %v5984 = vpow.pop %v5983
        %v5985 = vmul.f32 %v5949, 1.442695
        %v5986 = vpow.pop %v5985
        %v5987 = vmul.f32 %v5950, 1.442695
        %v5988 = vpow.pop %v5987
        %v5989 = vmul.f32 %v5951, 1.442695
        %v5990 = vpow.pop %v5989
        %v5991 = vmul.f32 %v5952, 1.442695
        %v5992 = vpow.pop %v5991
        %v5993 = vmul.f32 %v5953, 1.442695
        %v5994 = vpow.pop %v5993
        %v5995 = vmul.f32 %v5954, 1.442695
        %v5996 = vpow.pop %v5995
        %v5997 = vmul.f32 %v5955, 1.442695
        %v5998 = vpow.pop %v5997
        %v5999 = vmul.f32 %v5956, 1.442695
        %v6000 = vpow.pop %v5999
        %v6001 = vmul.f32 %v5957, 1.442695
        %v6002 = vpow.pop %v6001
        %v6003 = vmul.f32 %v5958, 1.442695
        %v6004 = vpow.pop %v6003
        %v6005 = vmul.f32 %v5959, 1.442695
        %v6006 = vpow.pop %v6005
        %v6007 = vmul.f32 %v5960, 1.442695
        %v6008 = vpow.pop %v6007
        %v6009 = vmul.f32 %v5961, 1.442695
        %v6010 = vpow.pop %v6009
        %v6011 = vmul.f32 %v5962, 1.442695
        %v6012 = vpow.pop %v6011
        %v6013 = vmul.f32 %v5963, 1.442695
        %v6014 = vpow.pop %v6013
        %v6015 = vmul.f32 %v5964, 1.442695
        %v6016 = vpow.pop %v6015
        %v6017 = vmul.f32 %v5965, 1.442695
        %v6018 = vpow.pop %v6017
        %v6019 = vmul.f32 %v5966, 1.442695
        %v6020 = vpow.pop %v6019
        %v6021 = vmul.f32 %v5967, 1.442695
        %v6022 = vpow.pop %v6021
        %v6023 = vmul.f32 %v5968, 1.442695
        %v6024 = vpow.pop %v6023
        %v6025 = vmul.f32 %v5969, 1.442695
        %v6026 = vpow.pop %v6025
        %v6027 = vmul.f32 %v5970, 1.442695
        %v6028 = vpow.pop %v6027
        %v6029 = vmul.f32 %v5971, 1.442695
        %v6030 = vpow.pop %v6029
        %v6031 = vmul.f32 %v5972, 1.442695
        %v6032 = vpow.pop %v6031
        %v6033 = vmul.f32 %v5973, 1.442695
        %v6034 = vpow.pop %v6033
        %v6035 = vmul.f32 %v5974, 1.442695
        %v6036 = vpow.pop %v6035
        %v6037 = vmul.f32 %v5975, 1.442695
        %v6038 = vpow.pop %v6037
        %v6039 = vmul.f32 %v5976, 1.442695
        %v6040 = vpow.pop %v6039
        %v6041 = vadd.f32 %v5978, 1.0
        %v6042 = vadd.f32 %v5980, 1.0
        %v6043 = vadd.f32 %v5982, 1.0
        %v6044 = vadd.f32 %v5984, 1.0
        %v6045 = vadd.f32 %v5986, 1.0
        %v6046 = vadd.f32 %v5988, 1.0
        %v6047 = vadd.f32 %v5990, 1.0
        %v6048 = vadd.f32 %v5992, 1.0
        %v6049 = vadd.f32 %v5994, 1.0
        %v6050 = vadd.f32 %v5996, 1.0
        %v6051 = vadd.f32 %v5998, 1.0
        %v6052 = vadd.f32 %v6000, 1.0
        %v6053 = vadd.f32 %v6002, 1.0
        %v6054 = vadd.f32 %v6004, 1.0
        %v6055 = vadd.f32 %v6006, 1.0
        %v6056 = vadd.f32 %v6008, 1.0
        %v6057 = vadd.f32 %v6010, 1.0
        %v6058 = vadd.f32 %v6012, 1.0
        %v6059 = vadd.f32 %v6014, 1.0
        %v6060 = vadd.f32 %v6016, 1.0
        %v6061 = vadd.f32 %v6018, 1.0
        %v6062 = vadd.f32 %v6020, 1.0
        %v6063 = vadd.f32 %v6022, 1.0
        %v6064 = vadd.f32 %v6024, 1.0
        %v6065 = vadd.f32 %v6026, 1.0
        %v6066 = vadd.f32 %v6028, 1.0
        %v6067 = vadd.f32 %v6030, 1.0
        %v6068 = vadd.f32 %v6032, 1.0
        %v6069 = vadd.f32 %v6034, 1.0
        %v6070 = vadd.f32 %v6036, 1.0
        %v6071 = vadd.f32 %v6038, 1.0
        %v6072 = vadd.f32 %v6040, 1.0
        %v6073 = vrcp.pop %v6041
        %v6074 = vmul.f32 1.0, %v6073
        %v6075 = vrcp.pop %v6042
        %v6076 = vmul.f32 1.0, %v6075
        %v6077 = vrcp.pop %v6043
        %v6078 = vmul.f32 1.0, %v6077
        %v6079 = vrcp.pop %v6044
        %v6080 = vmul.f32 1.0, %v6079
        %v6081 = vrcp.pop %v6045
        %v6082 = vmul.f32 1.0, %v6081
        %v6083 = vrcp.pop %v6046
        %v6084 = vmul.f32 1.0, %v6083
        %v6085 = vrcp.pop %v6047
        %v6086 = vmul.f32 1.0, %v6085
        %v6087 = vrcp.pop %v6048
        %v6088 = vmul.f32 1.0, %v6087
        %v6089 = vrcp.pop %v6049
        %v6090 = vmul.f32 1.0, %v6089
        %v6091 = vrcp.pop %v6050
        %v6092 = vmul.f32 1.0, %v6091
        %v6093 = vrcp.pop %v6051
        %v6094 = vmul.f32 1.0, %v6093
        %v6095 = vrcp.pop %v6052
        %v6096 = vmul.f32 1.0, %v6095
        %v6097 = vrcp.pop %v6053
        %v6098 = vmul.f32 1.0, %v6097
        %v6099 = vrcp.pop %v6054
        %v6100 = vmul.f32 1.0, %v6099
        %v6101 = vrcp.pop %v6055
        %v6102 = vmul.f32 1.0, %v6101
        %v6103 = vrcp.pop %v6056
        %v6104 = vmul.f32 1.0, %v6103
        %v6105 = vrcp.pop %v6057
        %v6106 = vmul.f32 1.0, %v6105
        %v6107 = vrcp.pop %v6058
        %v6108 = vmul.f32 1.0, %v6107
        %v6109 = vrcp.pop %v6059
        %v6110 = vmul.f32 1.0, %v6109
        %v6111 = vrcp.pop %v6060
        %v6112 = vmul.f32 1.0, %v6111
        %v6113 = vrcp.pop %v6061
        %v6114 = vmul.f32 1.0, %v6113
        %v6115 = vrcp.pop %v6062
        %v6116 = vmul.f32 1.0, %v6115
        %v6117 = vrcp.pop %v6063
        %v6118 = vmul.f32 1.0, %v6117
        %v6119 = vrcp.pop %v6064
        %v6120 = vmul.f32 1.0, %v6119
        %v6121 = vrcp.pop %v6065
        %v6122 = vmul.f32 1.0, %v6121
        %v6123 = vrcp.pop %v6066
        %v6124 = vmul.f32 1.0, %v6123
        %v6125 = vrcp.pop %v6067
        %v6126 = vmul.f32 1.0, %v6125
        %v6127 = vrcp.pop %v6068
        %v6128 = vmul.f32 1.0, %v6127
        %v6129 = vrcp.pop %v6069
        %v6130 = vmul.f32 1.0, %v6129
        %v6131 = vrcp.pop %v6070
        %v6132 = vmul.f32 1.0, %v6131
        %v6133 = vrcp.pop %v6071
        %v6134 = vmul.f32 1.0, %v6133
        %v6135 = vrcp.pop %v6072
        %v6136 = vmul.f32 1.0, %v6135
        %v6137 = vmul.f32 %v5913, %v6074
        %v6138 = vmul.f32 %v5914, %v6076
        %v6139 = vmul.f32 %v5915, %v6078
        %v6140 = vmul.f32 %v5916, %v6080
        %v6141 = vmul.f32 %v5917, %v6082
        %v6142 = vmul.f32 %v5918, %v6084
        %v6143 = vmul.f32 %v5919, %v6086
        %v6144 = vmul.f32 %v5920, %v6088
        %v6145 = vmul.f32 %v5921, %v6090
        %v6146 = vmul.f32 %v5922, %v6092
        %v6147 = vmul.f32 %v5923, %v6094
        %v6148 = vmul.f32 %v5924, %v6096
        %v6149 = vmul.f32 %v5925, %v6098
        %v6150 = vmul.f32 %v5926, %v6100
        %v6151 = vmul.f32 %v5927, %v6102
        %v6152 = vmul.f32 %v5928, %v6104
        %v6153 = vmul.f32 %v5929, %v6106
        %v6154 = vmul.f32 %v5930, %v6108
        %v6155 = vmul.f32 %v5931, %v6110
        %v6156 = vmul.f32 %v5932, %v6112
        %v6157 = vmul.f32 %v5933, %v6114
        %v6158 = vmul.f32 %v5934, %v6116
        %v6159 = vmul.f32 %v5935, %v6118
        %v6160 = vmul.f32 %v5936, %v6120
        %v6161 = vmul.f32 %v5937, %v6122
        %v6162 = vmul.f32 %v5938, %v6124
        %v6163 = vmul.f32 %v5939, %v6126
        %v6164 = vmul.f32 %v5940, %v6128
        %v6165 = vmul.f32 %v5941, %v6130
        %v6166 = vmul.f32 %v5942, %v6132
        %v6167 = vmul.f32 %v5943, %v6134
        %v6168 = vmul.f32 %v5944, %v6136
        %s6169 = scalar_lea.vmem %s237, 12
        %v6170 = vld [vmem:[%s6169] sm:$0xf]
        %v6171 = vld [vmem:[%s6169 + $0x4] sm:$0xf]
        %v6172 = vld [vmem:[%s6169 + $0x8] sm:$0x1]
        %v6173 = vld [vmem:[%s6169 + $0xc] sm:$0xf]
        %v6174 = vld [vmem:[%s6169 + $0x10] sm:$0xf]
        %v6175 = vld [vmem:[%s6169 + $0x14] sm:$0x1]
        %v6176 = vld [vmem:[%s6169 + $0x18] sm:$0xf]
        %v6177 = vld [vmem:[%s6169 + $0x1c] sm:$0xf]
        %v6178 = vld [vmem:[%s6169 + $0x20] sm:$0x1]
        %v6179 = vld [vmem:[%s6169 + $0x24] sm:$0xf]
        %v6180 = vld [vmem:[%s6169 + $0x28] sm:$0xf]
        %v6181 = vld [vmem:[%s6169 + $0x2c] sm:$0x1]
        %v6182 = vld [vmem:[%s6169 + $0x30] sm:$0xf]
        %v6183 = vld [vmem:[%s6169 + $0x34] sm:$0xf]
        %v6184 = vld [vmem:[%s6169 + $0x38] sm:$0x1]
        %v6185 = vld [vmem:[%s6169 + $0x3c] sm:$0xf]
        %v6186 = vld [vmem:[%s6169 + $0x40] sm:$0xf]
        %v6187 = vld [vmem:[%s6169 + $0x44] sm:$0x1]
        %v6188 = vld [vmem:[%s6169 + $0x48] sm:$0xf]
        %v6189 = vld [vmem:[%s6169 + $0x4c] sm:$0xf]
        %v6190 = vld [vmem:[%s6169 + $0x50] sm:$0x1]
        %v6191 = vld [vmem:[%s6169 + $0x54] sm:$0xf]
        %v6192 = vld [vmem:[%s6169 + $0x58] sm:$0xf]
        %v6193 = vld [vmem:[%s6169 + $0x5c] sm:$0x1]
        %v6194 = vld [vmem:[%s6169 + $0x60] sm:$0xf]
        %v6195 = vld [vmem:[%s6169 + $0x64] sm:$0xf]
        %v6196 = vld [vmem:[%s6169 + $0x68] sm:$0x1]
        %v6197 = vld [vmem:[%s6169 + $0x6c] sm:$0xf]
        %v6198 = vld [vmem:[%s6169 + $0x70] sm:$0xf]
        %v6199 = vld [vmem:[%s6169 + $0x74] sm:$0x1]
        %v6200 = vld [vmem:[%s6169 + $0x78] sm:$0xf]
        %v6201 = vld [vmem:[%s6169 + $0x7c] sm:$0xf]
        %v6202 = vld [vmem:[%s6169 + $0x80] sm:$0x1]
        %v6203 = vld [vmem:[%s6169 + $0x84] sm:$0xf]
        %v6204 = vld [vmem:[%s6169 + $0x88] sm:$0xf]
        %v6205 = vld [vmem:[%s6169 + $0x8c] sm:$0x1]
        %v6206 = vld [vmem:[%s6169 + $0x90] sm:$0xf]
        %v6207 = vld [vmem:[%s6169 + $0x94] sm:$0xf]
        %v6208 = vld [vmem:[%s6169 + $0x98] sm:$0x1]
        %v6209 = vld [vmem:[%s6169 + $0x9c] sm:$0xf]
        %v6210 = vld [vmem:[%s6169 + $0xa0] sm:$0xf]
        %v6211 = vld [vmem:[%s6169 + $0xa4] sm:$0x1]
        %v6212 = vld [vmem:[%s6169 + $0xa8] sm:$0xf]
        %v6213 = vld [vmem:[%s6169 + $0xac] sm:$0xf]
        %v6214 = vld [vmem:[%s6169 + $0xb0] sm:$0x1]
        %v6215 = vld [vmem:[%s6169 + $0xb4] sm:$0xf]
        %v6216 = vld [vmem:[%s6169 + $0xb8] sm:$0xf]
        %v6217 = vld [vmem:[%s6169 + $0xbc] sm:$0x1]
        %vm6218 = vsmask.f32 3328
        %vm6219 = vsmask.f32 7440
        %vm6220 = vmor %vm6218, %vm6219
        %v6222 = vshrl.u32 %v6170, 16
        %v6224 = vrot.slane %v6222, 4
        %v6225 = vshll.u32 %v6170, 16
        %v6227 = vrot.slane %v6225, 5
        %v6228 = vor.u32 %v6224, %v6227
        %v6229 = vrot.slane %v6228, 4
        %v6231 = vshll.u32 %v6171, 16
        %v6233 = vrot.slane %v6231, 5
        %v6234 = vsel %vm6220, %v6229, %v6233
        %v6235 = vshrl.u32 %v6171, 16
        %v6237 = vrot.slane %v6235, 4
        %v6238 = vor.u32 %v6237, %v6233
        %v6239 = vrot.slane %v6238, 4
        %v6241 = vshll.u32 %v6172, 16
        %v6243 = vrot.slane %v6241, 5
        %v6244 = vsel %vm6220, %v6239, %v6243
        %v6246 = vshrl.u32 %v6173, 16
        %v6248 = vrot.slane %v6246, 4
        %v6249 = vshll.u32 %v6173, 16
        %v6251 = vrot.slane %v6249, 5
        %v6252 = vor.u32 %v6248, %v6251
        %v6253 = vrot.slane %v6252, 4
        %v6255 = vshll.u32 %v6174, 16
        %v6257 = vrot.slane %v6255, 5
        %v6258 = vsel %vm6220, %v6253, %v6257
        %v6259 = vshrl.u32 %v6174, 16
        %v6261 = vrot.slane %v6259, 4
        %v6262 = vor.u32 %v6261, %v6257
        %v6263 = vrot.slane %v6262, 4
        %v6265 = vshll.u32 %v6175, 16
        %v6267 = vrot.slane %v6265, 5
        %v6268 = vsel %vm6220, %v6263, %v6267
        %v6270 = vshrl.u32 %v6176, 16
        %v6272 = vrot.slane %v6270, 4
        %v6273 = vshll.u32 %v6176, 16
        %v6275 = vrot.slane %v6273, 5
        %v6276 = vor.u32 %v6272, %v6275
        %v6277 = vrot.slane %v6276, 4
        %v6279 = vshll.u32 %v6177, 16
        %v6281 = vrot.slane %v6279, 5
        %v6282 = vsel %vm6220, %v6277, %v6281
        %v6283 = vshrl.u32 %v6177, 16
        %v6285 = vrot.slane %v6283, 4
        %v6286 = vor.u32 %v6285, %v6281
        %v6287 = vrot.slane %v6286, 4
        %v6289 = vshll.u32 %v6178, 16
        %v6291 = vrot.slane %v6289, 5
        %v6292 = vsel %vm6220, %v6287, %v6291
        %v6294 = vshrl.u32 %v6179, 16
        %v6296 = vrot.slane %v6294, 4
        %v6297 = vshll.u32 %v6179, 16
        %v6299 = vrot.slane %v6297, 5
        %v6300 = vor.u32 %v6296, %v6299
        %v6301 = vrot.slane %v6300, 4
        %v6303 = vshll.u32 %v6180, 16
        %v6305 = vrot.slane %v6303, 5
        %v6306 = vsel %vm6220, %v6301, %v6305
        %v6307 = vshrl.u32 %v6180, 16
        %v6309 = vrot.slane %v6307, 4
        %v6310 = vor.u32 %v6309, %v6305
        %v6311 = vrot.slane %v6310, 4
        %v6313 = vshll.u32 %v6181, 16
        %v6315 = vrot.slane %v6313, 5
        %v6316 = vsel %vm6220, %v6311, %v6315
        %v6318 = vshrl.u32 %v6182, 16
        %v6320 = vrot.slane %v6318, 4
        %v6321 = vshll.u32 %v6182, 16
        %v6323 = vrot.slane %v6321, 5
        %v6324 = vor.u32 %v6320, %v6323
        %v6325 = vrot.slane %v6324, 4
        %v6327 = vshll.u32 %v6183, 16
        %v6329 = vrot.slane %v6327, 5
        %v6330 = vsel %vm6220, %v6325, %v6329
        %v6331 = vshrl.u32 %v6183, 16
        %v6333 = vrot.slane %v6331, 4
        %v6334 = vor.u32 %v6333, %v6329
        %v6335 = vrot.slane %v6334, 4
        %v6337 = vshll.u32 %v6184, 16
        %v6339 = vrot.slane %v6337, 5
        %v6340 = vsel %vm6220, %v6335, %v6339
        %v6342 = vshrl.u32 %v6185, 16
        %v6344 = vrot.slane %v6342, 4
        %v6345 = vshll.u32 %v6185, 16
        %v6347 = vrot.slane %v6345, 5
        %v6348 = vor.u32 %v6344, %v6347
        %v6349 = vrot.slane %v6348, 4
        %v6351 = vshll.u32 %v6186, 16
        %v6353 = vrot.slane %v6351, 5
        %v6354 = vsel %vm6220, %v6349, %v6353
        %v6355 = vshrl.u32 %v6186, 16
        %v6357 = vrot.slane %v6355, 4
        %v6358 = vor.u32 %v6357, %v6353
        %v6359 = vrot.slane %v6358, 4
        %v6361 = vshll.u32 %v6187, 16
        %v6363 = vrot.slane %v6361, 5
        %v6364 = vsel %vm6220, %v6359, %v6363
        %v6366 = vshrl.u32 %v6188, 16
        %v6368 = vrot.slane %v6366, 4
        %v6369 = vshll.u32 %v6188, 16
        %v6371 = vrot.slane %v6369, 5
        %v6372 = vor.u32 %v6368, %v6371
        %v6373 = vrot.slane %v6372, 4
        %v6375 = vshll.u32 %v6189, 16
        %v6377 = vrot.slane %v6375, 5
        %v6378 = vsel %vm6220, %v6373, %v6377
        %v6379 = vshrl.u32 %v6189, 16
        %v6381 = vrot.slane %v6379, 4
        %v6382 = vor.u32 %v6381, %v6377
        %v6383 = vrot.slane %v6382, 4
        %v6385 = vshll.u32 %v6190, 16
        %v6387 = vrot.slane %v6385, 5
        %v6388 = vsel %vm6220, %v6383, %v6387
        %v6390 = vshrl.u32 %v6191, 16
        %v6392 = vrot.slane %v6390, 4
        %v6393 = vshll.u32 %v6191, 16
        %v6395 = vrot.slane %v6393, 5
        %v6396 = vor.u32 %v6392, %v6395
        %v6397 = vrot.slane %v6396, 4
        %v6399 = vshll.u32 %v6192, 16
        %v6401 = vrot.slane %v6399, 5
        %v6402 = vsel %vm6220, %v6397, %v6401
        %v6403 = vshrl.u32 %v6192, 16
        %v6405 = vrot.slane %v6403, 4
        %v6406 = vor.u32 %v6405, %v6401
        %v6407 = vrot.slane %v6406, 4
        %v6409 = vshll.u32 %v6193, 16
        %v6411 = vrot.slane %v6409, 5
        %v6412 = vsel %vm6220, %v6407, %v6411
        %v6414 = vshrl.u32 %v6194, 16
        %v6416 = vrot.slane %v6414, 4
        %v6417 = vshll.u32 %v6194, 16
        %v6419 = vrot.slane %v6417, 5
        %v6420 = vor.u32 %v6416, %v6419
        %v6421 = vrot.slane %v6420, 4
        %v6423 = vshll.u32 %v6195, 16
        %v6425 = vrot.slane %v6423, 5
        %v6426 = vsel %vm6220, %v6421, %v6425
        %v6427 = vshrl.u32 %v6195, 16
        %v6429 = vrot.slane %v6427, 4
        %v6430 = vor.u32 %v6429, %v6425
        %v6431 = vrot.slane %v6430, 4
        %v6433 = vshll.u32 %v6196, 16
        %v6435 = vrot.slane %v6433, 5
        %v6436 = vsel %vm6220, %v6431, %v6435
        %v6438 = vshrl.u32 %v6197, 16
        %v6440 = vrot.slane %v6438, 4
        %v6441 = vshll.u32 %v6197, 16
        %v6443 = vrot.slane %v6441, 5
        %v6444 = vor.u32 %v6440, %v6443
        %v6445 = vrot.slane %v6444, 4
        %v6447 = vshll.u32 %v6198, 16
        %v6449 = vrot.slane %v6447, 5
        %v6450 = vsel %vm6220, %v6445, %v6449
        %v6451 = vshrl.u32 %v6198, 16
        %v6453 = vrot.slane %v6451, 4
        %v6454 = vor.u32 %v6453, %v6449
        %v6455 = vrot.slane %v6454, 4
        %v6457 = vshll.u32 %v6199, 16
        %v6459 = vrot.slane %v6457, 5
        %v6460 = vsel %vm6220, %v6455, %v6459
        %v6462 = vshrl.u32 %v6200, 16
        %v6464 = vrot.slane %v6462, 4
        %v6465 = vshll.u32 %v6200, 16
        %v6467 = vrot.slane %v6465, 5
        %v6468 = vor.u32 %v6464, %v6467
        %v6469 = vrot.slane %v6468, 4
        %v6471 = vshll.u32 %v6201, 16
        %v6473 = vrot.slane %v6471, 5
        %v6474 = vsel %vm6220, %v6469, %v6473
        %v6475 = vshrl.u32 %v6201, 16
        %v6477 = vrot.slane %v6475, 4
        %v6478 = vor.u32 %v6477, %v6473
        %v6479 = vrot.slane %v6478, 4
        %v6481 = vshll.u32 %v6202, 16
        %v6483 = vrot.slane %v6481, 5
        %v6484 = vsel %vm6220, %v6479, %v6483
        %v6486 = vshrl.u32 %v6203, 16
        %v6488 = vrot.slane %v6486, 4
        %v6489 = vshll.u32 %v6203, 16
        %v6491 = vrot.slane %v6489, 5
        %v6492 = vor.u32 %v6488, %v6491
        %v6493 = vrot.slane %v6492, 4
        %v6495 = vshll.u32 %v6204, 16
        %v6497 = vrot.slane %v6495, 5
        %v6498 = vsel %vm6220, %v6493, %v6497
        %v6499 = vshrl.u32 %v6204, 16
        %v6501 = vrot.slane %v6499, 4
        %v6502 = vor.u32 %v6501, %v6497
        %v6503 = vrot.slane %v6502, 4
        %v6505 = vshll.u32 %v6205, 16
        %v6507 = vrot.slane %v6505, 5
        %v6508 = vsel %vm6220, %v6503, %v6507
        %v6510 = vshrl.u32 %v6206, 16
        %v6512 = vrot.slane %v6510, 4
        %v6513 = vshll.u32 %v6206, 16
        %v6515 = vrot.slane %v6513, 5
        %v6516 = vor.u32 %v6512, %v6515
        %v6517 = vrot.slane %v6516, 4
        %v6519 = vshll.u32 %v6207, 16
        %v6521 = vrot.slane %v6519, 5
        %v6522 = vsel %vm6220, %v6517, %v6521
        %v6523 = vshrl.u32 %v6207, 16
        %v6525 = vrot.slane %v6523, 4
        %v6526 = vor.u32 %v6525, %v6521
        %v6527 = vrot.slane %v6526, 4
        %v6529 = vshll.u32 %v6208, 16
        %v6531 = vrot.slane %v6529, 5
        %v6532 = vsel %vm6220, %v6527, %v6531
        %v6534 = vshrl.u32 %v6209, 16
        %v6536 = vrot.slane %v6534, 4
        %v6537 = vshll.u32 %v6209, 16
        %v6539 = vrot.slane %v6537, 5
        %v6540 = vor.u32 %v6536, %v6539
        %v6541 = vrot.slane %v6540, 4
        %v6543 = vshll.u32 %v6210, 16
        %v6545 = vrot.slane %v6543, 5
        %v6546 = vsel %vm6220, %v6541, %v6545
        %v6547 = vshrl.u32 %v6210, 16
        %v6549 = vrot.slane %v6547, 4
        %v6550 = vor.u32 %v6549, %v6545
        %v6551 = vrot.slane %v6550, 4
        %v6553 = vshll.u32 %v6211, 16
        %v6555 = vrot.slane %v6553, 5
        %v6556 = vsel %vm6220, %v6551, %v6555
        %v6558 = vshrl.u32 %v6212, 16
        %v6560 = vrot.slane %v6558, 4
        %v6561 = vshll.u32 %v6212, 16
        %v6563 = vrot.slane %v6561, 5
        %v6564 = vor.u32 %v6560, %v6563
        %v6565 = vrot.slane %v6564, 4
        %v6567 = vshll.u32 %v6213, 16
        %v6569 = vrot.slane %v6567, 5
        %v6570 = vsel %vm6220, %v6565, %v6569
        %v6571 = vshrl.u32 %v6213, 16
        %v6573 = vrot.slane %v6571, 4
        %v6574 = vor.u32 %v6573, %v6569
        %v6575 = vrot.slane %v6574, 4
        %v6577 = vshll.u32 %v6214, 16
        %v6579 = vrot.slane %v6577, 5
        %v6580 = vsel %vm6220, %v6575, %v6579
        %v6582 = vshrl.u32 %v6215, 16
        %v6584 = vrot.slane %v6582, 4
        %v6585 = vshll.u32 %v6215, 16
        %v6587 = vrot.slane %v6585, 5
        %v6588 = vor.u32 %v6584, %v6587
        %v6589 = vrot.slane %v6588, 4
        %v6591 = vshll.u32 %v6216, 16
        %v6593 = vrot.slane %v6591, 5
        %v6594 = vsel %vm6220, %v6589, %v6593
        %v6595 = vshrl.u32 %v6216, 16
        %v6597 = vrot.slane %v6595, 4
        %v6598 = vor.u32 %v6597, %v6593
        %v6599 = vrot.slane %v6598, 4
        %v6601 = vshll.u32 %v6217, 16
        %v6603 = vrot.slane %v6601, 5
        %v6604 = vsel %vm6220, %v6599, %v6603
        %v6637 = vunpack.c.l.bf16 %v6234
        %v6638 = vunpack.c.l.bf16 %v6244
        %v6639 = vunpack.c.l.bf16 %v6258
        %v6640 = vunpack.c.l.bf16 %v6268
        %v6641 = vunpack.c.l.bf16 %v6282
        %v6642 = vunpack.c.l.bf16 %v6292
        %v6643 = vunpack.c.l.bf16 %v6306
        %v6644 = vunpack.c.l.bf16 %v6316
        %v6645 = vunpack.c.l.bf16 %v6330
        %v6646 = vunpack.c.l.bf16 %v6340
        %v6647 = vunpack.c.l.bf16 %v6354
        %v6648 = vunpack.c.l.bf16 %v6364
        %v6649 = vunpack.c.l.bf16 %v6378
        %v6650 = vunpack.c.l.bf16 %v6388
        %v6651 = vunpack.c.l.bf16 %v6402
        %v6652 = vunpack.c.l.bf16 %v6412
        %v6653 = vunpack.c.l.bf16 %v6426
        %v6654 = vunpack.c.l.bf16 %v6436
        %v6655 = vunpack.c.l.bf16 %v6450
        %v6656 = vunpack.c.l.bf16 %v6460
        %v6657 = vunpack.c.l.bf16 %v6474
        %v6658 = vunpack.c.l.bf16 %v6484
        %v6659 = vunpack.c.l.bf16 %v6498
        %v6660 = vunpack.c.l.bf16 %v6508
        %v6661 = vunpack.c.l.bf16 %v6522
        %v6662 = vunpack.c.l.bf16 %v6532
        %v6663 = vunpack.c.l.bf16 %v6546
        %v6664 = vunpack.c.l.bf16 %v6556
        %v6665 = vunpack.c.l.bf16 %v6570
        %v6666 = vunpack.c.l.bf16 %v6580
        %v6667 = vunpack.c.l.bf16 %v6594
        %v6668 = vunpack.c.l.bf16 %v6604
        %v6669 = vadd.f32 %v6137, %v6637
        %v6670 = vadd.f32 %v6138, %v6638
        %v6671 = vadd.f32 %v6139, %v6639
        %v6672 = vadd.f32 %v6140, %v6640
        %v6673 = vadd.f32 %v6141, %v6641
        %v6674 = vadd.f32 %v6142, %v6642
        %v6675 = vadd.f32 %v6143, %v6643
        %v6676 = vadd.f32 %v6144, %v6644
        %v6677 = vadd.f32 %v6145, %v6645
        %v6678 = vadd.f32 %v6146, %v6646
        %v6679 = vadd.f32 %v6147, %v6647
        %v6680 = vadd.f32 %v6148, %v6648
        %v6681 = vadd.f32 %v6149, %v6649
        %v6682 = vadd.f32 %v6150, %v6650
        %v6683 = vadd.f32 %v6151, %v6651
        %v6684 = vadd.f32 %v6152, %v6652
        %v6685 = vadd.f32 %v6153, %v6653
        %v6686 = vadd.f32 %v6154, %v6654
        %v6687 = vadd.f32 %v6155, %v6655
        %v6688 = vadd.f32 %v6156, %v6656
        %v6689 = vadd.f32 %v6157, %v6657
        %v6690 = vadd.f32 %v6158, %v6658
        %v6691 = vadd.f32 %v6159, %v6659
        %v6692 = vadd.f32 %v6160, %v6660
        %v6693 = vadd.f32 %v6161, %v6661
        %v6694 = vadd.f32 %v6162, %v6662
        %v6695 = vadd.f32 %v6163, %v6663
        %v6696 = vadd.f32 %v6164, %v6664
        %v6697 = vadd.f32 %v6165, %v6665
        %v6698 = vadd.f32 %v6166, %v6666
        %v6699 = vadd.f32 %v6167, %v6667
        %v6700 = vadd.f32 %v6168, %v6668
        %6701 = vst [vmem:[%s232] sm:$0xff] %v6669
        %6702 = vst [vmem:[%s232 + $0x8] sm:$0xff] %v6670
        %6703 = vst [vmem:[%s232 + $0x10] sm:$0xff] %v6671
        %6704 = vst [vmem:[%s232 + $0x18] sm:$0xff] %v6672
        %6705 = vst [vmem:[%s232 + $0x20] sm:$0xff] %v6673
        %6706 = vst [vmem:[%s232 + $0x28] sm:$0xff] %v6674
        %6707 = vst [vmem:[%s232 + $0x30] sm:$0xff] %v6675
        %6708 = vst [vmem:[%s232 + $0x38] sm:$0xff] %v6676
        %6709 = vst [vmem:[%s232 + $0x40] sm:$0xff] %v6677
        %6710 = vst [vmem:[%s232 + $0x48] sm:$0xff] %v6678
        %6711 = vst [vmem:[%s232 + $0x50] sm:$0xff] %v6679
        %6712 = vst [vmem:[%s232 + $0x58] sm:$0xff] %v6680
        %6713 = vst [vmem:[%s232 + $0x60] sm:$0xff] %v6681
        %6714 = vst [vmem:[%s232 + $0x68] sm:$0xff] %v6682
        %6715 = vst [vmem:[%s232 + $0x70] sm:$0xff] %v6683
        %6716 = vst [vmem:[%s232 + $0x78] sm:$0xff] %v6684
        %6717 = vst [vmem:[%s232 + $0x80] sm:$0xff] %v6685
        %6718 = vst [vmem:[%s232 + $0x88] sm:$0xff] %v6686
        %6719 = vst [vmem:[%s232 + $0x90] sm:$0xff] %v6687
        %6720 = vst [vmem:[%s232 + $0x98] sm:$0xff] %v6688
        %6721 = vst [vmem:[%s232 + $0xa0] sm:$0xff] %v6689
        %6722 = vst [vmem:[%s232 + $0xa8] sm:$0xff] %v6690
        %6723 = vst [vmem:[%s232 + $0xb0] sm:$0xff] %v6691
        %6724 = vst [vmem:[%s232 + $0xb8] sm:$0xff] %v6692
        %6725 = vst [vmem:[%s232 + $0xc0] sm:$0xff] %v6693
        %6726 = vst [vmem:[%s232 + $0xc8] sm:$0xff] %v6694
        %6727 = vst [vmem:[%s232 + $0xd0] sm:$0xff] %v6695
        %6728 = vst [vmem:[%s232 + $0xd8] sm:$0xff] %v6696
        %6729 = vst [vmem:[%s232 + $0xe0] sm:$0xff] %v6697
        %6730 = vst [vmem:[%s232 + $0xe8] sm:$0xff] %v6698
        %6731 = vst [vmem:[%s232 + $0xf0] sm:$0xff] %v6699
        %6732 = vst [vmem:[%s232 + $0xf8] sm:$0xff] %v6700
        %s6733 = sand.u32 %s138, 1
        %s6734 = scalar_lea.sflag [#allocation7], %s6733
        %s6735 = sand.u32 %s138, 1
        %s6736 = smul.addr %s6735, 256
        %s6737 = scalar_lea.vmem [#allocation8], %s6736
        // Predicated region
        $region45: #{tpu_custom_call.1} parent=39 // pred_check
          %p6738 = pneg %p148
        $region46: #{tpu_custom_call.1} parent=39 // pred_check_branch
          %6740 = sbr.rel (%p6738) target = $region48
        $region47: #{tpu_custom_call.1} parent=39 // pred_region
          %s6742 = ssub.s32 4096, 4096
          %6743 = vsyncadd %s6734, %s6742
          %s6744 = smul.addr %s20, 32
          %s6745 = smul.addr %s6744, 128
          %s6746 = scalar_lea.hbm %s5, %s6745
          %s6747 = sshll.u32 %s6737, 4
          %s6748 = int_to_ptr.vmem [resolvable:$true] %s6747
          %6753 = dma.vmem_to_hbm [thread:$0]  %s6748, 4096, %s6746, %s6734, 128, 128, 8
        $region48: #{tpu_custom_call.1} parent=39 // pred_fallthru
          _
      $region40: #{tpu_custom_call.1} parent=5 // pred_fallthru
        _
      %p6754 = scmp.le.s32.totalorder 2, %s15
      // Predicated region
      $region49: #{tpu_custom_call.1} parent=5 // pred_check
        %p6755 = pneg %p6754
      $region50: #{tpu_custom_call.1} parent=5 // pred_check_branch
        %6757 = sbr.rel (%p6755) target = $region52
      $region51: #{tpu_custom_call.1} parent=5 // pred_region
        %s6758 = ssub.s32 %s15, 2
        // Predicated region
        $region53: #{tpu_custom_call.1} parent=51 // pred_check
          %p6759 = pneg %p154
        $region54: #{tpu_custom_call.1} parent=51 // pred_check_branch
          %6761 = sbr.rel (%p6759) target = $region56
        $region55: #{tpu_custom_call.1} parent=51 // pred_region
          %s6762 = sand.u32 %s139, 1
          %s6763 = scalar_lea.sflag [#allocation7], %s6762
          %s6764 = sand.u32 %s139, 1
          %s6765 = smul.addr %s6764, 256
          %s6766 = scalar_lea.vmem [#allocation8], %s6765
          %6767 = dma.done %s6763, 4096
        $region56: #{tpu_custom_call.1} parent=51 // pred_fallthru
          _
      $region52: #{tpu_custom_call.1} parent=5 // pred_fallthru
        _
    $region6: #{tpu_custom_call.1} parent=1 // loop_footer
      %s19 = sadd.s32 1, %s15
    $region7: #{tpu_custom_call.1} parent=1 // loop_footer_branch
      %14 = sbr.rel target = $region3
    $region8: #{tpu_custom_call.1} parent=1 // loop_exit
      _
    %6768 = vsyncpa [#allocation6], 1
    %s6769 = scalar_lea.sflag [#allocation6], 1
    %6770 = vsyncpa %s6769, 1
    %6771 = vsyncpa [#allocation7], 1
    %s6772 = scalar_lea.sflag [#allocation7], 1
    %6773 = vsyncpa %s6772, 1

</llo_original>
